<compile_context>
chip_gen: v5e
topology: v5e:2x2
jax: 0.10.0
libtpu: 0.0.40
codegen_flags: <defaults>
</compile_context>

<pallas_src>
import functools

import jax
import jax.numpy as jnp
from jax.experimental import pallas as pl
from jax.experimental.pallas import tpu as pltpu


# ----------------------------------------------------------------------------
# Pallas kernel: fused matmul + bias + activation (bf16 MXU, f32 accumulate)
# ----------------------------------------------------------------------------
def _matmul_bias_act_kernel(x_ref, w_ref, b_ref, o_ref, *, act):
    # x_ref: (TM, K) bf16, w_ref: (K, N) bf16, b_ref: (1, N) f32, o_ref: (TM, N)
    acc = jnp.dot(x_ref[...], w_ref[...], preferred_element_type=jnp.float32)
    acc = acc + b_ref[...]                      # (TM, N) + (1, N) broadcast
    if act == "relu":
        acc = jnp.maximum(acc, 0.0)
    elif act == "sigmoid":
        # numerically stable: only exponentiate non-positive arguments
        z = jnp.exp(-jnp.abs(acc))
        acc = jnp.where(acc >= 0.0, 1.0 / (1.0 + z), z / (1.0 + z))
    o_ref[...] = acc.astype(o_ref.dtype)


def _round_up(x, m):
    return ((x + m - 1) // m) * m


_TM_MAX = 256  # row-tile; small enough for v5e's 16 MiB scoped-VMEM default,
               # big enough to amortize per-step overhead; gives >1 grid step
               # (and thus cross-TC parallelism on v7x) on the larger layers.


def grouped_matmul_bias_act(patches, w, b, act, out_dtype):
    """act(patches[g] @ w[g] + b) for each group g, row-tiled over M.

    patches: (G, M, K)      -- cast to bf16 for the MXU
    w:       (Gw, K, N)     -- Gw in {1, G}, pre-cast bf16
    b:       (1, 1, N)      -- f32
    returns: (G, M, N) in out_dtype
    """
    g, m, k = patches.shape
    gw, kw_, n = w.shape
    assert kw_ == k and gw in (1, g)

    # Row tiling (sublane axis).  Keep a multiple of 16 for bf16 packing.
    if m > _TM_MAX:
        tm = _TM_MAX
        mp = _round_up(m, tm)
    else:
        mp = _round_up(m, 16)
        tm = mp
    if mp != m:
        patches = jnp.pad(patches, ((0, 0), (0, mp - m), (0, 0)))

    patches = patches.astype(jnp.bfloat16)
    w = w.astype(jnp.bfloat16)
    b = b.astype(jnp.float32)

    w_index_map = (lambda gi, mi: (gi, 0, 0)) if gw == g else (lambda gi, mi: (0, 0, 0))

    out = pl.pallas_call(
        functools.partial(_matmul_bias_act_kernel, act=act),
        out_shape=jax.ShapeDtypeStruct((g, mp, n), out_dtype),
        grid=(g, mp // tm),
        in_specs=[
            pl.BlockSpec((None, tm, k), lambda gi, mi: (gi, mi, 0)),   # patches tile
            pl.BlockSpec((None, k, n), w_index_map),                   # full weight
            pl.BlockSpec((None, 1, n), lambda gi, mi: (0, 0, 0)),      # bias
        ],
        out_specs=pl.BlockSpec((None, tm, n), lambda gi, mi: (gi, mi, 0)),
        compiler_params=pltpu.CompilerParams(
            dimension_semantics=("parallel", "parallel"),
            vmem_limit_bytes=32 * 1024 * 1024,
        ),
    )(patches, w, b)
    return out[:, :m, :]


# ----------------------------------------------------------------------------
# Conv / ConvTranspose wrappers (im2col glue in JAX -- fused under jit --,
# matmul + bias + activation in the Pallas kernel)
# ----------------------------------------------------------------------------
# TODO(synk): for large images, move the kh*kw tap accumulation inside the
# kernel (shifted pl.ds loads from an NHWC VMEM tile) to avoid the k*k-fold
# activation expansion of im2col; at these shapes XLA fuses it under jit.
def _im2col(x, k, stride, pad):
    # x: (N, H, W, C) NHWC -> patches (N*Ho*Wo, k*k*C), K-order (ky, kx, cin)
    n, h, w, c = x.shape
    xp = jnp.pad(x, ((0, 0), (pad, pad), (pad, pad), (0, 0)))
    ho = (h + 2 * pad - k) // stride + 1
    wo = (w + 2 * pad - k) // stride + 1
    cols = []
    for ky in range(k):
        for kx in range(k):
            cols.append(xp[:, ky:ky + stride * ho:stride, kx:kx + stride * wo:stride, :])
    patches = jnp.concatenate(cols, axis=-1)
    return patches.reshape(n * ho * wo, k * k * c), (ho, wo)


def conv2d(x, w_mat, b_mat, *, k, stride, pad, act, out_dtype):
    # x: NHWC; w_mat: (1, k*k*cin, cout) pre-transposed; b_mat: (1, 1, cout)
    n = x.shape[0]
    cout = w_mat.shape[-1]
    patches, (ho, wo) = _im2col(x, k, stride, pad)
    out = grouped_matmul_bias_act(patches[None], w_mat, b_mat, act, out_dtype)
    return out[0].reshape(n, ho, wo, cout)


def conv_transpose2d_subpixel(x, w_phases, b_mat, *, act, out_dtype):
    """ConvTranspose2d(k=4, s=2, p=1) via the 4-phase sub-pixel decomposition.

    x: (n, h, w, cin) NHWC; w_phases: (4, 4*cin, cout) with phase order
    g = 2*py + px and row order (t, u, cin); b_mat: (1, 1, cout).
    Output: (n, 2h, 2w, cout), y[:, 2m+py, 2q+px, :] = phase(py,px)[m, q].
    """
    n, h, w, c = x.shape
    cout = w_phases.shape[-1]
    patch_list = []
    for py in range(2):
        for px in range(2):
            # phase (py, px) reads rows (m-1+py, m+py) / cols (q-1+px, q+px)
            xp = jnp.pad(x, ((0, 0), (1 - py, py), (1 - px, px), (0, 0)))
            cols = []
            for t in range(2):
                for u in range(2):
                    cols.append(xp[:, t:t + h, u:u + w, :])
            patch_list.append(jnp.concatenate(cols, axis=-1).reshape(n * h * w, 4 * c))
    patches = jnp.stack(patch_list, axis=0)                     # (4, M, 4*cin)

    out = grouped_matmul_bias_act(patches, w_phases, b_mat, act, out_dtype)
    out = out.reshape(2, 2, n, h, w, cout)                      # (py, px, n, h, w, c)
    out = jnp.transpose(out, (2, 3, 0, 4, 1, 5))                # (n, h, py, w, px, c)
    return out.reshape(n, 2 * h, 2 * w, cout)


# ----------------------------------------------------------------------------
# AE module: deterministic PyTorch-layout init + one-time matmul-layout prep
# ----------------------------------------------------------------------------
def init_ae_params(key, in_channels, out_channels, encode_dim):
    d = encode_dim
    specs = [
        # name,   kind,    cin,        cout,          k
        ("enc1", "conv",  in_channels, d,             3),
        ("enc2", "conv",  d,           2 * d,         3),
        ("enc3", "conv",  2 * d,       4 * d,         3),
        ("dec1", "convT", 4 * d,       2 * d,         4),
        ("dec2", "convT", 2 * d,       d,             4),
        ("dec3", "conv",  d,           out_channels,  3),
    ]
    params = {}
    for name, kind, cin, cout, k in specs:
        key, kw_key, kb_key = jax.random.split(key, 3)
        fan_in = cin * k * k
        bound = 1.0 / (fan_in ** 0.5)
        wshape = (cout, cin, k, k) if kind == "conv" else (cin, cout, k, k)
        wgt = jax.random.uniform(kw_key, wshape, jnp.float32, -bound, bound)
        bias = jax.random.uniform(kb_key, (cout,), jnp.float32, -bound, bound)
        params[name] = (wgt, bias)
    return params


def prepare_params(params):
    """One-time conversion to matmul-ready, bf16, pre-transposed matrices."""
    prepped = {}
    for name in ("enc1", "enc2", "enc3", "dec3"):           # nn.Conv2d (OIHW)
        w, b = params[name]
        cout, cin, kh, kw = w.shape
        w_mat = jnp.transpose(w, (2, 3, 1, 0)).reshape(1, kh * kw * cin, cout)
        prepped[name] = (w_mat.astype(jnp.bfloat16),
                         b.reshape(1, 1, cout).astype(jnp.float32))
    for name in ("dec1", "dec2"):                           # nn.ConvTranspose2d (IOHW)
        w, b = params[name]
        cin, cout = w.shape[:2]
        phase_mats = []
        for py in range(2):
            for px in range(2):
                # output row 2m+py uses taps kh = (3-py)-2t on x rows (m-1+t+py)
                sub = jnp.take(w, jnp.array([3 - py, 1 - py]), axis=2)
                sub = jnp.take(sub, jnp.array([3 - px, 1 - px]), axis=3)  # (cin,cout,2,2)
                phase_mats.append(
                    jnp.transpose(sub, (2, 3, 0, 1)).reshape(4 * cin, cout))
        w_ph = jnp.stack(phase_mats, axis=0)                 # (4, 4*cin, cout)
        prepped[name] = (w_ph.astype(jnp.bfloat16),
                         b.reshape(1, 1, cout).astype(jnp.float32))
    return prepped


def ae_forward(prepped, x_nchw):
    """Matches AE.forward: returns (decoded_out, encoded_latent), both NCHW f32."""
    x = jnp.transpose(x_nchw, (0, 2, 3, 1)).astype(jnp.bfloat16)   # NCHW -> NHWC
    # encoder: conv(k3,s1,p1)  ->  [conv(k3,s2,p1)+ReLU] x2
    h = conv2d(x, *prepped["enc1"], k=3, stride=1, pad=1, act="none",
               out_dtype=jnp.bfloat16)
    h = conv2d(h, *prepped["enc2"], k=3, stride=2, pad=1, act="relu",
               out_dtype=jnp.bfloat16)
    latent = conv2d(h, *prepped["enc3"], k=3, stride=2, pad=1, act="relu",
                    out_dtype=jnp.float32)
    # decoder: [convT(k4,s2,p1)+ReLU] x2 -> conv(k3,s1,p1) + Sigmoid
    h = conv_transpose2d_subpixel(latent.astype(jnp.bfloat16), *prepped["dec1"],
                                  act="relu", out_dtype=jnp.bfloat16)
    h = conv_transpose2d_subpixel(h, *prepped["dec2"],
                                  act="relu", out_dtype=jnp.bfloat16)
    out = conv2d(h, *prepped["dec3"], k=3, stride=1, pad=1, act="sigmoid",
                 out_dtype=jnp.float32)
    out_nchw = jnp.transpose(out, (0, 3, 1, 2))
    latent_nchw = jnp.transpose(latent, (0, 3, 1, 2))
    return out_nchw, latent_nchw


if __name__ == "__main__":
    B, C_IN, C_OUT, H, W, ENC_DIM = 2, 3, 3, 16, 16, 8

    key = jax.random.PRNGKey(0)
    pkey, xkey = jax.random.split(key)
    params = init_ae_params(pkey, C_IN, C_OUT, ENC_DIM)
    prepped = prepare_params(params)
    x = jax.random.normal(xkey, (B, C_IN, H, W), jnp.float32)

    fwd = jax.jit(ae_forward)
    out, latent = fwd(prepped, x)
    out = jax.block_until_ready(out)
    latent = jax.block_until_ready(latent)

    assert out.shape == (B, C_OUT, H, W), out.shape
    assert latent.shape == (B, 4 * ENC_DIM, H // 4, W // 4), latent.shape
    assert out.dtype == jnp.float32 and latent.dtype == jnp.float32
    assert bool(jnp.all(jnp.isfinite(out))) and bool(jnp.all(jnp.isfinite(latent)))
    # sigmoid output must lie strictly in (0, 1)
    assert bool(jnp.all(out > 0.0)) and bool(jnp.all(out < 1.0))

    print("KERNEL_OK")
</pallas_src>

<mosaic_0001>
module attributes {stable_mosaic.version = 11 : i64} {
  func.func @_matmul_bias_act_kernel(%arg0: i32, %arg1: i32, %arg2: memref<1x256x27xbf16, #tpu.memory_space<vmem>>, %arg3: memref<1x27x8xbf16, #tpu.memory_space<vmem>>, %arg4: memref<1x1x8xf32, #tpu.memory_space<vmem>>, %arg5: memref<1x256x8xbf16, #tpu.memory_space<vmem>>) attributes {dimension_semantics = [#tpu.dimension_semantics<parallel>, #tpu.dimension_semantics<parallel>], iteration_bounds = array<i64: 1, 2>, scalar_prefetch = 0 : i64, scratch_operands = 0 : i64, tpu.core_type = #tpu.core_type<tc>, window_params = [{transform_indices = @transform_0, window_bounds = array<i64: 1, 256, 27>}, {transform_indices = @transform_1, window_bounds = array<i64: 1, 27, 8>}, {pipeline_mode = #tpu.pipeline_mode<synchronous>, transform_indices = @transform_2, window_bounds = array<i64: 1, 1, 8>}, {transform_indices = @transform_3, window_bounds = array<i64: 1, 256, 8>}]} {
    %c0 = arith.constant 0 : index
    %c0_0 = arith.constant 0 : index
    %c0_1 = arith.constant 0 : index
    %0 = vector.load %arg2[%c0, %c0_0, %c0_1] : memref<1x256x27xbf16, #tpu.memory_space<vmem>>, vector<1x256x27xbf16>
    %1 = vector.shape_cast %0 : vector<1x256x27xbf16> to vector<256x27xbf16>
    %c0_2 = arith.constant 0 : index
    %c0_3 = arith.constant 0 : index
    %c0_4 = arith.constant 0 : index
    %2 = vector.load %arg3[%c0_2, %c0_3, %c0_4] : memref<1x27x8xbf16, #tpu.memory_space<vmem>>, vector<1x27x8xbf16>
    %3 = vector.shape_cast %2 : vector<1x27x8xbf16> to vector<27x8xbf16>
    %cst = arith.constant dense<0.000000e+00> : vector<256x8xf32>
    %4 = tpu.matmul %1, %3, %cst {dimension_numbers = #tpu.dot_dimension_numbers<[1], [0], [0], [1], [0, 0, 1, 1], [], []>} : vector<256x27xbf16>, vector<27x8xbf16>, vector<256x8xf32> -> vector<256x8xf32>
    %c0_5 = arith.constant 0 : index
    %c0_6 = arith.constant 0 : index
    %c0_7 = arith.constant 0 : index
    %5 = vector.load %arg4[%c0_5, %c0_6, %c0_7] : memref<1x1x8xf32, #tpu.memory_space<vmem>>, vector<1x1x8xf32>
    %6 = vector.shape_cast %5 : vector<1x1x8xf32> to vector<1x8xf32>
    %7 = vector.broadcast %6 : vector<1x8xf32> to vector<256x8xf32>
    %8 = arith.addf %4, %7 : vector<256x8xf32>
    %9 = arith.truncf %8 : vector<256x8xf32> to vector<256x8xbf16>
    %c0_8 = arith.constant 0 : index
    %c0_9 = arith.constant 0 : index
    %c0_10 = arith.constant 0 : index
    %10 = vector.load %arg5[%c0_8, %c0_9, %c0_10] : memref<1x256x8xbf16, #tpu.memory_space<vmem>>, vector<1x256x8xbf16>
    %11 = vector.shape_cast %10 : vector<1x256x8xbf16> to vector<256x8xbf16>
    %12 = vector.shape_cast %9 : vector<256x8xbf16> to vector<1x256x8xbf16>
    tpu.vector_store %arg5[%c0_8, %c0_9, %c0_10], %12 {strides = array<i32>} : memref<1x256x8xbf16, #tpu.memory_space<vmem>>, vector<1x256x8xbf16>,
    return
  }
  func.func @transform_0(%arg0: i32, %arg1: i32) -> (i32, i32, i32) {
    %c0_i32 = arith.constant 0 : i32
    %c0_i32_0 = arith.constant 0 : i32
    return %arg0, %arg1, %c0_i32 : i32, i32, i32
  }
  func.func @transform_1(%arg0: i32, %arg1: i32) -> (i32, i32, i32) {
    %c0_i32 = arith.constant 0 : i32
    %c0_i32_0 = arith.constant 0 : i32
    %c0_i32_1 = arith.constant 0 : i32
    return %arg0, %c0_i32, %c0_i32_0 : i32, i32, i32
  }
  func.func @transform_2(%arg0: i32, %arg1: i32) -> (i32, i32, i32) {
    %c0_i32 = arith.constant 0 : i32
    %c0_i32_0 = arith.constant 0 : i32
    %c0_i32_1 = arith.constant 0 : i32
    %c0_i32_2 = arith.constant 0 : i32
    return %c0_i32, %c0_i32_0, %c0_i32_1 : i32, i32, i32
  }
  func.func @transform_3(%arg0: i32, %arg1: i32) -> (i32, i32, i32) {
    %c0_i32 = arith.constant 0 : i32
    %c0_i32_0 = arith.constant 0 : i32
    return %arg0, %arg1, %c0_i32 : i32, i32, i32
  }
}

module attributes {stable_mosaic.version = 11 : i64} {
  func.func @_matmul_bias_act_kernel(%arg0: i32, %arg1: i32, %arg2: memref<1x128x72xbf16, #tpu.memory_space<vmem>>, %arg3: memref<1x72x16xbf16, #tpu.memory_space<vmem>>, %arg4: memref<1x1x16xf32, #tpu.memory_space<vmem>>, %arg5: memref<1x128x16xbf16, #tpu.memory_space<vmem>>) attributes {dimension_semantics = [#tpu.dimension_semantics<parallel>, #tpu.dimension_semantics<parallel>], iteration_bounds = array<i64: 1, 1>, scalar_prefetch = 0 : i64, scratch_operands = 0 : i64, tpu.core_type = #tpu.core_type<tc>, window_params = [{transform_indices = @transform_0, window_bounds = array<i64: 1, 128, 72>}, {transform_indices = @transform_1, window_bounds = array<i64: 1, 72, 16>}, {pipeline_mode = #tpu.pipeline_mode<synchronous>, transform_indices = @transform_2, window_bounds = array<i64: 1, 1, 16>}, {transform_indices = @transform_3, window_bounds = array<i64: 1, 128, 16>}]} {
    %c0 = arith.constant 0 : index
    %c0_0 = arith.constant 0 : index
    %c0_1 = arith.constant 0 : index
    %0 = vector.load %arg2[%c0, %c0_0, %c0_1] : memref<1x128x72xbf16, #tpu.memory_space<vmem>>, vector<1x128x72xbf16>
    %1 = vector.shape_cast %0 : vector<1x128x72xbf16> to vector<128x72xbf16>
    %c0_2 = arith.constant 0 : index
    %c0_3 = arith.constant 0 : index
    %c0_4 = arith.constant 0 : index
    %2 = vector.load %arg3[%c0_2, %c0_3, %c0_4] : memref<1x72x16xbf16, #tpu.memory_space<vmem>>, vector<1x72x16xbf16>
    %3 = vector.shape_cast %2 : vector<1x72x16xbf16> to vector<72x16xbf16>
    %cst = arith.constant dense<0.000000e+00> : vector<128x16xf32>
    %4 = tpu.matmul %1, %3, %cst {dimension_numbers = #tpu.dot_dimension_numbers<[1], [0], [0], [1], [0, 0, 1, 1], [], []>} : vector<128x72xbf16>, vector<72x16xbf16>, vector<128x16xf32> -> vector<128x16xf32>
    %c0_5 = arith.constant 0 : index
    %c0_6 = arith.constant 0 : index
    %c0_7 = arith.constant 0 : index
    %5 = vector.load %arg4[%c0_5, %c0_6, %c0_7] : memref<1x1x16xf32, #tpu.memory_space<vmem>>, vector<1x1x16xf32>
    %6 = vector.shape_cast %5 : vector<1x1x16xf32> to vector<1x16xf32>
    %7 = vector.broadcast %6 : vector<1x16xf32> to vector<128x16xf32>
    %8 = arith.addf %4, %7 : vector<128x16xf32>
    %cst_8 = arith.constant 0.000000e+00 : f32
    %9 = vector.broadcast %cst_8 : f32 to vector<128x16xf32>
    %10 = arith.maximumf %8, %9 : vector<128x16xf32>
    %11 = arith.truncf %10 : vector<128x16xf32> to vector<128x16xbf16>
    %c0_9 = arith.constant 0 : index
    %c0_10 = arith.constant 0 : index
    %c0_11 = arith.constant 0 : index
    %12 = vector.load %arg5[%c0_9, %c0_10, %c0_11] : memref<1x128x16xbf16, #tpu.memory_space<vmem>>, vector<1x128x16xbf16>
    %13 = vector.shape_cast %12 : vector<1x128x16xbf16> to vector<128x16xbf16>
    %14 = vector.shape_cast %11 : vector<128x16xbf16> to vector<1x128x16xbf16>
    tpu.vector_store %arg5[%c0_9, %c0_10, %c0_11], %14 {strides = array<i32>} : memref<1x128x16xbf16, #tpu.memory_space<vmem>>, vector<1x128x16xbf16>,
    return
  }
  func.func @transform_0(%arg0: i32, %arg1: i32) -> (i32, i32, i32) {
    %c0_i32 = arith.constant 0 : i32
    %c0_i32_0 = arith.constant 0 : i32
    return %arg0, %arg1, %c0_i32 : i32, i32, i32
  }
  func.func @transform_1(%arg0: i32, %arg1: i32) -> (i32, i32, i32) {
    %c0_i32 = arith.constant 0 : i32
    %c0_i32_0 = arith.constant 0 : i32
    %c0_i32_1 = arith.constant 0 : i32
    return %arg0, %c0_i32, %c0_i32_0 : i32, i32, i32
  }
  func.func @transform_2(%arg0: i32, %arg1: i32) -> (i32, i32, i32) {
    %c0_i32 = arith.constant 0 : i32
    %c0_i32_0 = arith.constant 0 : i32
    %c0_i32_1 = arith.constant 0 : i32
    %c0_i32_2 = arith.constant 0 : i32
    return %c0_i32, %c0_i32_0, %c0_i32_1 : i32, i32, i32
  }
  func.func @transform_3(%arg0: i32, %arg1: i32) -> (i32, i32, i32) {
    %c0_i32 = arith.constant 0 : i32
    %c0_i32_0 = arith.constant 0 : i32
    return %arg0, %arg1, %c0_i32 : i32, i32, i32
  }
}

module attributes {stable_mosaic.version = 11 : i64} {
  func.func @_matmul_bias_act_kernel(%arg0: i32, %arg1: i32, %arg2: memref<1x32x144xbf16, #tpu.memory_space<vmem>>, %arg3: memref<1x144x32xbf16, #tpu.memory_space<vmem>>, %arg4: memref<1x1x32xf32, #tpu.memory_space<vmem>>, %arg5: memref<1x32x32xf32, #tpu.memory_space<vmem>>) attributes {dimension_semantics = [#tpu.dimension_semantics<parallel>, #tpu.dimension_semantics<parallel>], iteration_bounds = array<i64: 1, 1>, scalar_prefetch = 0 : i64, scratch_operands = 0 : i64, tpu.core_type = #tpu.core_type<tc>, window_params = [{transform_indices = @transform_0, window_bounds = array<i64: 1, 32, 144>}, {transform_indices = @transform_1, window_bounds = array<i64: 1, 144, 32>}, {pipeline_mode = #tpu.pipeline_mode<synchronous>, transform_indices = @transform_2, window_bounds = array<i64: 1, 1, 32>}, {transform_indices = @transform_3, window_bounds = array<i64: 1, 32, 32>}]} {
    %c0 = arith.constant 0 : index
    %c0_0 = arith.constant 0 : index
    %c0_1 = arith.constant 0 : index
    %0 = vector.load %arg2[%c0, %c0_0, %c0_1] : memref<1x32x144xbf16, #tpu.memory_space<vmem>>, vector<1x32x144xbf16>
    %1 = vector.shape_cast %0 : vector<1x32x144xbf16> to vector<32x144xbf16>
    %c0_2 = arith.constant 0 : index
    %c0_3 = arith.constant 0 : index
    %c0_4 = arith.constant 0 : index
    %2 = vector.load %arg3[%c0_2, %c0_3, %c0_4] : memref<1x144x32xbf16, #tpu.memory_space<vmem>>, vector<1x144x32xbf16>
    %3 = vector.shape_cast %2 : vector<1x144x32xbf16> to vector<144x32xbf16>
    %cst = arith.constant dense<0.000000e+00> : vector<32x32xf32>
    %4 = tpu.matmul %1, %3, %cst {dimension_numbers = #tpu.dot_dimension_numbers<[1], [0], [0], [1], [0, 0, 1, 1], [], []>} : vector<32x144xbf16>, vector<144x32xbf16>, vector<32x32xf32> -> vector<32x32xf32>
    %c0_5 = arith.constant 0 : index
    %c0_6 = arith.constant 0 : index
    %c0_7 = arith.constant 0 : index
    %5 = vector.load %arg4[%c0_5, %c0_6, %c0_7] : memref<1x1x32xf32, #tpu.memory_space<vmem>>, vector<1x1x32xf32>
    %6 = vector.shape_cast %5 : vector<1x1x32xf32> to vector<1x32xf32>
    %7 = vector.broadcast %6 : vector<1x32xf32> to vector<32x32xf32>
    %8 = arith.addf %4, %7 : vector<32x32xf32>
    %cst_8 = arith.constant 0.000000e+00 : f32
    %9 = vector.broadcast %cst_8 : f32 to vector<32x32xf32>
    %10 = arith.maximumf %8, %9 : vector<32x32xf32>
    %c0_9 = arith.constant 0 : index
    %c0_10 = arith.constant 0 : index
    %c0_11 = arith.constant 0 : index
    %11 = vector.load %arg5[%c0_9, %c0_10, %c0_11] : memref<1x32x32xf32, #tpu.memory_space<vmem>>, vector<1x32x32xf32>
    %12 = vector.shape_cast %11 : vector<1x32x32xf32> to vector<32x32xf32>
    %13 = vector.shape_cast %10 : vector<32x32xf32> to vector<1x32x32xf32>
    tpu.vector_store %arg5[%c0_9, %c0_10, %c0_11], %13 {strides = array<i32>} : memref<1x32x32xf32, #tpu.memory_space<vmem>>, vector<1x32x32xf32>,
    return
  }
  func.func @transform_0(%arg0: i32, %arg1: i32) -> (i32, i32, i32) {
    %c0_i32 = arith.constant 0 : i32
    %c0_i32_0 = arith.constant 0 : i32
    return %arg0, %arg1, %c0_i32 : i32, i32, i32
  }
  func.func @transform_1(%arg0: i32, %arg1: i32) -> (i32, i32, i32) {
    %c0_i32 = arith.constant 0 : i32
    %c0_i32_0 = arith.constant 0 : i32
    %c0_i32_1 = arith.constant 0 : i32
    return %arg0, %c0_i32, %c0_i32_0 : i32, i32, i32
  }
  func.func @transform_2(%arg0: i32, %arg1: i32) -> (i32, i32, i32) {
    %c0_i32 = arith.constant 0 : i32
    %c0_i32_0 = arith.constant 0 : i32
    %c0_i32_1 = arith.constant 0 : i32
    %c0_i32_2 = arith.constant 0 : i32
    return %c0_i32, %c0_i32_0, %c0_i32_1 : i32, i32, i32
  }
  func.func @transform_3(%arg0: i32, %arg1: i32) -> (i32, i32, i32) {
    %c0_i32 = arith.constant 0 : i32
    %c0_i32_0 = arith.constant 0 : i32
    return %arg0, %arg1, %c0_i32 : i32, i32, i32
  }
}

module attributes {stable_mosaic.version = 11 : i64} {
  func.func @_matmul_bias_act_kernel(%arg0: i32, %arg1: i32, %arg2: memref<1x32x128xbf16, #tpu.memory_space<vmem>>, %arg3: memref<1x128x16xbf16, #tpu.memory_space<vmem>>, %arg4: memref<1x1x16xf32, #tpu.memory_space<vmem>>, %arg5: memref<1x32x16xbf16, #tpu.memory_space<vmem>>) attributes {dimension_semantics = [#tpu.dimension_semantics<parallel>, #tpu.dimension_semantics<parallel>], iteration_bounds = array<i64: 4, 1>, scalar_prefetch = 0 : i64, scratch_operands = 0 : i64, tpu.core_type = #tpu.core_type<tc>, window_params = [{transform_indices = @transform_0, window_bounds = array<i64: 1, 32, 128>}, {transform_indices = @transform_1, window_bounds = array<i64: 1, 128, 16>}, {pipeline_mode = #tpu.pipeline_mode<synchronous>, transform_indices = @transform_2, window_bounds = array<i64: 1, 1, 16>}, {transform_indices = @transform_3, window_bounds = array<i64: 1, 32, 16>}]} {
    %c0 = arith.constant 0 : index
    %c0_0 = arith.constant 0 : index
    %c0_1 = arith.constant 0 : index
    %0 = vector.load %arg2[%c0, %c0_0, %c0_1] : memref<1x32x128xbf16, #tpu.memory_space<vmem>>, vector<1x32x128xbf16>
    %1 = vector.shape_cast %0 : vector<1x32x128xbf16> to vector<32x128xbf16>
    %c0_2 = arith.constant 0 : index
    %c0_3 = arith.constant 0 : index
    %c0_4 = arith.constant 0 : index
    %2 = vector.load %arg3[%c0_2, %c0_3, %c0_4] : memref<1x128x16xbf16, #tpu.memory_space<vmem>>, vector<1x128x16xbf16>
    %3 = vector.shape_cast %2 : vector<1x128x16xbf16> to vector<128x16xbf16>
    %cst = arith.constant dense<0.000000e+00> : vector<32x16xf32>
    %4 = tpu.matmul %1, %3, %cst {dimension_numbers = #tpu.dot_dimension_numbers<[1], [0], [0], [1], [0, 0, 1, 1], [], []>} : vector<32x128xbf16>, vector<128x16xbf16>, vector<32x16xf32> -> vector<32x16xf32>
    %c0_5 = arith.constant 0 : index
    %c0_6 = arith.constant 0 : index
    %c0_7 = arith.constant 0 : index
    %5 = vector.load %arg4[%c0_5, %c0_6, %c0_7] : memref<1x1x16xf32, #tpu.memory_space<vmem>>, vector<1x1x16xf32>
    %6 = vector.shape_cast %5 : vector<1x1x16xf32> to vector<1x16xf32>
    %7 = vector.broadcast %6 : vector<1x16xf32> to vector<32x16xf32>
    %8 = arith.addf %4, %7 : vector<32x16xf32>
    %cst_8 = arith.constant 0.000000e+00 : f32
    %9 = vector.broadcast %cst_8 : f32 to vector<32x16xf32>
    %10 = arith.maximumf %8, %9 : vector<32x16xf32>
    %11 = arith.truncf %10 : vector<32x16xf32> to vector<32x16xbf16>
    %c0_9 = arith.constant 0 : index
    %c0_10 = arith.constant 0 : index
    %c0_11 = arith.constant 0 : index
    %12 = vector.load %arg5[%c0_9, %c0_10, %c0_11] : memref<1x32x16xbf16, #tpu.memory_space<vmem>>, vector<1x32x16xbf16>
    %13 = vector.shape_cast %12 : vector<1x32x16xbf16> to vector<32x16xbf16>
    %14 = vector.shape_cast %11 : vector<32x16xbf16> to vector<1x32x16xbf16>
    tpu.vector_store %arg5[%c0_9, %c0_10, %c0_11], %14 {strides = array<i32>} : memref<1x32x16xbf16, #tpu.memory_space<vmem>>, vector<1x32x16xbf16>,
    return
  }
  func.func @transform_0(%arg0: i32, %arg1: i32) -> (i32, i32, i32) {
    %c0_i32 = arith.constant 0 : i32
    %c0_i32_0 = arith.constant 0 : i32
    return %arg0, %arg1, %c0_i32 : i32, i32, i32
  }
  func.func @transform_1(%arg0: i32, %arg1: i32) -> (i32, i32, i32) {
    %c0_i32 = arith.constant 0 : i32
    %c0_i32_0 = arith.constant 0 : i32
    %c0_i32_1 = arith.constant 0 : i32
    return %arg0, %c0_i32, %c0_i32_0 : i32, i32, i32
  }
  func.func @transform_2(%arg0: i32, %arg1: i32) -> (i32, i32, i32) {
    %c0_i32 = arith.constant 0 : i32
    %c0_i32_0 = arith.constant 0 : i32
    %c0_i32_1 = arith.constant 0 : i32
    %c0_i32_2 = arith.constant 0 : i32
    return %c0_i32, %c0_i32_0, %c0_i32_1 : i32, i32, i32
  }
  func.func @transform_3(%arg0: i32, %arg1: i32) -> (i32, i32, i32) {
    %c0_i32 = arith.constant 0 : i32
    %c0_i32_0 = arith.constant 0 : i32
    return %arg0, %arg1, %c0_i32 : i32, i32, i32
  }
}

module attributes {stable_mosaic.version = 11 : i64} {
  func.func @_matmul_bias_act_kernel(%arg0: i32, %arg1: i32, %arg2: memref<1x128x64xbf16, #tpu.memory_space<vmem>>, %arg3: memref<1x64x8xbf16, #tpu.memory_space<vmem>>, %arg4: memref<1x1x8xf32, #tpu.memory_space<vmem>>, %arg5: memref<1x128x8xbf16, #tpu.memory_space<vmem>>) attributes {dimension_semantics = [#tpu.dimension_semantics<parallel>, #tpu.dimension_semantics<parallel>], iteration_bounds = array<i64: 4, 1>, scalar_prefetch = 0 : i64, scratch_operands = 0 : i64, tpu.core_type = #tpu.core_type<tc>, window_params = [{transform_indices = @transform_0, window_bounds = array<i64: 1, 128, 64>}, {transform_indices = @transform_1, window_bounds = array<i64: 1, 64, 8>}, {pipeline_mode = #tpu.pipeline_mode<synchronous>, transform_indices = @transform_2, window_bounds = array<i64: 1, 1, 8>}, {transform_indices = @transform_3, window_bounds = array<i64: 1, 128, 8>}]} {
    %c0 = arith.constant 0 : index
    %c0_0 = arith.constant 0 : index
    %c0_1 = arith.constant 0 : index
    %0 = vector.load %arg2[%c0, %c0_0, %c0_1] : memref<1x128x64xbf16, #tpu.memory_space<vmem>>, vector<1x128x64xbf16>
    %1 = vector.shape_cast %0 : vector<1x128x64xbf16> to vector<128x64xbf16>
    %c0_2 = arith.constant 0 : index
    %c0_3 = arith.constant 0 : index
    %c0_4 = arith.constant 0 : index
    %2 = vector.load %arg3[%c0_2, %c0_3, %c0_4] : memref<1x64x8xbf16, #tpu.memory_space<vmem>>, vector<1x64x8xbf16>
    %3 = vector.shape_cast %2 : vector<1x64x8xbf16> to vector<64x8xbf16>
    %cst = arith.constant dense<0.000000e+00> : vector<128x8xf32>
    %4 = tpu.matmul %1, %3, %cst {dimension_numbers = #tpu.dot_dimension_numbers<[1], [0], [0], [1], [0, 0, 1, 1], [], []>} : vector<128x64xbf16>, vector<64x8xbf16>, vector<128x8xf32> -> vector<128x8xf32>
    %c0_5 = arith.constant 0 : index
    %c0_6 = arith.constant 0 : index
    %c0_7 = arith.constant 0 : index
    %5 = vector.load %arg4[%c0_5, %c0_6, %c0_7] : memref<1x1x8xf32, #tpu.memory_space<vmem>>, vector<1x1x8xf32>
    %6 = vector.shape_cast %5 : vector<1x1x8xf32> to vector<1x8xf32>
    %7 = vector.broadcast %6 : vector<1x8xf32> to vector<128x8xf32>
    %8 = arith.addf %4, %7 : vector<128x8xf32>
    %cst_8 = arith.constant 0.000000e+00 : f32
    %9 = vector.broadcast %cst_8 : f32 to vector<128x8xf32>
    %10 = arith.maximumf %8, %9 : vector<128x8xf32>
    %11 = arith.truncf %10 : vector<128x8xf32> to vector<128x8xbf16>
    %c0_9 = arith.constant 0 : index
    %c0_10 = arith.constant 0 : index
    %c0_11 = arith.constant 0 : index
    %12 = vector.load %arg5[%c0_9, %c0_10, %c0_11] : memref<1x128x8xbf16, #tpu.memory_space<vmem>>, vector<1x128x8xbf16>
    %13 = vector.shape_cast %12 : vector<1x128x8xbf16> to vector<128x8xbf16>
    %14 = vector.shape_cast %11 : vector<128x8xbf16> to vector<1x128x8xbf16>
    tpu.vector_store %arg5[%c0_9, %c0_10, %c0_11], %14 {strides = array<i32>} : memref<1x128x8xbf16, #tpu.memory_space<vmem>>, vector<1x128x8xbf16>,
    return
  }
  func.func @transform_0(%arg0: i32, %arg1: i32) -> (i32, i32, i32) {
    %c0_i32 = arith.constant 0 : i32
    %c0_i32_0 = arith.constant 0 : i32
    return %arg0, %arg1, %c0_i32 : i32, i32, i32
  }
  func.func @transform_1(%arg0: i32, %arg1: i32) -> (i32, i32, i32) {
    %c0_i32 = arith.constant 0 : i32
    %c0_i32_0 = arith.constant 0 : i32
    %c0_i32_1 = arith.constant 0 : i32
    return %arg0, %c0_i32, %c0_i32_0 : i32, i32, i32
  }
  func.func @transform_2(%arg0: i32, %arg1: i32) -> (i32, i32, i32) {
    %c0_i32 = arith.constant 0 : i32
    %c0_i32_0 = arith.constant 0 : i32
    %c0_i32_1 = arith.constant 0 : i32
    %c0_i32_2 = arith.constant 0 : i32
    return %c0_i32, %c0_i32_0, %c0_i32_1 : i32, i32, i32
  }
  func.func @transform_3(%arg0: i32, %arg1: i32) -> (i32, i32, i32) {
    %c0_i32 = arith.constant 0 : i32
    %c0_i32_0 = arith.constant 0 : i32
    return %arg0, %arg1, %c0_i32 : i32, i32, i32
  }
}

module attributes {stable_mosaic.version = 11 : i64} {
  func.func @_matmul_bias_act_kernel(%arg0: i32, %arg1: i32, %arg2: memref<1x256x72xbf16, #tpu.memory_space<vmem>>, %arg3: memref<1x72x3xbf16, #tpu.memory_space<vmem>>, %arg4: memref<1x1x3xf32, #tpu.memory_space<vmem>>, %arg5: memref<1x256x3xf32, #tpu.memory_space<vmem>>) attributes {dimension_semantics = [#tpu.dimension_semantics<parallel>, #tpu.dimension_semantics<parallel>], iteration_bounds = array<i64: 1, 2>, scalar_prefetch = 0 : i64, scratch_operands = 0 : i64, tpu.core_type = #tpu.core_type<tc>, window_params = [{transform_indices = @transform_0, window_bounds = array<i64: 1, 256, 72>}, {transform_indices = @transform_1, window_bounds = array<i64: 1, 72, 3>}, {pipeline_mode = #tpu.pipeline_mode<synchronous>, transform_indices = @transform_2, window_bounds = array<i64: 1, 1, 3>}, {transform_indices = @transform_3, window_bounds = array<i64: 1, 256, 3>}]} {
    %c0 = arith.constant 0 : index
    %c0_0 = arith.constant 0 : index
    %c0_1 = arith.constant 0 : index
    %0 = vector.load %arg2[%c0, %c0_0, %c0_1] : memref<1x256x72xbf16, #tpu.memory_space<vmem>>, vector<1x256x72xbf16>
    %1 = vector.shape_cast %0 : vector<1x256x72xbf16> to vector<256x72xbf16>
    %c0_2 = arith.constant 0 : index
    %c0_3 = arith.constant 0 : index
    %c0_4 = arith.constant 0 : index
    %2 = vector.load %arg3[%c0_2, %c0_3, %c0_4] : memref<1x72x3xbf16, #tpu.memory_space<vmem>>, vector<1x72x3xbf16>
    %3 = vector.shape_cast %2 : vector<1x72x3xbf16> to vector<72x3xbf16>
    %cst = arith.constant dense<0.000000e+00> : vector<256x3xf32>
    %4 = tpu.matmul %1, %3, %cst {dimension_numbers = #tpu.dot_dimension_numbers<[1], [0], [0], [1], [0, 0, 1, 1], [], []>} : vector<256x72xbf16>, vector<72x3xbf16>, vector<256x3xf32> -> vector<256x3xf32>
    %c0_5 = arith.constant 0 : index
    %c0_6 = arith.constant 0 : index
    %c0_7 = arith.constant 0 : index
    %5 = vector.load %arg4[%c0_5, %c0_6, %c0_7] : memref<1x1x3xf32, #tpu.memory_space<vmem>>, vector<1x1x3xf32>
    %6 = vector.shape_cast %5 : vector<1x1x3xf32> to vector<1x3xf32>
    %7 = vector.broadcast %6 : vector<1x3xf32> to vector<256x3xf32>
    %8 = arith.addf %4, %7 : vector<256x3xf32>
    %9 = math.absf %8 : vector<256x3xf32>
    %cst_8 = arith.constant 0.000000e+00 : f32
    %10 = vector.broadcast %cst_8 : f32 to vector<256x3xf32>
    %11 = arith.subf %10, %9 : vector<256x3xf32>
    %12 = math.exp %11 : vector<256x3xf32>
    %cst_9 = arith.constant 0.000000e+00 : f32
    %13 = vector.broadcast %cst_9 : f32 to vector<256x3xf32>
    %14 = arith.cmpf oge, %8, %13 : vector<256x3xf32>
    %cst_10 = arith.constant 1.000000e+00 : f32
    %15 = vector.broadcast %cst_10 : f32 to vector<256x3xf32>
    %16 = arith.addf %15, %12 : vector<256x3xf32>
    %cst_11 = arith.constant 1.000000e+00 : f32
    %17 = vector.broadcast %cst_11 : f32 to vector<256x3xf32>
    %18 = arith.divf %17, %16 : vector<256x3xf32>
    %cst_12 = arith.constant 1.000000e+00 : f32
    %19 = vector.broadcast %cst_12 : f32 to vector<256x3xf32>
    %20 = arith.addf %19, %12 : vector<256x3xf32>
    %21 = arith.divf %12, %20 : vector<256x3xf32>
    %22 = arith.select %14, %18, %21 : vector<256x3xi1>, vector<256x3xf32>
    %c0_13 = arith.constant 0 : index
    %c0_14 = arith.constant 0 : index
    %c0_15 = arith.constant 0 : index
    %23 = vector.load %arg5[%c0_13, %c0_14, %c0_15] : memref<1x256x3xf32, #tpu.memory_space<vmem>>, vector<1x256x3xf32>
    %24 = vector.shape_cast %23 : vector<1x256x3xf32> to vector<256x3xf32>
    %25 = vector.shape_cast %22 : vector<256x3xf32> to vector<1x256x3xf32>
    tpu.vector_store %arg5[%c0_13, %c0_14, %c0_15], %25 {strides = array<i32>} : memref<1x256x3xf32, #tpu.memory_space<vmem>>, vector<1x256x3xf32>,
    return
  }
  func.func @transform_0(%arg0: i32, %arg1: i32) -> (i32, i32, i32) {
    %c0_i32 = arith.constant 0 : i32
    %c0_i32_0 = arith.constant 0 : i32
    return %arg0, %arg1, %c0_i32 : i32, i32, i32
  }
  func.func @transform_1(%arg0: i32, %arg1: i32) -> (i32, i32, i32) {
    %c0_i32 = arith.constant 0 : i32
    %c0_i32_0 = arith.constant 0 : i32
    %c0_i32_1 = arith.constant 0 : i32
    return %arg0, %c0_i32, %c0_i32_0 : i32, i32, i32
  }
  func.func @transform_2(%arg0: i32, %arg1: i32) -> (i32, i32, i32) {
    %c0_i32 = arith.constant 0 : i32
    %c0_i32_0 = arith.constant 0 : i32
    %c0_i32_1 = arith.constant 0 : i32
    %c0_i32_2 = arith.constant 0 : i32
    return %c0_i32, %c0_i32_0, %c0_i32_1 : i32, i32, i32
  }
  func.func @transform_3(%arg0: i32, %arg1: i32) -> (i32, i32, i32) {
    %c0_i32 = arith.constant 0 : i32
    %c0_i32_0 = arith.constant 0 : i32
    return %arg0, %arg1, %c0_i32 : i32, i32, i32
  }
}

</mosaic_0001>

<llo_original>
// kernel: ae_forward.6
$region0: #{ae_forward.6}
  #allocation0 [shape = 'u32[]', space=smem, size = 0x4, offset = 0x4, fixed_abs, tag = 'smem constant byte address 0x4 - core index']
  #allocation1 [shape = 'u32[72,128]{1,0:T(1,128)}', space=vmem, size = 0x9000, scoped, tag = 'internal scratch']
  %s0 = inlined_call_operand.vmem [shape: bf16[1,512,27], index: 0, kind: input, shape index: {}]
  %s1 = inlined_call_operand.vmem [shape: bf16[1,27,8], index: 1, kind: input, shape index: {}]
  %s2 = inlined_call_operand.vmem [shape: f32[1,1,8], index: 2, kind: input, shape index: {}]
  %s3 = inlined_call_operand.vmem [shape: bf16[1,512,8], index: 3, kind: output, shape index: {}]
  %s4 = sld [smem:[#allocation0]]
  $region45: #{ae_forward.6} parent=0
    _
  %s6 = ssub.s32 1, %s4
  %s7 = scalar_select 0, %s6, %s4
  loop: start=0, step=1, limit=4
  $region2: #{ae_forward.6} parent=0 // loop_pre_header
    _
  $region3: #{ae_forward.6} parent=0 // loop_header
    %s9 = sphi 0, %s13
    %p10 = scmp.ge.s32.totalorder %s9, 4
    %s16 = sphi 0, %s28
    %s17 = sphi 0, %s24
    %s18 = sphi 0, %s16
    %s19 = sphi 0, %s17
    %s20 = sphi 0, %s18
    %s21 = sphi 0, %s19
    %s33 = sphi 0, %s35
    %s36 = sphi 0, %s33
    %s37 = sphi 0, %s36
    %s53 = sphi 0, %s37
    %s59 = sphi 0, %s61
    %s62 = sphi 0, %s59
    %s63 = sphi 0, %s62
    %s79 = sphi 0, %s63
    %s83 = sphi 0, %s83
    %s85 = sphi 0, %s83
    %s86 = sphi 0, %s85
    %s100 = sphi 0, %s86
    %s108 = sphi 0, %s110
    %s111 = sphi 0, %s108
    %s112 = sphi 0, %s111
    %s128 = sphi 0, %s112
  $region4: #{ae_forward.6} parent=0 // loop_header_branch
    %12 = sbr.rel (%p10) target = $region8
  $region5: #{ae_forward.6} parent=0 // loop_body
    %s14 = ssub.s32 %s9, 1
    %s15 = ssub.s32 %s9, 2
    %s22 = sadd.s32 1, %s17
    %p23 = scmp.ge.s32.totalorder %s22, 2
    %s24 = scalar_select %p23, 0, %s22
    %s25 = sadd.s32 1, %s16
    %s26 = scalar_select %p23, %s25, %s16
    %p27 = scmp.ge.s32.totalorder %s26, 1
    %s28 = scalar_select %p27, 0, %s26
    %s29 = ssub.s32 %s16, %s28
    %s30 = ssub.s32 %s17, %s24
    %s31 = sor.u32 %s29, %s30
    %p32 = scmp.eq.s32.totalorder %s31, 0
    %s34 = sadd.s32 %s33, 1
    %s35 = scalar_select %p32, %s33, %s34
    %p38 = pneg %p32
    %p39 = scmp.eq.s32.totalorder %s9, 1
    %p40 = por %p38, %p39
    %p41 = scmp.ne.s32.totalorder %s33, %s36
    %p42 = scmp.eq.s32.totalorder %s9, 0
    %p43 = por %p41, %p42
    %p44 = scmp.ne.s32.totalorder %s33, %s36
    %p45 = scmp.eq.s32.totalorder %s14, 1
    %p46 = por %p44, %p45
    %p47 = scmp.ne.s32.totalorder %s36, %s37
    %p48 = scmp.eq.s32.totalorder %s14, 0
    %p49 = por %p47, %p48
    %p50 = scmp.ne.s32.totalorder %s36, %s37
    %p51 = scmp.eq.s32.totalorder %s15, 1
    %p52 = por %p50, %p51
    %p54 = scmp.ne.s32.totalorder %s37, %s53
    %p55 = scmp.eq.s32.totalorder %s15, 0
    %p56 = por %p54, %p55
    %s57 = ssub.s32 %s16, %s28
    %p58 = scmp.eq.s32.totalorder %s57, 0
    %s60 = sadd.s32 %s59, 1
    %s61 = scalar_select %p58, %s59, %s60
    %p64 = pneg %p58
    %p65 = scmp.eq.s32.totalorder %s9, 1
    %p66 = por %p64, %p65
    %p67 = scmp.ne.s32.totalorder %s59, %s62
    %p68 = scmp.eq.s32.totalorder %s9, 0
    %p69 = por %p67, %p68
    %p70 = scmp.ne.s32.totalorder %s59, %s62
    %p71 = scmp.eq.s32.totalorder %s14, 1
    %p72 = por %p70, %p71
    %p73 = scmp.ne.s32.totalorder %s62, %s63
    %p74 = scmp.eq.s32.totalorder %s14, 0
    %p75 = por %p73, %p74
    %p76 = scmp.ne.s32.totalorder %s62, %s63
    %p77 = scmp.eq.s32.totalorder %s15, 1
    %p78 = por %p76, %p77
    %p80 = scmp.ne.s32.totalorder %s63, %s79
    %p81 = scmp.eq.s32.totalorder %s15, 0
    %p82 = por %p80, %p81
    %s84 = sadd.s32 %s83, 1
    %p87 = scmp.eq.s32.totalorder %s9, 1
    %p88 = scmp.ne.s32.totalorder %s83, %s85
    %p89 = scmp.eq.s32.totalorder %s9, 0
    %p90 = por %p88, %p89
    %p91 = scmp.ne.s32.totalorder %s83, %s85
    %p92 = scmp.eq.s32.totalorder %s14, 1
    %p93 = por %p91, %p92
    %p94 = scmp.ne.s32.totalorder %s85, %s86
    %p95 = scmp.eq.s32.totalorder %s14, 0
    %p96 = por %p94, %p95
    %p97 = scmp.ne.s32.totalorder %s85, %s86
    %p98 = scmp.eq.s32.totalorder %s15, 1
    %p99 = por %p97, %p98
    %p101 = scmp.ne.s32.totalorder %s86, %s100
    %p102 = scmp.eq.s32.totalorder %s15, 0
    %p103 = por %p101, %p102
    %s104 = ssub.s32 %s16, %s28
    %s105 = ssub.s32 %s17, %s24
    %s106 = sor.u32 %s104, %s105
    %p107 = scmp.eq.s32.totalorder %s106, 0
    %s109 = sadd.s32 %s108, 1
    %s110 = scalar_select %p107, %s108, %s109
    %p113 = pneg %p107
    %p114 = scmp.eq.s32.totalorder %s9, 1
    %p115 = por %p113, %p114
    %p116 = scmp.ne.s32.totalorder %s108, %s111
    %p117 = scmp.eq.s32.totalorder %s9, 0
    %p118 = por %p116, %p117
    %p119 = scmp.ne.s32.totalorder %s108, %s111
    %p120 = scmp.eq.s32.totalorder %s14, 1
    %p121 = por %p119, %p120
    %p122 = scmp.ne.s32.totalorder %s111, %s112
    %p123 = scmp.eq.s32.totalorder %s14, 0
    %p124 = por %p122, %p123
    %p125 = scmp.ne.s32.totalorder %s111, %s112
    %p126 = scmp.eq.s32.totalorder %s15, 1
    %p127 = por %p125, %p126
    %p129 = scmp.ne.s32.totalorder %s112, %s128
    %p130 = scmp.eq.s32.totalorder %s15, 0
    %p131 = por %p129, %p130
    %p132 = scmp.le.s32.totalorder 1, %s9
    %p133 = scmp.lt.s32.totalorder %s9, 3
    %p134 = pnand %p132, %p133
    %p135 = pneg %p134
    // Predicated region
    $region9: #{ae_forward.6} parent=5 // pred_check
      _
    $region10: #{ae_forward.6} parent=5 // pred_check_branch
      %137 = sbr.rel (%p134) target = $region12
    $region11: #{ae_forward.6} parent=5 // pred_region
      %s138 = ssub.s32 %s9, 1
      // Predicated region
      $region13: #{ae_forward.6} parent=11 // pred_check
        %p139 = pneg %p75
      $region14: #{ae_forward.6} parent=11 // pred_check_branch
        %141 = sbr.rel (%p139) target = $region16
      $region15: #{ae_forward.6} parent=11 // pred_region
        %p142 = scmp.lt.s32.totalorder %s18, 0
        %s143 = scalar_select %p142, %s18, 0
        %s144 = smul.addr %s143, 4
        %s145 = smul.addr %s144, 4
        %s146 = scalar_lea.vmem %s1, %s145
      $region16: #{ae_forward.6} parent=11 // pred_fallthru
        _
      // Predicated region
      $region17: #{ae_forward.6} parent=11 // pred_check
        %p147 = pneg %p96
      $region18: #{ae_forward.6} parent=11 // pred_check_branch
        %149 = sbr.rel (%p147) target = $region20
      $region19: #{ae_forward.6} parent=11 // pred_region
        _
      $region20: #{ae_forward.6} parent=11 // pred_fallthru
        _
    $region12: #{ae_forward.6} parent=5 // pred_fallthru
      _
    %p150 = scmp.lt.s32.totalorder %s9, 2
    // Predicated region
    $region21: #{ae_forward.6} parent=5 // pred_check
      %p151 = pneg %p150
    $region22: #{ae_forward.6} parent=5 // pred_check_branch
      %153 = sbr.rel (%p151) target = $region24
    $region23: #{ae_forward.6} parent=5 // pred_region
      // Predicated region
      $region25: #{ae_forward.6} parent=23 // pred_check
        %p154 = pneg %p43
      $region26: #{ae_forward.6} parent=23 // pred_check_branch
        %156 = sbr.rel (%p154) target = $region28
      $region27: #{ae_forward.6} parent=23 // pred_region
        %s157 = smul.u32 32, %s17
        %p158 = scmp.lt.s32.totalorder %s16, 0
        %s159 = scalar_select %p158, %s16, 0
        %p160 = scmp.lt.s32.totalorder %s157, 63
        %s161 = scalar_select %p160, %s157, 63
        %s162 = smul.addr %s159, 64
        %s163 = sadd.s32 %s161, %s162
        %s164 = smul.addr %s163, 4
        %s165 = scalar_lea.vmem %s0, %s164
        %s166 = smul.u32 32, %s17
      $region28: #{ae_forward.6} parent=23 // pred_fallthru
        _
    $region24: #{ae_forward.6} parent=5 // pred_fallthru
      _
    %p167 = scmp.le.s32.totalorder 1, %s9
    %p168 = scmp.lt.s32.totalorder %s9, 3
    %p169 = pnand %p167, %p168
    %p170 = pneg %p169
    // Predicated region
    $region29: #{ae_forward.6} parent=5 // pred_check
      _
    $region30: #{ae_forward.6} parent=5 // pred_check_branch
      %172 = sbr.rel (%p169) target = $region32
    $region31: #{ae_forward.6} parent=5 // pred_region
      %s173 = ssub.s32 %s9, 1
      %s174 = smul.u32 32, %s19
      %p175 = scmp.lt.s32.totalorder %s18, 0
      %s176 = scalar_select %p175, %s18, 0
      %p177 = scmp.lt.s32.totalorder %s174, 63
      %s178 = scalar_select %p177, %s174, 63
      %s179 = smul.addr %s176, 64
      %s180 = sadd.s32 %s178, %s179
      %s181 = smul.addr %s180, 4
      %s182 = scalar_lea.vmem %s0, %s181
      %p183 = pneg %p49
      %p184 = pneg %p46
      %p185 = scmp.lt.s32.totalorder %s18, 0
      %s186 = scalar_select %p185, %s18, 0
      %s187 = smul.addr %s186, 4
      %s188 = smul.addr %s187, 4
      %s189 = scalar_lea.vmem %s1, %s188
      %p190 = pneg %p75
      %p191 = pneg %p72
      %p192 = pneg %p96
      %p193 = pneg %p93
      %p194 = pneg %p124
      %p195 = pneg %p121
      %s196 = smul.u32 32, %s19
      %p197 = scmp.lt.s32.totalorder %s18, 0
      %s198 = scalar_select %p197, %s18, 0
      %p199 = scmp.lt.s32.totalorder %s196, 63
      %s200 = scalar_select %p199, %s196, 63
      %s201 = smul.addr %s198, 64
      %s202 = sadd.s32 %s200, %s201
      %s203 = smul.addr %s202, 4
      %s204 = scalar_lea.vmem %s3, %s203
      %s205 = smul.u32 32, %s19
      %p206 = scmp.lt.s32.totalorder %s18, 0
      %s207 = scalar_select %p206, %s18, 0
      %p208 = scmp.lt.s32.totalorder %s205, 63
      %s209 = scalar_select %p208, %s205, 63
      %s210 = smul.addr %s207, 64
      %s211 = sadd.s32 %s209, %s210
      %s212 = smul.addr %s211, 4
      %s213 = scalar_lea.vmem %s0, %s212
      %s214 = smul.u32 32, %s19
      %p215 = scmp.lt.s32.totalorder %s18, 0
      %s216 = scalar_select %p215, %s18, 0
      %s217 = smul.addr %s216, 4
      %s218 = smul.addr %s217, 4
      %s219 = scalar_lea.vmem %s1, %s218
      %s220 = smul.u32 32, %s19
      %p221 = scmp.lt.s32.totalorder %s18, 0
      %s222 = scalar_select %p221, %s18, 0
      %p223 = scmp.lt.s32.totalorder %s220, 63
      %s224 = scalar_select %p223, %s220, 63
      %s225 = smul.addr %s222, 64
      %s226 = sadd.s32 %s224, %s225
      %s227 = smul.addr %s226, 4
      %s228 = scalar_lea.vmem %s3, %s227
      %s229 = smul.u32 32, %s19
      %v231 = vld [vmem:[%s213] sm:$0xf]
      %v232 = vld [vmem:[%s213 + $0x4] sm:$0xf]
      %v233 = vld [vmem:[%s213 + $0x8] sm:$0xf]
      %v234 = vld [vmem:[%s213 + $0xc] sm:$0xf]
      %v235 = vld [vmem:[%s213 + $0x10] sm:$0xf]
      %v236 = vld [vmem:[%s213 + $0x14] sm:$0xf]
      %v237 = vld [vmem:[%s213 + $0x18] sm:$0xf]
      %v238 = vld [vmem:[%s213 + $0x1c] sm:$0xf]
      %v239 = vld [vmem:[%s213 + $0x20] sm:$0xf]
      %v240 = vld [vmem:[%s213 + $0x24] sm:$0xf]
      %v241 = vld [vmem:[%s213 + $0x28] sm:$0xf]
      %v242 = vld [vmem:[%s213 + $0x2c] sm:$0xf]
      %v243 = vld [vmem:[%s213 + $0x30] sm:$0xf]
      %v244 = vld [vmem:[%s213 + $0x34] sm:$0xf]
      %v245 = vld [vmem:[%s213 + $0x38] sm:$0xf]
      %v246 = vld [vmem:[%s213 + $0x3c] sm:$0xf]
      %v247 = vld [vmem:[%s213 + $0x40] sm:$0xf]
      %v248 = vld [vmem:[%s213 + $0x44] sm:$0xf]
      %v249 = vld [vmem:[%s213 + $0x48] sm:$0xf]
      %v250 = vld [vmem:[%s213 + $0x4c] sm:$0xf]
      %v251 = vld [vmem:[%s213 + $0x50] sm:$0xf]
      %v252 = vld [vmem:[%s213 + $0x54] sm:$0xf]
      %v253 = vld [vmem:[%s213 + $0x58] sm:$0xf]
      %v254 = vld [vmem:[%s213 + $0x5c] sm:$0xf]
      %v255 = vld [vmem:[%s213 + $0x60] sm:$0xf]
      %v256 = vld [vmem:[%s213 + $0x64] sm:$0xf]
      %v257 = vld [vmem:[%s213 + $0x68] sm:$0xf]
      %v258 = vld [vmem:[%s213 + $0x6c] sm:$0xf]
      %v259 = vld [vmem:[%s213 + $0x70] sm:$0xf]
      %v260 = vld [vmem:[%s213 + $0x74] sm:$0xf]
      %v261 = vld [vmem:[%s213 + $0x78] sm:$0xf]
      %v262 = vld [vmem:[%s213 + $0x7c] sm:$0xf]
      %v263 = vld [vmem:[%s219] sm:$0xf]
      %v264 = vld [vmem:[%s219 + $0x4] sm:$0xf]
      %v265 = vld [vmem:[%s219 + $0x8] sm:$0xf]
      %v266 = vld [vmem:[%s219 + $0xc] sm:$0x3]
      %v267 = vld [vmem:[%s2] sm:$0x1]
      %v269 = vperm.slane %v267, 0
      %v303 = vunpack.c.l.b16 %v231
      %v304 = vunpack.c.l.b16 %v232
      %v305 = vunpack.c.l.b16 %v233
      %v306 = vunpack.c.l.b16 %v234
      %v307 = vunpack.c.l.b16 %v235
      %v308 = vunpack.c.l.b16 %v236
      %v309 = vunpack.c.l.b16 %v237
      %v310 = vunpack.c.l.b16 %v238
      %v311 = vunpack.c.l.b16 %v239
      %v312 = vunpack.c.l.b16 %v240
      %v313 = vunpack.c.l.b16 %v241
      %v314 = vunpack.c.l.b16 %v242
      %v315 = vunpack.c.l.b16 %v243
      %v316 = vunpack.c.l.b16 %v244
      %v317 = vunpack.c.l.b16 %v245
      %v318 = vunpack.c.l.b16 %v246
      %v319 = vunpack.c.l.b16 %v247
      %v320 = vunpack.c.l.b16 %v248
      %v321 = vunpack.c.l.b16 %v249
      %v322 = vunpack.c.l.b16 %v250
      %v323 = vunpack.c.l.b16 %v251
      %v324 = vunpack.c.l.b16 %v252
      %v325 = vunpack.c.l.b16 %v253
      %v326 = vunpack.c.l.b16 %v254
      %v327 = vunpack.c.l.b16 %v255
      %v328 = vunpack.c.l.b16 %v256
      %v329 = vunpack.c.l.b16 %v257
      %v330 = vunpack.c.l.b16 %v258
      %v331 = vunpack.c.l.b16 %v259
      %v332 = vunpack.c.l.b16 %v260
      %v333 = vunpack.c.l.b16 %v261
      %v334 = vunpack.c.l.b16 %v262
      %v335 = vpack.c.b16 %v304, %v303
      %v336 = vpack.c.b16 %v306, %v305
      %v337 = vpack.c.b16 %v308, %v307
      %v338 = vpack.c.b16 %v310, %v309
      %v339 = vpack.c.b16 %v312, %v311
      %v340 = vpack.c.b16 %v314, %v313
      %v341 = vpack.c.b16 %v316, %v315
      %v342 = vpack.c.b16 %v318, %v317
      %v343 = vpack.c.b16 %v320, %v319
      %v344 = vpack.c.b16 %v322, %v321
      %v345 = vpack.c.b16 %v324, %v323
      %v346 = vpack.c.b16 %v326, %v325
      %v347 = vpack.c.b16 %v328, %v327
      %v348 = vpack.c.b16 %v330, %v329
      %v349 = vpack.c.b16 %v332, %v331
      %v350 = vpack.c.b16 %v334, %v333
      %v355 = vunpack.c.l.b16 %v263
      %v356 = vunpack.c.l.b16 %v264
      %v357 = vunpack.c.l.b16 %v265
      %v358 = vunpack.c.l.b16 %v266
      %v359 = vpack.c.b16 %v356, %v355
      %v360 = vpack.c.b16 %v358, %v357
      %vm362 = vcmask 220160
      %v364 = vsel %vm362, %v335, 0
      %v367 = vsel %vm362, %v336, 0
      %v370 = vsel %vm362, %v337, 0
      %v373 = vsel %vm362, %v338, 0
      %v376 = vsel %vm362, %v339, 0
      %v379 = vsel %vm362, %v340, 0
      %v382 = vsel %vm362, %v341, 0
      %v385 = vsel %vm362, %v342, 0
      %v388 = vsel %vm362, %v343, 0
      %v391 = vsel %vm362, %v344, 0
      %v394 = vsel %vm362, %v345, 0
      %v397 = vsel %vm362, %v346, 0
      %v400 = vsel %vm362, %v347, 0
      %v403 = vsel %vm362, %v348, 0
      %v406 = vsel %vm362, %v349, 0
      %v409 = vsel %vm362, %v350, 0
      %vm411 = vcmask 1044480
      %vm412 = vcmask 1045504
      %v413 = vsel %vm411, 4294967295, 65535
      %v414 = vsel %vm412, %v413, 0
      %v416 = vand.u32 %v360, %v414
      %418 = vmatpush.bf16.msra.mxu0 0
      %419 = vmatpush.bf16.msra.mxu0 0
      %420 = vmatpush.bf16.msra.mxu0 0
      %421 = vmatpush.bf16.msra.mxu0 0
      %422 = vmatpush.bf16.msra.mxu0 0
      %423 = vmatpush.bf16.msra.mxu0 0
      %424 = vmatpush.bf16.msra.mxu0 %v416
      %425 = vmatpush.bf16.msra.mxu0 %v359
      %426 = vmatmul.bf16.gmra.mxu0 %v364
      %v427 = vpop.f32.mrf.mxu0
      %v428 = vadd.f32 %v269, %v427
      %v429 = vpop.f32.mrf.mxu0
      %v430 = vadd.f32 %v269, %v429
      %431 = vmatmul.bf16.gmra.mxu0 %v367
      %v432 = vpop.f32.mrf.mxu0
      %v433 = vadd.f32 %v269, %v432
      %v434 = vpop.f32.mrf.mxu0
      %v435 = vadd.f32 %v269, %v434
      %436 = vmatmul.bf16.gmra.mxu0 %v370
      %v437 = vpop.f32.mrf.mxu0
      %v438 = vadd.f32 %v269, %v437
      %v439 = vpop.f32.mrf.mxu0
      %v440 = vadd.f32 %v269, %v439
      %441 = vmatmul.bf16.gmra.mxu0 %v373
      %v442 = vpop.f32.mrf.mxu0
      %v443 = vadd.f32 %v269, %v442
      %v444 = vpop.f32.mrf.mxu0
      %v445 = vadd.f32 %v269, %v444
      %446 = vmatmul.bf16.gmra.mxu0 %v376
      %v447 = vpop.f32.mrf.mxu0
      %v448 = vadd.f32 %v269, %v447
      %v449 = vpop.f32.mrf.mxu0
      %v450 = vadd.f32 %v269, %v449
      %451 = vmatmul.bf16.gmra.mxu0 %v379
      %v452 = vpop.f32.mrf.mxu0
      %v453 = vadd.f32 %v269, %v452
      %v454 = vpop.f32.mrf.mxu0
      %v455 = vadd.f32 %v269, %v454
      %456 = vmatmul.bf16.gmra.mxu0 %v382
      %v457 = vpop.f32.mrf.mxu0
      %v458 = vadd.f32 %v269, %v457
      %v459 = vpop.f32.mrf.mxu0
      %v460 = vadd.f32 %v269, %v459
      %461 = vmatmul.bf16.gmra.mxu0 %v385
      %v462 = vpop.f32.mrf.mxu0
      %v463 = vadd.f32 %v269, %v462
      %v464 = vpop.f32.mrf.mxu0
      %v465 = vadd.f32 %v269, %v464
      %466 = vmatmul.bf16.gmra.mxu0 %v388
      %v467 = vpop.f32.mrf.mxu0
      %v468 = vadd.f32 %v269, %v467
      %v469 = vpop.f32.mrf.mxu0
      %v470 = vadd.f32 %v269, %v469
      %471 = vmatmul.bf16.gmra.mxu0 %v391
      %v472 = vpop.f32.mrf.mxu0
      %v473 = vadd.f32 %v269, %v472
      %v474 = vpop.f32.mrf.mxu0
      %v475 = vadd.f32 %v269, %v474
      %476 = vmatmul.bf16.gmra.mxu0 %v394
      %v477 = vpop.f32.mrf.mxu0
      %v478 = vadd.f32 %v269, %v477
      %v479 = vpop.f32.mrf.mxu0
      %v480 = vadd.f32 %v269, %v479
      %481 = vmatmul.bf16.gmra.mxu0 %v397
      %v482 = vpop.f32.mrf.mxu0
      %v483 = vadd.f32 %v269, %v482
      %v484 = vpop.f32.mrf.mxu0
      %v485 = vadd.f32 %v269, %v484
      %486 = vmatmul.bf16.gmra.mxu0 %v400
      %v487 = vpop.f32.mrf.mxu0
      %v488 = vadd.f32 %v269, %v487
      %v489 = vpop.f32.mrf.mxu0
      %v490 = vadd.f32 %v269, %v489
      %491 = vmatmul.bf16.gmra.mxu0 %v403
      %v492 = vpop.f32.mrf.mxu0
      %v493 = vadd.f32 %v269, %v492
      %v494 = vpop.f32.mrf.mxu0
      %v495 = vadd.f32 %v269, %v494
      %496 = vmatmul.bf16.gmra.mxu0 %v406
      %v497 = vpop.f32.mrf.mxu0
      %v498 = vadd.f32 %v269, %v497
      %v499 = vpop.f32.mrf.mxu0
      %v500 = vadd.f32 %v269, %v499
      %501 = vmatmul.bf16.gmra.mxu0 %v409
      %v502 = vpop.f32.mrf.mxu0
      %v503 = vadd.f32 %v269, %v502
      %v504 = vpop.f32.mrf.mxu0
      %v505 = vadd.f32 %v269, %v504
      %506 = vdwg.mxu0
      %v507 = vpack.c.bf16 %v428, %v428
      %v508 = vpack.c.bf16 %v430, %v430
      %v509 = vpack.c.bf16 %v433, %v433
      %v510 = vpack.c.bf16 %v435, %v435
      %v511 = vpack.c.bf16 %v438, %v438
      %v512 = vpack.c.bf16 %v440, %v440
      %v513 = vpack.c.bf16 %v443, %v443
      %v514 = vpack.c.bf16 %v445, %v445
      %v515 = vpack.c.bf16 %v448, %v448
      %v516 = vpack.c.bf16 %v450, %v450
      %v517 = vpack.c.bf16 %v453, %v453
      %v518 = vpack.c.bf16 %v455, %v455
      %v519 = vpack.c.bf16 %v458, %v458
      %v520 = vpack.c.bf16 %v460, %v460
      %v521 = vpack.c.bf16 %v463, %v463
      %v522 = vpack.c.bf16 %v465, %v465
      %v523 = vpack.c.bf16 %v468, %v468
      %v524 = vpack.c.bf16 %v470, %v470
      %v525 = vpack.c.bf16 %v473, %v473
      %v526 = vpack.c.bf16 %v475, %v475
      %v527 = vpack.c.bf16 %v478, %v478
      %v528 = vpack.c.bf16 %v480, %v480
      %v529 = vpack.c.bf16 %v483, %v483
      %v530 = vpack.c.bf16 %v485, %v485
      %v531 = vpack.c.bf16 %v488, %v488
      %v532 = vpack.c.bf16 %v490, %v490
      %v533 = vpack.c.bf16 %v493, %v493
      %v534 = vpack.c.bf16 %v495, %v495
      %v535 = vpack.c.bf16 %v498, %v498
      %v536 = vpack.c.bf16 %v500, %v500
      %v537 = vpack.c.bf16 %v503, %v503
      %v538 = vpack.c.bf16 %v505, %v505
      %vm539 = vcmask 60416
      %540 = vst.msk [vmem:[%s228] sm:$0xf] %vm539, %v507
      %541 = vst.msk [vmem:[%s228 + $0x4] sm:$0xf] %vm539, %v508
      %542 = vst.msk [vmem:[%s228 + $0x8] sm:$0xf] %vm539, %v509
      %543 = vst.msk [vmem:[%s228 + $0xc] sm:$0xf] %vm539, %v510
      %544 = vst.msk [vmem:[%s228 + $0x10] sm:$0xf] %vm539, %v511
      %545 = vst.msk [vmem:[%s228 + $0x14] sm:$0xf] %vm539, %v512
      %546 = vst.msk [vmem:[%s228 + $0x18] sm:$0xf] %vm539, %v513
      %547 = vst.msk [vmem:[%s228 + $0x1c] sm:$0xf] %vm539, %v514
      %548 = vst.msk [vmem:[%s228 + $0x20] sm:$0xf] %vm539, %v515
      %549 = vst.msk [vmem:[%s228 + $0x24] sm:$0xf] %vm539, %v516
      %550 = vst.msk [vmem:[%s228 + $0x28] sm:$0xf] %vm539, %v517
      %551 = vst.msk [vmem:[%s228 + $0x2c] sm:$0xf] %vm539, %v518
      %552 = vst.msk [vmem:[%s228 + $0x30] sm:$0xf] %vm539, %v519
      %553 = vst.msk [vmem:[%s228 + $0x34] sm:$0xf] %vm539, %v520
      %554 = vst.msk [vmem:[%s228 + $0x38] sm:$0xf] %vm539, %v521
      %555 = vst.msk [vmem:[%s228 + $0x3c] sm:$0xf] %vm539, %v522
      %556 = vst.msk [vmem:[%s228 + $0x40] sm:$0xf] %vm539, %v523
      %557 = vst.msk [vmem:[%s228 + $0x44] sm:$0xf] %vm539, %v524
      %558 = vst.msk [vmem:[%s228 + $0x48] sm:$0xf] %vm539, %v525
      %559 = vst.msk [vmem:[%s228 + $0x4c] sm:$0xf] %vm539, %v526
      %560 = vst.msk [vmem:[%s228 + $0x50] sm:$0xf] %vm539, %v527
      %561 = vst.msk [vmem:[%s228 + $0x54] sm:$0xf] %vm539, %v528
      %562 = vst.msk [vmem:[%s228 + $0x58] sm:$0xf] %vm539, %v529
      %563 = vst.msk [vmem:[%s228 + $0x5c] sm:$0xf] %vm539, %v530
      %564 = vst.msk [vmem:[%s228 + $0x60] sm:$0xf] %vm539, %v531
      %565 = vst.msk [vmem:[%s228 + $0x64] sm:$0xf] %vm539, %v532
      %566 = vst.msk [vmem:[%s228 + $0x68] sm:$0xf] %vm539, %v533
      %567 = vst.msk [vmem:[%s228 + $0x6c] sm:$0xf] %vm539, %v534
      %568 = vst.msk [vmem:[%s228 + $0x70] sm:$0xf] %vm539, %v535
      %569 = vst.msk [vmem:[%s228 + $0x74] sm:$0xf] %vm539, %v536
      %570 = vst.msk [vmem:[%s228 + $0x78] sm:$0xf] %vm539, %v537
      %571 = vst.msk [vmem:[%s228 + $0x7c] sm:$0xf] %vm539, %v538
      %s572 = smul.u32 32, %s19
      %p573 = scmp.lt.s32.totalorder %s18, 0
      %s574 = scalar_select %p573, %s18, 0
      %p575 = scmp.lt.s32.totalorder %s572, 63
      %s576 = scalar_select %p575, %s572, 63
      %s577 = smul.addr %s574, 64
      %s578 = sadd.s32 %s576, %s577
      %s579 = smul.addr %s578, 4
      %s580 = scalar_lea.vmem %s3, %s579
      // Predicated region
      $region33: #{ae_forward.6} parent=31 // pred_check
        %p581 = pneg %p121
      $region34: #{ae_forward.6} parent=31 // pred_check_branch
        %583 = sbr.rel (%p581) target = $region36
      $region35: #{ae_forward.6} parent=31 // pred_region
        %s584 = smul.u32 32, %s19
      $region36: #{ae_forward.6} parent=31 // pred_fallthru
        _
    $region32: #{ae_forward.6} parent=5 // pred_fallthru
      _
    %p585 = scmp.le.s32.totalorder 2, %s9
    // Predicated region
    $region37: #{ae_forward.6} parent=5 // pred_check
      %p586 = pneg %p585
    $region38: #{ae_forward.6} parent=5 // pred_check_branch
      %588 = sbr.rel (%p586) target = $region40
    $region39: #{ae_forward.6} parent=5 // pred_region
      %s589 = ssub.s32 %s9, 2
      // Predicated region
      $region41: #{ae_forward.6} parent=39 // pred_check
        %p590 = pneg %p127
      $region42: #{ae_forward.6} parent=39 // pred_check_branch
        %592 = sbr.rel (%p590) target = $region44
      $region43: #{ae_forward.6} parent=39 // pred_region
        %s593 = smul.u32 32, %s21
        %p594 = scmp.lt.s32.totalorder %s20, 0
        %s595 = scalar_select %p594, %s20, 0
        %p596 = scmp.lt.s32.totalorder %s593, 63
        %s597 = scalar_select %p596, %s593, 63
        %s598 = smul.addr %s595, 64
        %s599 = sadd.s32 %s597, %s598
        %s600 = smul.addr %s599, 4
        %s601 = scalar_lea.vmem %s3, %s600
      $region44: #{ae_forward.6} parent=39 // pred_fallthru
        _
    $region40: #{ae_forward.6} parent=5 // pred_fallthru
      _
  $region6: #{ae_forward.6} parent=0 // loop_footer
    %s13 = sadd.s32 1, %s9
  $region7: #{ae_forward.6} parent=0 // loop_footer_branch
    %8 = sbr.rel target = $region3
  $region8: #{ae_forward.6} parent=0 // loop_exit
    _

// kernel: ae_forward.7
$region0: #{ae_forward.7}
  #allocation0 [shape = 'u32[]', space=smem, size = 0x4, offset = 0x4, fixed_abs, tag = 'smem constant byte address 0x4 - core index']
  #allocation1 [shape = 'u32[72,128]{1,0:T(1,128)}', space=vmem, size = 0x9000, scoped, tag = 'internal scratch']
  %s0 = inlined_call_operand.vmem [shape: bf16[1,128,72], index: 0, kind: input, shape index: {}]
  %s1 = inlined_call_operand.vmem [shape: bf16[1,72,16], index: 1, kind: input, shape index: {}]
  %s2 = inlined_call_operand.vmem [shape: f32[1,1,16], index: 2, kind: input, shape index: {}]
  %s3 = inlined_call_operand.vmem [shape: bf16[1,128,16], index: 3, kind: output, shape index: {}]
  %s4 = sld [smem:[#allocation0]]
  $region22: #{ae_forward.7} parent=0
    _
  %s6 = ssub.s32 1, %s4
  %s7 = scalar_select 0, %s6, %s4
  // Predicated region
  $region2: #{ae_forward.7} parent=0 // pred_check
    _
  $region3: #{ae_forward.7} parent=0 // pred_check_branch
    %9 = sbr.rel (0) target = $region5
  $region4: #{ae_forward.7} parent=0 // pred_region
    _
  $region5: #{ae_forward.7} parent=0 // pred_fallthru
    _
  // Predicated region
  $region6: #{ae_forward.7} parent=0 // pred_check
    _
  $region7: #{ae_forward.7} parent=0 // pred_check_branch
    %11 = sbr.rel (0) target = $region9
  $region8: #{ae_forward.7} parent=0 // pred_region
    _
  $region9: #{ae_forward.7} parent=0 // pred_fallthru
    _
  // Predicated region
  $region10: #{ae_forward.7} parent=0 // pred_check
    _
  $region11: #{ae_forward.7} parent=0 // pred_check_branch
    %13 = sbr.rel (0) target = $region13
  $region12: #{ae_forward.7} parent=0 // pred_region
    _
  $region13: #{ae_forward.7} parent=0 // pred_fallthru
    _
  %v15 = vld [vmem:[%s0] sm:$0xf]
  %v16 = vld [vmem:[%s0 + $0x4] sm:$0xf]
  %v17 = vld [vmem:[%s0 + $0x8] sm:$0xf]
  %v18 = vld [vmem:[%s0 + $0xc] sm:$0xf]
  %v19 = vld [vmem:[%s0 + $0x10] sm:$0xf]
  %v20 = vld [vmem:[%s0 + $0x14] sm:$0xf]
  %v21 = vld [vmem:[%s0 + $0x18] sm:$0xf]
  %v22 = vld [vmem:[%s0 + $0x1c] sm:$0xf]
  %v23 = vld [vmem:[%s0 + $0x20] sm:$0xf]
  %v24 = vld [vmem:[%s0 + $0x24] sm:$0xf]
  %v25 = vld [vmem:[%s0 + $0x28] sm:$0xf]
  %v26 = vld [vmem:[%s0 + $0x2c] sm:$0xf]
  %v27 = vld [vmem:[%s0 + $0x30] sm:$0xf]
  %v28 = vld [vmem:[%s0 + $0x34] sm:$0xf]
  %v29 = vld [vmem:[%s0 + $0x38] sm:$0xf]
  %v30 = vld [vmem:[%s0 + $0x3c] sm:$0xf]
  %v31 = vld [vmem:[%s1] sm:$0xf]
  %v32 = vld [vmem:[%s1 + $0x4] sm:$0xf]
  %v33 = vld [vmem:[%s1 + $0x8] sm:$0xf]
  %v34 = vld [vmem:[%s1 + $0xc] sm:$0xf]
  %v35 = vld [vmem:[%s1 + $0x10] sm:$0xf]
  %v36 = vld [vmem:[%s1 + $0x14] sm:$0xf]
  %v37 = vld [vmem:[%s1 + $0x18] sm:$0xf]
  %v38 = vld [vmem:[%s1 + $0x1c] sm:$0xf]
  %v39 = vld [vmem:[%s1 + $0x20] sm:$0xf]
  %v40 = vld [vmem:[%s2] sm:$0x1]
  %v42 = vperm.slane %v40, 0
  %v60 = vunpack.c.l.b16 %v15
  %v61 = vunpack.c.l.b16 %v16
  %v62 = vunpack.c.l.b16 %v17
  %v63 = vunpack.c.l.b16 %v18
  %v64 = vunpack.c.l.b16 %v19
  %v65 = vunpack.c.l.b16 %v20
  %v66 = vunpack.c.l.b16 %v21
  %v67 = vunpack.c.l.b16 %v22
  %v68 = vunpack.c.l.b16 %v23
  %v69 = vunpack.c.l.b16 %v24
  %v70 = vunpack.c.l.b16 %v25
  %v71 = vunpack.c.l.b16 %v26
  %v72 = vunpack.c.l.b16 %v27
  %v73 = vunpack.c.l.b16 %v28
  %v74 = vunpack.c.l.b16 %v29
  %v75 = vunpack.c.l.b16 %v30
  %v76 = vpack.c.b16 %v61, %v60
  %v77 = vpack.c.b16 %v63, %v62
  %v78 = vpack.c.b16 %v65, %v64
  %v79 = vpack.c.b16 %v67, %v66
  %v80 = vpack.c.b16 %v69, %v68
  %v81 = vpack.c.b16 %v71, %v70
  %v82 = vpack.c.b16 %v73, %v72
  %v83 = vpack.c.b16 %v75, %v74
  %v93 = vunpack.c.l.b16 %v31
  %v94 = vunpack.c.l.b16 %v32
  %v95 = vunpack.c.l.b16 %v33
  %v96 = vunpack.c.l.b16 %v34
  %v97 = vunpack.c.l.b16 %v35
  %v98 = vunpack.c.l.b16 %v36
  %v99 = vunpack.c.l.b16 %v37
  %v100 = vunpack.c.l.b16 %v38
  %v101 = vunpack.c.l.b16 %v39
  %v102 = vpack.c.b16 %v94, %v93
  %v103 = vpack.c.b16 %v96, %v95
  %v104 = vpack.c.b16 %v98, %v97
  %v105 = vpack.c.b16 %v100, %v99
  %v106 = vpack.c.b16 %v101, %v101
  %vm111 = vcmask 588800
  %v113 = vsel %vm111, %v76, 0
  %v116 = vsel %vm111, %v77, 0
  %v119 = vsel %vm111, %v78, 0
  %v122 = vsel %vm111, %v79, 0
  %v125 = vsel %vm111, %v80, 0
  %v128 = vsel %vm111, %v81, 0
  %v131 = vsel %vm111, %v82, 0
  %v134 = vsel %vm111, %v83, 0
  %vm136 = vcmask 1043456
  %v138 = vsel %vm136, %v106, 0
  %140 = vmatpush.bf16.msra.mxu0 0
  %141 = vmatpush.bf16.msra.mxu0 0
  %142 = vmatpush.bf16.msra.mxu0 0
  %143 = vmatpush.bf16.msra.mxu0 %v138
  %144 = vmatpush.bf16.msra.mxu0 %v105
  %145 = vmatpush.bf16.msra.mxu0 %v104
  %146 = vmatpush.bf16.msra.mxu0 %v103
  %147 = vmatpush.bf16.msra.mxu0 %v102
  %148 = vmatmul.bf16.gmra.mxu0 %v113
  %v149 = vpop.f32.mrf.mxu0
  %v150 = vadd.f32 %v42, %v149
  %v151 = vpop.f32.mrf.mxu0
  %v152 = vadd.f32 %v42, %v151
  %153 = vmatmul.bf16.gmra.mxu0 %v116
  %v154 = vpop.f32.mrf.mxu0
  %v155 = vadd.f32 %v42, %v154
  %v156 = vpop.f32.mrf.mxu0
  %v157 = vadd.f32 %v42, %v156
  %158 = vmatmul.bf16.gmra.mxu0 %v119
  %v159 = vpop.f32.mrf.mxu0
  %v160 = vadd.f32 %v42, %v159
  %v161 = vpop.f32.mrf.mxu0
  %v162 = vadd.f32 %v42, %v161
  %163 = vmatmul.bf16.gmra.mxu0 %v122
  %v164 = vpop.f32.mrf.mxu0
  %v165 = vadd.f32 %v42, %v164
  %v166 = vpop.f32.mrf.mxu0
  %v167 = vadd.f32 %v42, %v166
  %168 = vmatmul.bf16.gmra.mxu0 %v125
  %v169 = vpop.f32.mrf.mxu0
  %v170 = vadd.f32 %v42, %v169
  %v171 = vpop.f32.mrf.mxu0
  %v172 = vadd.f32 %v42, %v171
  %173 = vmatmul.bf16.gmra.mxu0 %v128
  %v174 = vpop.f32.mrf.mxu0
  %v175 = vadd.f32 %v42, %v174
  %v176 = vpop.f32.mrf.mxu0
  %v177 = vadd.f32 %v42, %v176
  %178 = vmatmul.bf16.gmra.mxu0 %v131
  %v179 = vpop.f32.mrf.mxu0
  %v180 = vadd.f32 %v42, %v179
  %v181 = vpop.f32.mrf.mxu0
  %v182 = vadd.f32 %v42, %v181
  %183 = vmatmul.bf16.gmra.mxu0 %v134
  %v184 = vpop.f32.mrf.mxu0
  %v185 = vadd.f32 %v42, %v184
  %v186 = vpop.f32.mrf.mxu0
  %v187 = vadd.f32 %v42, %v186
  %188 = vdwg.mxu0
  %v189 = vmax.f32 %v150, 0.0
  %v190 = vmax.f32 %v152, 0.0
  %v191 = vmax.f32 %v155, 0.0
  %v192 = vmax.f32 %v157, 0.0
  %v193 = vmax.f32 %v160, 0.0
  %v194 = vmax.f32 %v162, 0.0
  %v195 = vmax.f32 %v165, 0.0
  %v196 = vmax.f32 %v167, 0.0
  %v197 = vmax.f32 %v170, 0.0
  %v198 = vmax.f32 %v172, 0.0
  %v199 = vmax.f32 %v175, 0.0
  %v200 = vmax.f32 %v177, 0.0
  %v201 = vmax.f32 %v180, 0.0
  %v202 = vmax.f32 %v182, 0.0
  %v203 = vmax.f32 %v185, 0.0
  %v204 = vmax.f32 %v187, 0.0
  %v205 = vpack.c.bf16 %v189, %v189
  %v206 = vpack.c.bf16 %v190, %v190
  %v207 = vpack.c.bf16 %v191, %v191
  %v208 = vpack.c.bf16 %v192, %v192
  %v209 = vpack.c.bf16 %v193, %v193
  %v210 = vpack.c.bf16 %v194, %v194
  %v211 = vpack.c.bf16 %v195, %v195
  %v212 = vpack.c.bf16 %v196, %v196
  %v213 = vpack.c.bf16 %v197, %v197
  %v214 = vpack.c.bf16 %v198, %v198
  %v215 = vpack.c.bf16 %v199, %v199
  %v216 = vpack.c.bf16 %v200, %v200
  %v217 = vpack.c.bf16 %v201, %v201
  %v218 = vpack.c.bf16 %v202, %v202
  %v219 = vpack.c.bf16 %v203, %v203
  %v220 = vpack.c.bf16 %v204, %v204
  %vm221 = vcmask 125952
  %222 = vst.msk [vmem:[%s3] sm:$0xf] %vm221, %v205
  %223 = vst.msk [vmem:[%s3 + $0x4] sm:$0xf] %vm221, %v206
  %224 = vst.msk [vmem:[%s3 + $0x8] sm:$0xf] %vm221, %v207
  %225 = vst.msk [vmem:[%s3 + $0xc] sm:$0xf] %vm221, %v208
  %226 = vst.msk [vmem:[%s3 + $0x10] sm:$0xf] %vm221, %v209
  %227 = vst.msk [vmem:[%s3 + $0x14] sm:$0xf] %vm221, %v210
  %228 = vst.msk [vmem:[%s3 + $0x18] sm:$0xf] %vm221, %v211
  %229 = vst.msk [vmem:[%s3 + $0x1c] sm:$0xf] %vm221, %v212
  %230 = vst.msk [vmem:[%s3 + $0x20] sm:$0xf] %vm221, %v213
  %231 = vst.msk [vmem:[%s3 + $0x24] sm:$0xf] %vm221, %v214
  %232 = vst.msk [vmem:[%s3 + $0x28] sm:$0xf] %vm221, %v215
  %233 = vst.msk [vmem:[%s3 + $0x2c] sm:$0xf] %vm221, %v216
  %234 = vst.msk [vmem:[%s3 + $0x30] sm:$0xf] %vm221, %v217
  %235 = vst.msk [vmem:[%s3 + $0x34] sm:$0xf] %vm221, %v218
  %236 = vst.msk [vmem:[%s3 + $0x38] sm:$0xf] %vm221, %v219
  %237 = vst.msk [vmem:[%s3 + $0x3c] sm:$0xf] %vm221, %v220
  // Predicated region
  $region14: #{ae_forward.7} parent=0 // pred_check
    _
  $region15: #{ae_forward.7} parent=0 // pred_check_branch
    %239 = sbr.rel (0) target = $region17
  $region16: #{ae_forward.7} parent=0 // pred_region
    _
  $region17: #{ae_forward.7} parent=0 // pred_fallthru
    _
  // Predicated region
  $region18: #{ae_forward.7} parent=0 // pred_check
    _
  $region19: #{ae_forward.7} parent=0 // pred_check_branch
    %241 = sbr.rel (0) target = $region21
  $region20: #{ae_forward.7} parent=0 // pred_region
    _
  $region21: #{ae_forward.7} parent=0 // pred_fallthru
    _

// kernel: ae_forward.8
$region0: #{ae_forward.8}
  #allocation0 [shape = 'u32[]', space=smem, size = 0x4, offset = 0x4, fixed_abs, tag = 'smem constant byte address 0x4 - core index']
  #allocation1 [shape = 'u32[72,128]{1,0:T(1,128)}', space=vmem, size = 0x9000, scoped, tag = 'internal scratch']
  %s0 = inlined_call_operand.vmem [shape: bf16[1,32,144], index: 0, kind: input, shape index: {}]
  %s1 = inlined_call_operand.vmem [shape: bf16[1,144,32], index: 1, kind: input, shape index: {}]
  %s2 = inlined_call_operand.vmem [shape: f32[1,1,32], index: 2, kind: input, shape index: {}]
  %s3 = inlined_call_operand.vmem [shape: f32[1,32,32], index: 3, kind: output, shape index: {}]
  %s4 = sld [smem:[#allocation0]]
  $region22: #{ae_forward.8} parent=0
    _
  %s6 = ssub.s32 1, %s4
  %s7 = scalar_select 0, %s6, %s4
  // Predicated region
  $region2: #{ae_forward.8} parent=0 // pred_check
    _
  $region3: #{ae_forward.8} parent=0 // pred_check_branch
    %9 = sbr.rel (0) target = $region5
  $region4: #{ae_forward.8} parent=0 // pred_region
    _
  $region5: #{ae_forward.8} parent=0 // pred_fallthru
    _
  // Predicated region
  $region6: #{ae_forward.8} parent=0 // pred_check
    _
  $region7: #{ae_forward.8} parent=0 // pred_check_branch
    %11 = sbr.rel (0) target = $region9
  $region8: #{ae_forward.8} parent=0 // pred_region
    _
  $region9: #{ae_forward.8} parent=0 // pred_fallthru
    _
  // Predicated region
  $region10: #{ae_forward.8} parent=0 // pred_check
    _
  $region11: #{ae_forward.8} parent=0 // pred_check_branch
    %13 = sbr.rel (0) target = $region13
  $region12: #{ae_forward.8} parent=0 // pred_region
    _
  $region13: #{ae_forward.8} parent=0 // pred_fallthru
    _
  %v15 = vld [vmem:[%s0] sm:$0xff]
  %v16 = vld [vmem:[%s0 + $0x8] sm:$0xff]
  %v17 = vld [vmem:[%s0 + $0x10] sm:$0xff]
  %v18 = vld [vmem:[%s0 + $0x18] sm:$0xff]
  %v19 = vld [vmem:[%s1] sm:$0xf]
  %v20 = vld [vmem:[%s1 + $0x4] sm:$0xf]
  %v21 = vld [vmem:[%s1 + $0x8] sm:$0xf]
  %v22 = vld [vmem:[%s1 + $0xc] sm:$0xf]
  %v23 = vld [vmem:[%s1 + $0x10] sm:$0xf]
  %v24 = vld [vmem:[%s1 + $0x14] sm:$0xf]
  %v25 = vld [vmem:[%s1 + $0x18] sm:$0xf]
  %v26 = vld [vmem:[%s1 + $0x1c] sm:$0xf]
  %v27 = vld [vmem:[%s1 + $0x20] sm:$0xf]
  %v28 = vld [vmem:[%s1 + $0x24] sm:$0xf]
  %v29 = vld [vmem:[%s1 + $0x28] sm:$0xf]
  %v30 = vld [vmem:[%s1 + $0x2c] sm:$0xf]
  %v31 = vld [vmem:[%s1 + $0x30] sm:$0xf]
  %v32 = vld [vmem:[%s1 + $0x34] sm:$0xf]
  %v33 = vld [vmem:[%s1 + $0x38] sm:$0xf]
  %v34 = vld [vmem:[%s1 + $0x3c] sm:$0xf]
  %v35 = vld [vmem:[%s1 + $0x40] sm:$0xf]
  %v36 = vld [vmem:[%s1 + $0x44] sm:$0xf]
  %v37 = vld [vmem:[%s2] sm:$0x1]
  %v39 = vperm.slane %v37, 0
  %v45 = vunpack.c.l.b16 %v15
  %v46 = vunpack.c.h.b16 %v15
  %v47 = vunpack.c.l.b16 %v16
  %v48 = vunpack.c.h.b16 %v16
  %v49 = vunpack.c.l.b16 %v17
  %v50 = vunpack.c.h.b16 %v17
  %v51 = vunpack.c.l.b16 %v18
  %v52 = vunpack.c.h.b16 %v18
  %v53 = vpack.c.b16 %v47, %v45
  %v54 = vpack.c.b16 %v48, %v46
  %v55 = vpack.c.b16 %v51, %v49
  %v56 = vpack.c.b16 %v52, %v50
  %v77 = vunpack.c.l.b16 %v19
  %v78 = vunpack.c.l.b16 %v20
  %v79 = vunpack.c.l.b16 %v21
  %v80 = vunpack.c.l.b16 %v22
  %v81 = vunpack.c.l.b16 %v23
  %v82 = vunpack.c.l.b16 %v24
  %v83 = vunpack.c.l.b16 %v25
  %v84 = vunpack.c.l.b16 %v26
  %v85 = vunpack.c.l.b16 %v27
  %v86 = vunpack.c.l.b16 %v28
  %v87 = vunpack.c.l.b16 %v29
  %v88 = vunpack.c.l.b16 %v30
  %v89 = vunpack.c.l.b16 %v31
  %v90 = vunpack.c.l.b16 %v32
  %v91 = vunpack.c.l.b16 %v33
  %v92 = vunpack.c.l.b16 %v34
  %v93 = vunpack.c.l.b16 %v35
  %v94 = vunpack.c.l.b16 %v36
  %v95 = vpack.c.b16 %v78, %v77
  %v96 = vpack.c.b16 %v80, %v79
  %v97 = vpack.c.b16 %v82, %v81
  %v98 = vpack.c.b16 %v84, %v83
  %v99 = vpack.c.b16 %v86, %v85
  %v100 = vpack.c.b16 %v88, %v87
  %v101 = vpack.c.b16 %v90, %v89
  %v102 = vpack.c.b16 %v92, %v91
  %v103 = vpack.c.b16 %v94, %v93
  %vm113 = vcmask 130048
  %v115 = vsel %vm113, %v54, 0
  %v118 = vsel %vm113, %v56, 0
  %120 = vmatpush.bf16.msra.mxu0 %v102
  %121 = vmatpush.bf16.msra.mxu0 %v101
  %122 = vmatpush.bf16.msra.mxu0 %v100
  %123 = vmatpush.bf16.msra.mxu0 %v99
  %124 = vmatpush.bf16.msra.mxu0 %v98
  %125 = vmatpush.bf16.msra.mxu0 %v97
  %126 = vmatpush.bf16.msra.mxu0 %v96
  %127 = vmatpush.bf16.msra.mxu0 %v95
  %128 = vmatmul.bf16.gmra.mxu0 %v53
  %v129 = vpop.f32.mrf.mxu0
  %v130 = vadd.f32 %v39, %v129
  %v131 = vpop.f32.mrf.mxu0
  %v132 = vadd.f32 %v39, %v131
  %133 = vmatmul.bf16.gmra.mxu0 %v55
  %v134 = vpop.f32.mrf.mxu0
  %v135 = vadd.f32 %v39, %v134
  %v136 = vpop.f32.mrf.mxu0
  %v137 = vadd.f32 %v39, %v136
  %138 = vdwg.mxu0
  %139 = vmatpush.bf16.msra.mxu0 0
  %140 = vmatpush.bf16.msra.mxu0 0
  %141 = vmatpush.bf16.msra.mxu0 0
  %142 = vmatpush.bf16.msra.mxu0 0
  %143 = vmatpush.bf16.msra.mxu0 0
  %144 = vmatpush.bf16.msra.mxu0 0
  %145 = vmatpush.bf16.msra.mxu0 0
  %146 = vmatpush.bf16.msra.mxu0 %v103
  %147 = vmatmul.bf16.gmra.mxu0 %v115
  %v148 = vpop.f32.mrf.mxu0
  %v149 = vadd.f32 %v130, %v148
  %v150 = vpop.f32.mrf.mxu0
  %v151 = vadd.f32 %v132, %v150
  %152 = vmatmul.bf16.gmra.mxu0 %v118
  %v153 = vpop.f32.mrf.mxu0
  %v154 = vadd.f32 %v135, %v153
  %v155 = vpop.f32.mrf.mxu0
  %v156 = vadd.f32 %v137, %v155
  %157 = vdwg.mxu0
  %v158 = vmax.f32 %v149, 0.0
  %v159 = vmax.f32 %v151, 0.0
  %v160 = vmax.f32 %v154, 0.0
  %v161 = vmax.f32 %v156, 0.0
  %vm162 = vcmask 261120
  %163 = vst.msk [vmem:[%s3] sm:$0xff] %vm162, %v158
  %164 = vst.msk [vmem:[%s3 + $0x8] sm:$0xff] %vm162, %v159
  %165 = vst.msk [vmem:[%s3 + $0x10] sm:$0xff] %vm162, %v160
  %166 = vst.msk [vmem:[%s3 + $0x18] sm:$0xff] %vm162, %v161
  // Predicated region
  $region14: #{ae_forward.8} parent=0 // pred_check
    _
  $region15: #{ae_forward.8} parent=0 // pred_check_branch
    %168 = sbr.rel (0) target = $region17
  $region16: #{ae_forward.8} parent=0 // pred_region
    _
  $region17: #{ae_forward.8} parent=0 // pred_fallthru
    _
  // Predicated region
  $region18: #{ae_forward.8} parent=0 // pred_check
    _
  $region19: #{ae_forward.8} parent=0 // pred_check_branch
    %170 = sbr.rel (0) target = $region21
  $region20: #{ae_forward.8} parent=0 // pred_region
    _
  $region21: #{ae_forward.8} parent=0 // pred_fallthru
    _

// kernel: ae_forward.9
$region0: #{ae_forward.9}
  #allocation0 [shape = 'u32[]', space=smem, size = 0x4, offset = 0x4, fixed_abs, tag = 'smem constant byte address 0x4 - core index']
  #allocation1 [shape = 'u32[72,128]{1,0:T(1,128)}', space=vmem, size = 0x9000, scoped, tag = 'internal scratch']
  %s0 = inlined_call_operand.vmem [shape: bf16[4,32,128], index: 0, kind: input, shape index: {}]
  %s1 = inlined_call_operand.vmem [shape: bf16[4,128,16], index: 1, kind: input, shape index: {}]
  %s2 = inlined_call_operand.vmem [shape: f32[1,1,16], index: 2, kind: input, shape index: {}]
  %s3 = inlined_call_operand.vmem [shape: bf16[4,32,16], index: 3, kind: output, shape index: {}]
  %s4 = sld [smem:[#allocation0]]
  $region45: #{ae_forward.9} parent=0
    _
  %s6 = ssub.s32 1, %s4
  %s7 = scalar_select 0, %s6, %s4
  loop: start=0, step=1, limit=6
  $region2: #{ae_forward.9} parent=0 // loop_pre_header
    _
  $region3: #{ae_forward.9} parent=0 // loop_header
    %s9 = sphi 0, %s13
    %p10 = scmp.ge.s32.totalorder %s9, 6
    %s16 = sphi 0, %s28
    %s17 = sphi 0, %s24
    %s18 = sphi 0, %s16
    %s19 = sphi 0, %s17
    %s20 = sphi 0, %s18
    %s21 = sphi 0, %s19
    %s33 = sphi 0, %s35
    %s36 = sphi 0, %s33
    %s37 = sphi 0, %s36
    %s53 = sphi 0, %s37
    %s59 = sphi 0, %s61
    %s62 = sphi 0, %s59
    %s63 = sphi 0, %s62
    %s79 = sphi 0, %s63
    %s83 = sphi 0, %s83
    %s85 = sphi 0, %s83
    %s86 = sphi 0, %s85
    %s100 = sphi 0, %s86
    %s108 = sphi 0, %s110
    %s111 = sphi 0, %s108
    %s112 = sphi 0, %s111
    %s128 = sphi 0, %s112
  $region4: #{ae_forward.9} parent=0 // loop_header_branch
    %12 = sbr.rel (%p10) target = $region8
  $region5: #{ae_forward.9} parent=0 // loop_body
    %s14 = ssub.s32 %s9, 1
    %s15 = ssub.s32 %s9, 2
    %s22 = sadd.s32 1, %s17
    %p23 = scmp.ge.s32.totalorder %s22, 1
    %s24 = scalar_select %p23, 0, %s22
    %s25 = sadd.s32 1, %s16
    %s26 = scalar_select %p23, %s25, %s16
    %p27 = scmp.ge.s32.totalorder %s26, 4
    %s28 = scalar_select %p27, 0, %s26
    %s29 = ssub.s32 %s16, %s28
    %s30 = ssub.s32 %s17, %s24
    %s31 = sor.u32 %s29, %s30
    %p32 = scmp.eq.s32.totalorder %s31, 0
    %s34 = sadd.s32 %s33, 1
    %s35 = scalar_select %p32, %s33, %s34
    %p38 = pneg %p32
    %p39 = scmp.eq.s32.totalorder %s9, 3
    %p40 = por %p38, %p39
    %p41 = scmp.ne.s32.totalorder %s33, %s36
    %p42 = scmp.eq.s32.totalorder %s9, 0
    %p43 = por %p41, %p42
    %p44 = scmp.ne.s32.totalorder %s33, %s36
    %p45 = scmp.eq.s32.totalorder %s14, 3
    %p46 = por %p44, %p45
    %p47 = scmp.ne.s32.totalorder %s36, %s37
    %p48 = scmp.eq.s32.totalorder %s14, 0
    %p49 = por %p47, %p48
    %p50 = scmp.ne.s32.totalorder %s36, %s37
    %p51 = scmp.eq.s32.totalorder %s15, 3
    %p52 = por %p50, %p51
    %p54 = scmp.ne.s32.totalorder %s37, %s53
    %p55 = scmp.eq.s32.totalorder %s15, 0
    %p56 = por %p54, %p55
    %s57 = ssub.s32 %s16, %s28
    %p58 = scmp.eq.s32.totalorder %s57, 0
    %s60 = sadd.s32 %s59, 1
    %s61 = scalar_select %p58, %s59, %s60
    %p64 = pneg %p58
    %p65 = scmp.eq.s32.totalorder %s9, 3
    %p66 = por %p64, %p65
    %p67 = scmp.ne.s32.totalorder %s59, %s62
    %p68 = scmp.eq.s32.totalorder %s9, 0
    %p69 = por %p67, %p68
    %p70 = scmp.ne.s32.totalorder %s59, %s62
    %p71 = scmp.eq.s32.totalorder %s14, 3
    %p72 = por %p70, %p71
    %p73 = scmp.ne.s32.totalorder %s62, %s63
    %p74 = scmp.eq.s32.totalorder %s14, 0
    %p75 = por %p73, %p74
    %p76 = scmp.ne.s32.totalorder %s62, %s63
    %p77 = scmp.eq.s32.totalorder %s15, 3
    %p78 = por %p76, %p77
    %p80 = scmp.ne.s32.totalorder %s63, %s79
    %p81 = scmp.eq.s32.totalorder %s15, 0
    %p82 = por %p80, %p81
    %s84 = sadd.s32 %s83, 1
    %p87 = scmp.eq.s32.totalorder %s9, 3
    %p88 = scmp.ne.s32.totalorder %s83, %s85
    %p89 = scmp.eq.s32.totalorder %s9, 0
    %p90 = por %p88, %p89
    %p91 = scmp.ne.s32.totalorder %s83, %s85
    %p92 = scmp.eq.s32.totalorder %s14, 3
    %p93 = por %p91, %p92
    %p94 = scmp.ne.s32.totalorder %s85, %s86
    %p95 = scmp.eq.s32.totalorder %s14, 0
    %p96 = por %p94, %p95
    %p97 = scmp.ne.s32.totalorder %s85, %s86
    %p98 = scmp.eq.s32.totalorder %s15, 3
    %p99 = por %p97, %p98
    %p101 = scmp.ne.s32.totalorder %s86, %s100
    %p102 = scmp.eq.s32.totalorder %s15, 0
    %p103 = por %p101, %p102
    %s104 = ssub.s32 %s16, %s28
    %s105 = ssub.s32 %s17, %s24
    %s106 = sor.u32 %s104, %s105
    %p107 = scmp.eq.s32.totalorder %s106, 0
    %s109 = sadd.s32 %s108, 1
    %s110 = scalar_select %p107, %s108, %s109
    %p113 = pneg %p107
    %p114 = scmp.eq.s32.totalorder %s9, 3
    %p115 = por %p113, %p114
    %p116 = scmp.ne.s32.totalorder %s108, %s111
    %p117 = scmp.eq.s32.totalorder %s9, 0
    %p118 = por %p116, %p117
    %p119 = scmp.ne.s32.totalorder %s108, %s111
    %p120 = scmp.eq.s32.totalorder %s14, 3
    %p121 = por %p119, %p120
    %p122 = scmp.ne.s32.totalorder %s111, %s112
    %p123 = scmp.eq.s32.totalorder %s14, 0
    %p124 = por %p122, %p123
    %p125 = scmp.ne.s32.totalorder %s111, %s112
    %p126 = scmp.eq.s32.totalorder %s15, 3
    %p127 = por %p125, %p126
    %p129 = scmp.ne.s32.totalorder %s112, %s128
    %p130 = scmp.eq.s32.totalorder %s15, 0
    %p131 = por %p129, %p130
    %p132 = scmp.le.s32.totalorder 1, %s9
    %p133 = scmp.lt.s32.totalorder %s9, 5
    %p134 = pnand %p132, %p133
    %p135 = pneg %p134
    // Predicated region
    $region9: #{ae_forward.9} parent=5 // pred_check
      _
    $region10: #{ae_forward.9} parent=5 // pred_check_branch
      %137 = sbr.rel (%p134) target = $region12
    $region11: #{ae_forward.9} parent=5 // pred_region
      %s138 = ssub.s32 %s9, 1
      // Predicated region
      $region13: #{ae_forward.9} parent=11 // pred_check
        %p139 = pneg %p96
      $region14: #{ae_forward.9} parent=11 // pred_check_branch
        %141 = sbr.rel (%p139) target = $region16
      $region15: #{ae_forward.9} parent=11 // pred_region
        _
      $region16: #{ae_forward.9} parent=11 // pred_fallthru
        _
    $region12: #{ae_forward.9} parent=5 // pred_fallthru
      _
    %p142 = scmp.lt.s32.totalorder %s9, 4
    // Predicated region
    $region17: #{ae_forward.9} parent=5 // pred_check
      %p143 = pneg %p142
    $region18: #{ae_forward.9} parent=5 // pred_check_branch
      %145 = sbr.rel (%p143) target = $region20
    $region19: #{ae_forward.9} parent=5 // pred_region
      // Predicated region
      $region21: #{ae_forward.9} parent=19 // pred_check
        %p146 = pneg %p43
      $region22: #{ae_forward.9} parent=19 // pred_check_branch
        %148 = sbr.rel (%p146) target = $region24
      $region23: #{ae_forward.9} parent=19 // pred_region
        %s149 = smul.u32 4, %s17
        %p150 = scmp.lt.s32.totalorder %s16, 3
        %s151 = scalar_select %p150, %s16, 3
        %p152 = scmp.lt.s32.totalorder %s149, 3
        %s153 = scalar_select %p152, %s149, 3
        %s154 = smul.addr %s151, 4
        %s155 = sadd.s32 %s153, %s154
        %s156 = smul.addr %s155, 4
        %s157 = scalar_lea.vmem %s0, %s156
        %s158 = smul.u32 4, %s17
      $region24: #{ae_forward.9} parent=19 // pred_fallthru
        _
      // Predicated region
      $region25: #{ae_forward.9} parent=19 // pred_check
        %p159 = pneg %p69
      $region26: #{ae_forward.9} parent=19 // pred_check_branch
        %161 = sbr.rel (%p159) target = $region28
      $region27: #{ae_forward.9} parent=19 // pred_region
        %p162 = scmp.lt.s32.totalorder %s16, 3
        %s163 = scalar_select %p162, %s16, 3
        %s164 = smul.addr %s163, 16
        %s165 = smul.addr %s164, 4
        %s166 = scalar_lea.vmem %s1, %s165
      $region28: #{ae_forward.9} parent=19 // pred_fallthru
        _
    $region20: #{ae_forward.9} parent=5 // pred_fallthru
      _
    %p167 = scmp.le.s32.totalorder 1, %s9
    %p168 = scmp.lt.s32.totalorder %s9, 5
    %p169 = pnand %p167, %p168
    %p170 = pneg %p169
    // Predicated region
    $region29: #{ae_forward.9} parent=5 // pred_check
      _
    $region30: #{ae_forward.9} parent=5 // pred_check_branch
      %172 = sbr.rel (%p169) target = $region32
    $region31: #{ae_forward.9} parent=5 // pred_region
      %s173 = ssub.s32 %s9, 1
      %s174 = smul.u32 4, %s19
      %p175 = scmp.lt.s32.totalorder %s18, 3
      %s176 = scalar_select %p175, %s18, 3
      %p177 = scmp.lt.s32.totalorder %s174, 3
      %s178 = scalar_select %p177, %s174, 3
      %s179 = smul.addr %s176, 4
      %s180 = sadd.s32 %s178, %s179
      %s181 = smul.addr %s180, 4
      %s182 = scalar_lea.vmem %s0, %s181
      %p183 = pneg %p49
      %p184 = pneg %p46
      %p185 = scmp.lt.s32.totalorder %s18, 3
      %s186 = scalar_select %p185, %s18, 3
      %s187 = smul.addr %s186, 16
      %s188 = smul.addr %s187, 4
      %s189 = scalar_lea.vmem %s1, %s188
      %p190 = pneg %p75
      %p191 = pneg %p72
      %p192 = pneg %p96
      %p193 = pneg %p93
      %p194 = pneg %p124
      %p195 = pneg %p121
      %s196 = smul.u32 4, %s19
      %p197 = scmp.lt.s32.totalorder %s18, 3
      %s198 = scalar_select %p197, %s18, 3
      %p199 = scmp.lt.s32.totalorder %s196, 3
      %s200 = scalar_select %p199, %s196, 3
      %s201 = smul.addr %s198, 4
      %s202 = sadd.s32 %s200, %s201
      %s203 = smul.addr %s202, 4
      %s204 = scalar_lea.vmem %s3, %s203
      %s205 = smul.u32 4, %s19
      %p206 = scmp.lt.s32.totalorder %s18, 3
      %s207 = scalar_select %p206, %s18, 3
      %p208 = scmp.lt.s32.totalorder %s205, 3
      %s209 = scalar_select %p208, %s205, 3
      %s210 = smul.addr %s207, 4
      %s211 = sadd.s32 %s209, %s210
      %s212 = smul.addr %s211, 4
      %s213 = scalar_lea.vmem %s0, %s212
      %s214 = smul.u32 4, %s19
      %p215 = scmp.lt.s32.totalorder %s18, 3
      %s216 = scalar_select %p215, %s18, 3
      %s217 = smul.addr %s216, 16
      %s218 = smul.addr %s217, 4
      %s219 = scalar_lea.vmem %s1, %s218
      %s220 = smul.u32 4, %s19
      %p221 = scmp.lt.s32.totalorder %s18, 3
      %s222 = scalar_select %p221, %s18, 3
      %p223 = scmp.lt.s32.totalorder %s220, 3
      %s224 = scalar_select %p223, %s220, 3
      %s225 = smul.addr %s222, 4
      %s226 = sadd.s32 %s224, %s225
      %s227 = smul.addr %s226, 4
      %s228 = scalar_lea.vmem %s3, %s227
      %s229 = smul.u32 4, %s19
      %v230 = vld [vmem:[%s213] sm:$0xf]
      %v231 = vld [vmem:[%s213 + $0x4] sm:$0xf]
      %v232 = vld [vmem:[%s213 + $0x8] sm:$0xf]
      %v233 = vld [vmem:[%s213 + $0xc] sm:$0xf]
      %v234 = vld [vmem:[%s219] sm:$0xf]
      %v235 = vld [vmem:[%s219 + $0x4] sm:$0xf]
      %v236 = vld [vmem:[%s219 + $0x8] sm:$0xf]
      %v237 = vld [vmem:[%s219 + $0xc] sm:$0xf]
      %v238 = vld [vmem:[%s219 + $0x10] sm:$0xf]
      %v239 = vld [vmem:[%s219 + $0x14] sm:$0xf]
      %v240 = vld [vmem:[%s219 + $0x18] sm:$0xf]
      %v241 = vld [vmem:[%s219 + $0x1c] sm:$0xf]
      %v242 = vld [vmem:[%s219 + $0x20] sm:$0xf]
      %v243 = vld [vmem:[%s219 + $0x24] sm:$0xf]
      %v244 = vld [vmem:[%s219 + $0x28] sm:$0xf]
      %v245 = vld [vmem:[%s219 + $0x2c] sm:$0xf]
      %v246 = vld [vmem:[%s219 + $0x30] sm:$0xf]
      %v247 = vld [vmem:[%s219 + $0x34] sm:$0xf]
      %v248 = vld [vmem:[%s219 + $0x38] sm:$0xf]
      %v249 = vld [vmem:[%s219 + $0x3c] sm:$0xf]
      %v250 = vld [vmem:[%s2] sm:$0x1]
      %v252 = vperm.slane %v250, 0
      %v258 = vunpack.c.l.b16 %v230
      %v259 = vunpack.c.l.b16 %v231
      %v260 = vunpack.c.l.b16 %v232
      %v261 = vunpack.c.l.b16 %v233
      %v262 = vpack.c.b16 %v259, %v258
      %v263 = vpack.c.b16 %v261, %v260
      %v282 = vunpack.c.l.b16 %v234
      %v283 = vunpack.c.l.b16 %v235
      %v284 = vunpack.c.l.b16 %v236
      %v285 = vunpack.c.l.b16 %v237
      %v286 = vunpack.c.l.b16 %v238
      %v287 = vunpack.c.l.b16 %v239
      %v288 = vunpack.c.l.b16 %v240
      %v289 = vunpack.c.l.b16 %v241
      %v290 = vunpack.c.l.b16 %v242
      %v291 = vunpack.c.l.b16 %v243
      %v292 = vunpack.c.l.b16 %v244
      %v293 = vunpack.c.l.b16 %v245
      %v294 = vunpack.c.l.b16 %v246
      %v295 = vunpack.c.l.b16 %v247
      %v296 = vunpack.c.l.b16 %v248
      %v297 = vunpack.c.l.b16 %v249
      %v298 = vpack.c.b16 %v283, %v282
      %v299 = vpack.c.b16 %v285, %v284
      %v300 = vpack.c.b16 %v287, %v286
      %v301 = vpack.c.b16 %v289, %v288
      %v302 = vpack.c.b16 %v291, %v290
      %v303 = vpack.c.b16 %v293, %v292
      %v304 = vpack.c.b16 %v295, %v294
      %v305 = vpack.c.b16 %v297, %v296
      %314 = vmatpush.bf16.msra.mxu0 %v305
      %315 = vmatpush.bf16.msra.mxu0 %v304
      %316 = vmatpush.bf16.msra.mxu0 %v303
      %317 = vmatpush.bf16.msra.mxu0 %v302
      %318 = vmatpush.bf16.msra.mxu0 %v301
      %319 = vmatpush.bf16.msra.mxu0 %v300
      %320 = vmatpush.bf16.msra.mxu0 %v299
      %321 = vmatpush.bf16.msra.mxu0 %v298
      %322 = vmatmul.bf16.gmra.mxu0 %v262
      %v323 = vpop.f32.mrf.mxu0
      %v324 = vadd.f32 %v252, %v323
      %v325 = vpop.f32.mrf.mxu0
      %v326 = vadd.f32 %v252, %v325
      %327 = vmatmul.bf16.gmra.mxu0 %v263
      %v328 = vpop.f32.mrf.mxu0
      %v329 = vadd.f32 %v252, %v328
      %v330 = vpop.f32.mrf.mxu0
      %v331 = vadd.f32 %v252, %v330
      %332 = vdwg.mxu0
      %v333 = vmax.f32 %v324, 0.0
      %v334 = vmax.f32 %v326, 0.0
      %v335 = vmax.f32 %v329, 0.0
      %v336 = vmax.f32 %v331, 0.0
      %v337 = vpack.c.bf16 %v333, %v333
      %v338 = vpack.c.bf16 %v334, %v334
      %v339 = vpack.c.bf16 %v335, %v335
      %v340 = vpack.c.bf16 %v336, %v336
      %vm341 = vcmask 125952
      %342 = vst.msk [vmem:[%s228] sm:$0xf] %vm341, %v337
      %343 = vst.msk [vmem:[%s228 + $0x4] sm:$0xf] %vm341, %v338
      %344 = vst.msk [vmem:[%s228 + $0x8] sm:$0xf] %vm341, %v339
      %345 = vst.msk [vmem:[%s228 + $0xc] sm:$0xf] %vm341, %v340
      %s346 = smul.u32 4, %s19
      %p347 = scmp.lt.s32.totalorder %s18, 3
      %s348 = scalar_select %p347, %s18, 3
      %p349 = scmp.lt.s32.totalorder %s346, 3
      %s350 = scalar_select %p349, %s346, 3
      %s351 = smul.addr %s348, 4
      %s352 = sadd.s32 %s350, %s351
      %s353 = smul.addr %s352, 4
      %s354 = scalar_lea.vmem %s3, %s353
      // Predicated region
      $region33: #{ae_forward.9} parent=31 // pred_check
        %p355 = pneg %p121
      $region34: #{ae_forward.9} parent=31 // pred_check_branch
        %357 = sbr.rel (%p355) target = $region36
      $region35: #{ae_forward.9} parent=31 // pred_region
        %s358 = smul.u32 4, %s19
      $region36: #{ae_forward.9} parent=31 // pred_fallthru
        _
    $region32: #{ae_forward.9} parent=5 // pred_fallthru
      _
    %p359 = scmp.le.s32.totalorder 2, %s9
    // Predicated region
    $region37: #{ae_forward.9} parent=5 // pred_check
      %p360 = pneg %p359
    $region38: #{ae_forward.9} parent=5 // pred_check_branch
      %362 = sbr.rel (%p360) target = $region40
    $region39: #{ae_forward.9} parent=5 // pred_region
      %s363 = ssub.s32 %s9, 2
      // Predicated region
      $region41: #{ae_forward.9} parent=39 // pred_check
        %p364 = pneg %p127
      $region42: #{ae_forward.9} parent=39 // pred_check_branch
        %366 = sbr.rel (%p364) target = $region44
      $region43: #{ae_forward.9} parent=39 // pred_region
        %s367 = smul.u32 4, %s21
        %p368 = scmp.lt.s32.totalorder %s20, 3
        %s369 = scalar_select %p368, %s20, 3
        %p370 = scmp.lt.s32.totalorder %s367, 3
        %s371 = scalar_select %p370, %s367, 3
        %s372 = smul.addr %s369, 4
        %s373 = sadd.s32 %s371, %s372
        %s374 = smul.addr %s373, 4
        %s375 = scalar_lea.vmem %s3, %s374
      $region44: #{ae_forward.9} parent=39 // pred_fallthru
        _
    $region40: #{ae_forward.9} parent=5 // pred_fallthru
      _
  $region6: #{ae_forward.9} parent=0 // loop_footer
    %s13 = sadd.s32 1, %s9
  $region7: #{ae_forward.9} parent=0 // loop_footer_branch
    %8 = sbr.rel target = $region3
  $region8: #{ae_forward.9} parent=0 // loop_exit
    _

// kernel: ae_forward.10
$region0: #{ae_forward.10}
  #allocation0 [shape = 'u32[]', space=smem, size = 0x4, offset = 0x4, fixed_abs, tag = 'smem constant byte address 0x4 - core index']
  #allocation1 [shape = 'u32[72,128]{1,0:T(1,128)}', space=vmem, size = 0x9000, scoped, tag = 'internal scratch']
  %s0 = inlined_call_operand.vmem [shape: bf16[4,128,64], index: 0, kind: input, shape index: {}]
  %s1 = inlined_call_operand.vmem [shape: bf16[4,64,8], index: 1, kind: input, shape index: {}]
  %s2 = inlined_call_operand.vmem [shape: f32[1,1,8], index: 2, kind: input, shape index: {}]
  %s3 = inlined_call_operand.vmem [shape: bf16[4,128,8], index: 3, kind: output, shape index: {}]
  %s4 = sld [smem:[#allocation0]]
  $region45: #{ae_forward.10} parent=0
    _
  %s6 = ssub.s32 1, %s4
  %s7 = scalar_select 0, %s6, %s4
  loop: start=0, step=1, limit=6
  $region2: #{ae_forward.10} parent=0 // loop_pre_header
    _
  $region3: #{ae_forward.10} parent=0 // loop_header
    %s9 = sphi 0, %s13
    %p10 = scmp.ge.s32.totalorder %s9, 6
    %s16 = sphi 0, %s28
    %s17 = sphi 0, %s24
    %s18 = sphi 0, %s16
    %s19 = sphi 0, %s17
    %s20 = sphi 0, %s18
    %s21 = sphi 0, %s19
    %s33 = sphi 0, %s35
    %s36 = sphi 0, %s33
    %s37 = sphi 0, %s36
    %s53 = sphi 0, %s37
    %s59 = sphi 0, %s61
    %s62 = sphi 0, %s59
    %s63 = sphi 0, %s62
    %s79 = sphi 0, %s63
    %s83 = sphi 0, %s83
    %s85 = sphi 0, %s83
    %s86 = sphi 0, %s85
    %s100 = sphi 0, %s86
    %s108 = sphi 0, %s110
    %s111 = sphi 0, %s108
    %s112 = sphi 0, %s111
    %s128 = sphi 0, %s112
  $region4: #{ae_forward.10} parent=0 // loop_header_branch
    %12 = sbr.rel (%p10) target = $region8
  $region5: #{ae_forward.10} parent=0 // loop_body
    %s14 = ssub.s32 %s9, 1
    %s15 = ssub.s32 %s9, 2
    %s22 = sadd.s32 1, %s17
    %p23 = scmp.ge.s32.totalorder %s22, 1
    %s24 = scalar_select %p23, 0, %s22
    %s25 = sadd.s32 1, %s16
    %s26 = scalar_select %p23, %s25, %s16
    %p27 = scmp.ge.s32.totalorder %s26, 4
    %s28 = scalar_select %p27, 0, %s26
    %s29 = ssub.s32 %s16, %s28
    %s30 = ssub.s32 %s17, %s24
    %s31 = sor.u32 %s29, %s30
    %p32 = scmp.eq.s32.totalorder %s31, 0
    %s34 = sadd.s32 %s33, 1
    %s35 = scalar_select %p32, %s33, %s34
    %p38 = pneg %p32
    %p39 = scmp.eq.s32.totalorder %s9, 3
    %p40 = por %p38, %p39
    %p41 = scmp.ne.s32.totalorder %s33, %s36
    %p42 = scmp.eq.s32.totalorder %s9, 0
    %p43 = por %p41, %p42
    %p44 = scmp.ne.s32.totalorder %s33, %s36
    %p45 = scmp.eq.s32.totalorder %s14, 3
    %p46 = por %p44, %p45
    %p47 = scmp.ne.s32.totalorder %s36, %s37
    %p48 = scmp.eq.s32.totalorder %s14, 0
    %p49 = por %p47, %p48
    %p50 = scmp.ne.s32.totalorder %s36, %s37
    %p51 = scmp.eq.s32.totalorder %s15, 3
    %p52 = por %p50, %p51
    %p54 = scmp.ne.s32.totalorder %s37, %s53
    %p55 = scmp.eq.s32.totalorder %s15, 0
    %p56 = por %p54, %p55
    %s57 = ssub.s32 %s16, %s28
    %p58 = scmp.eq.s32.totalorder %s57, 0
    %s60 = sadd.s32 %s59, 1
    %s61 = scalar_select %p58, %s59, %s60
    %p64 = pneg %p58
    %p65 = scmp.eq.s32.totalorder %s9, 3
    %p66 = por %p64, %p65
    %p67 = scmp.ne.s32.totalorder %s59, %s62
    %p68 = scmp.eq.s32.totalorder %s9, 0
    %p69 = por %p67, %p68
    %p70 = scmp.ne.s32.totalorder %s59, %s62
    %p71 = scmp.eq.s32.totalorder %s14, 3
    %p72 = por %p70, %p71
    %p73 = scmp.ne.s32.totalorder %s62, %s63
    %p74 = scmp.eq.s32.totalorder %s14, 0
    %p75 = por %p73, %p74
    %p76 = scmp.ne.s32.totalorder %s62, %s63
    %p77 = scmp.eq.s32.totalorder %s15, 3
    %p78 = por %p76, %p77
    %p80 = scmp.ne.s32.totalorder %s63, %s79
    %p81 = scmp.eq.s32.totalorder %s15, 0
    %p82 = por %p80, %p81
    %s84 = sadd.s32 %s83, 1
    %p87 = scmp.eq.s32.totalorder %s9, 3
    %p88 = scmp.ne.s32.totalorder %s83, %s85
    %p89 = scmp.eq.s32.totalorder %s9, 0
    %p90 = por %p88, %p89
    %p91 = scmp.ne.s32.totalorder %s83, %s85
    %p92 = scmp.eq.s32.totalorder %s14, 3
    %p93 = por %p91, %p92
    %p94 = scmp.ne.s32.totalorder %s85, %s86
    %p95 = scmp.eq.s32.totalorder %s14, 0
    %p96 = por %p94, %p95
    %p97 = scmp.ne.s32.totalorder %s85, %s86
    %p98 = scmp.eq.s32.totalorder %s15, 3
    %p99 = por %p97, %p98
    %p101 = scmp.ne.s32.totalorder %s86, %s100
    %p102 = scmp.eq.s32.totalorder %s15, 0
    %p103 = por %p101, %p102
    %s104 = ssub.s32 %s16, %s28
    %s105 = ssub.s32 %s17, %s24
    %s106 = sor.u32 %s104, %s105
    %p107 = scmp.eq.s32.totalorder %s106, 0
    %s109 = sadd.s32 %s108, 1
    %s110 = scalar_select %p107, %s108, %s109
    %p113 = pneg %p107
    %p114 = scmp.eq.s32.totalorder %s9, 3
    %p115 = por %p113, %p114
    %p116 = scmp.ne.s32.totalorder %s108, %s111
    %p117 = scmp.eq.s32.totalorder %s9, 0
    %p118 = por %p116, %p117
    %p119 = scmp.ne.s32.totalorder %s108, %s111
    %p120 = scmp.eq.s32.totalorder %s14, 3
    %p121 = por %p119, %p120
    %p122 = scmp.ne.s32.totalorder %s111, %s112
    %p123 = scmp.eq.s32.totalorder %s14, 0
    %p124 = por %p122, %p123
    %p125 = scmp.ne.s32.totalorder %s111, %s112
    %p126 = scmp.eq.s32.totalorder %s15, 3
    %p127 = por %p125, %p126
    %p129 = scmp.ne.s32.totalorder %s112, %s128
    %p130 = scmp.eq.s32.totalorder %s15, 0
    %p131 = por %p129, %p130
    %p132 = scmp.le.s32.totalorder 1, %s9
    %p133 = scmp.lt.s32.totalorder %s9, 5
    %p134 = pnand %p132, %p133
    %p135 = pneg %p134
    // Predicated region
    $region9: #{ae_forward.10} parent=5 // pred_check
      _
    $region10: #{ae_forward.10} parent=5 // pred_check_branch
      %137 = sbr.rel (%p134) target = $region12
    $region11: #{ae_forward.10} parent=5 // pred_region
      %s138 = ssub.s32 %s9, 1
      // Predicated region
      $region13: #{ae_forward.10} parent=11 // pred_check
        %p139 = pneg %p96
      $region14: #{ae_forward.10} parent=11 // pred_check_branch
        %141 = sbr.rel (%p139) target = $region16
      $region15: #{ae_forward.10} parent=11 // pred_region
        _
      $region16: #{ae_forward.10} parent=11 // pred_fallthru
        _
    $region12: #{ae_forward.10} parent=5 // pred_fallthru
      _
    %p142 = scmp.lt.s32.totalorder %s9, 4
    // Predicated region
    $region17: #{ae_forward.10} parent=5 // pred_check
      %p143 = pneg %p142
    $region18: #{ae_forward.10} parent=5 // pred_check_branch
      %145 = sbr.rel (%p143) target = $region20
    $region19: #{ae_forward.10} parent=5 // pred_region
      // Predicated region
      $region21: #{ae_forward.10} parent=19 // pred_check
        %p146 = pneg %p43
      $region22: #{ae_forward.10} parent=19 // pred_check_branch
        %148 = sbr.rel (%p146) target = $region24
      $region23: #{ae_forward.10} parent=19 // pred_region
        %s149 = smul.u32 16, %s17
        %p150 = scmp.lt.s32.totalorder %s16, 3
        %s151 = scalar_select %p150, %s16, 3
        %p152 = scmp.lt.s32.totalorder %s149, 15
        %s153 = scalar_select %p152, %s149, 15
        %s154 = smul.addr %s151, 16
        %s155 = sadd.s32 %s153, %s154
        %s156 = smul.addr %s155, 4
        %s157 = scalar_lea.vmem %s0, %s156
        %s158 = smul.u32 16, %s17
      $region24: #{ae_forward.10} parent=19 // pred_fallthru
        _
      // Predicated region
      $region25: #{ae_forward.10} parent=19 // pred_check
        %p159 = pneg %p69
      $region26: #{ae_forward.10} parent=19 // pred_check_branch
        %161 = sbr.rel (%p159) target = $region28
      $region27: #{ae_forward.10} parent=19 // pred_region
        %p162 = scmp.lt.s32.totalorder %s16, 3
        %s163 = scalar_select %p162, %s16, 3
        %s164 = smul.addr %s163, 8
        %s165 = smul.addr %s164, 4
        %s166 = scalar_lea.vmem %s1, %s165
      $region28: #{ae_forward.10} parent=19 // pred_fallthru
        _
    $region20: #{ae_forward.10} parent=5 // pred_fallthru
      _
    %p167 = scmp.le.s32.totalorder 1, %s9
    %p168 = scmp.lt.s32.totalorder %s9, 5
    %p169 = pnand %p167, %p168
    %p170 = pneg %p169
    // Predicated region
    $region29: #{ae_forward.10} parent=5 // pred_check
      _
    $region30: #{ae_forward.10} parent=5 // pred_check_branch
      %172 = sbr.rel (%p169) target = $region32
    $region31: #{ae_forward.10} parent=5 // pred_region
      %s173 = ssub.s32 %s9, 1
      %s174 = smul.u32 16, %s19
      %p175 = scmp.lt.s32.totalorder %s18, 3
      %s176 = scalar_select %p175, %s18, 3
      %p177 = scmp.lt.s32.totalorder %s174, 15
      %s178 = scalar_select %p177, %s174, 15
      %s179 = smul.addr %s176, 16
      %s180 = sadd.s32 %s178, %s179
      %s181 = smul.addr %s180, 4
      %s182 = scalar_lea.vmem %s0, %s181
      %p183 = pneg %p49
      %p184 = pneg %p46
      %p185 = scmp.lt.s32.totalorder %s18, 3
      %s186 = scalar_select %p185, %s18, 3
      %s187 = smul.addr %s186, 8
      %s188 = smul.addr %s187, 4
      %s189 = scalar_lea.vmem %s1, %s188
      %p190 = pneg %p75
      %p191 = pneg %p72
      %p192 = pneg %p96
      %p193 = pneg %p93
      %p194 = pneg %p124
      %p195 = pneg %p121
      %s196 = smul.u32 16, %s19
      %p197 = scmp.lt.s32.totalorder %s18, 3
      %s198 = scalar_select %p197, %s18, 3
      %p199 = scmp.lt.s32.totalorder %s196, 15
      %s200 = scalar_select %p199, %s196, 15
      %s201 = smul.addr %s198, 16
      %s202 = sadd.s32 %s200, %s201
      %s203 = smul.addr %s202, 4
      %s204 = scalar_lea.vmem %s3, %s203
      %s205 = smul.u32 16, %s19
      %p206 = scmp.lt.s32.totalorder %s18, 3
      %s207 = scalar_select %p206, %s18, 3
      %p208 = scmp.lt.s32.totalorder %s205, 15
      %s209 = scalar_select %p208, %s205, 15
      %s210 = smul.addr %s207, 16
      %s211 = sadd.s32 %s209, %s210
      %s212 = smul.addr %s211, 4
      %s213 = scalar_lea.vmem %s0, %s212
      %s214 = smul.u32 16, %s19
      %p215 = scmp.lt.s32.totalorder %s18, 3
      %s216 = scalar_select %p215, %s18, 3
      %s217 = smul.addr %s216, 8
      %s218 = smul.addr %s217, 4
      %s219 = scalar_lea.vmem %s1, %s218
      %s220 = smul.u32 16, %s19
      %p221 = scmp.lt.s32.totalorder %s18, 3
      %s222 = scalar_select %p221, %s18, 3
      %p223 = scmp.lt.s32.totalorder %s220, 15
      %s224 = scalar_select %p223, %s220, 15
      %s225 = smul.addr %s222, 16
      %s226 = sadd.s32 %s224, %s225
      %s227 = smul.addr %s226, 4
      %s228 = scalar_lea.vmem %s3, %s227
      %s229 = smul.u32 16, %s19
      %v231 = vld [vmem:[%s213] sm:$0xf]
      %v232 = vld [vmem:[%s213 + $0x4] sm:$0xf]
      %v233 = vld [vmem:[%s213 + $0x8] sm:$0xf]
      %v234 = vld [vmem:[%s213 + $0xc] sm:$0xf]
      %v235 = vld [vmem:[%s213 + $0x10] sm:$0xf]
      %v236 = vld [vmem:[%s213 + $0x14] sm:$0xf]
      %v237 = vld [vmem:[%s213 + $0x18] sm:$0xf]
      %v238 = vld [vmem:[%s213 + $0x1c] sm:$0xf]
      %v239 = vld [vmem:[%s213 + $0x20] sm:$0xf]
      %v240 = vld [vmem:[%s213 + $0x24] sm:$0xf]
      %v241 = vld [vmem:[%s213 + $0x28] sm:$0xf]
      %v242 = vld [vmem:[%s213 + $0x2c] sm:$0xf]
      %v243 = vld [vmem:[%s213 + $0x30] sm:$0xf]
      %v244 = vld [vmem:[%s213 + $0x34] sm:$0xf]
      %v245 = vld [vmem:[%s213 + $0x38] sm:$0xf]
      %v246 = vld [vmem:[%s213 + $0x3c] sm:$0xf]
      %v247 = vld [vmem:[%s219] sm:$0xf]
      %v248 = vld [vmem:[%s219 + $0x4] sm:$0xf]
      %v249 = vld [vmem:[%s219 + $0x8] sm:$0xf]
      %v250 = vld [vmem:[%s219 + $0xc] sm:$0xf]
      %v251 = vld [vmem:[%s219 + $0x10] sm:$0xf]
      %v252 = vld [vmem:[%s219 + $0x14] sm:$0xf]
      %v253 = vld [vmem:[%s219 + $0x18] sm:$0xf]
      %v254 = vld [vmem:[%s219 + $0x1c] sm:$0xf]
      %v255 = vld [vmem:[%s2] sm:$0x1]
      %v257 = vperm.slane %v255, 0
      %v275 = vunpack.c.l.b16 %v231
      %v276 = vunpack.c.l.b16 %v232
      %v277 = vunpack.c.l.b16 %v233
      %v278 = vunpack.c.l.b16 %v234
      %v279 = vunpack.c.l.b16 %v235
      %v280 = vunpack.c.l.b16 %v236
      %v281 = vunpack.c.l.b16 %v237
      %v282 = vunpack.c.l.b16 %v238
      %v283 = vunpack.c.l.b16 %v239
      %v284 = vunpack.c.l.b16 %v240
      %v285 = vunpack.c.l.b16 %v241
      %v286 = vunpack.c.l.b16 %v242
      %v287 = vunpack.c.l.b16 %v243
      %v288 = vunpack.c.l.b16 %v244
      %v289 = vunpack.c.l.b16 %v245
      %v290 = vunpack.c.l.b16 %v246
      %v291 = vpack.c.b16 %v276, %v275
      %v292 = vpack.c.b16 %v278, %v277
      %v293 = vpack.c.b16 %v280, %v279
      %v294 = vpack.c.b16 %v282, %v281
      %v295 = vpack.c.b16 %v284, %v283
      %v296 = vpack.c.b16 %v286, %v285
      %v297 = vpack.c.b16 %v288, %v287
      %v298 = vpack.c.b16 %v290, %v289
      %v307 = vunpack.c.l.b16 %v247
      %v308 = vunpack.c.l.b16 %v248
      %v309 = vunpack.c.l.b16 %v249
      %v310 = vunpack.c.l.b16 %v250
      %v311 = vunpack.c.l.b16 %v251
      %v312 = vunpack.c.l.b16 %v252
      %v313 = vunpack.c.l.b16 %v253
      %v314 = vunpack.c.l.b16 %v254
      %v315 = vpack.c.b16 %v308, %v307
      %v316 = vpack.c.b16 %v310, %v309
      %v317 = vpack.c.b16 %v312, %v311
      %v318 = vpack.c.b16 %v314, %v313
      %vm323 = vcmask 523264
      %v325 = vsel %vm323, %v291, 0
      %v328 = vsel %vm323, %v292, 0
      %v331 = vsel %vm323, %v293, 0
      %v334 = vsel %vm323, %v294, 0
      %v337 = vsel %vm323, %v295, 0
      %v340 = vsel %vm323, %v296, 0
      %v343 = vsel %vm323, %v297, 0
      %v346 = vsel %vm323, %v298, 0
      %348 = vmatpush.bf16.msra.mxu0 0
      %349 = vmatpush.bf16.msra.mxu0 0
      %350 = vmatpush.bf16.msra.mxu0 0
      %351 = vmatpush.bf16.msra.mxu0 0
      %352 = vmatpush.bf16.msra.mxu0 %v318
      %353 = vmatpush.bf16.msra.mxu0 %v317
      %354 = vmatpush.bf16.msra.mxu0 %v316
      %355 = vmatpush.bf16.msra.mxu0 %v315
      %356 = vmatmul.bf16.gmra.mxu0 %v325
      %v357 = vpop.f32.mrf.mxu0
      %v358 = vadd.f32 %v257, %v357
      %v359 = vpop.f32.mrf.mxu0
      %v360 = vadd.f32 %v257, %v359
      %361 = vmatmul.bf16.gmra.mxu0 %v328
      %v362 = vpop.f32.mrf.mxu0
      %v363 = vadd.f32 %v257, %v362
      %v364 = vpop.f32.mrf.mxu0
      %v365 = vadd.f32 %v257, %v364
      %366 = vmatmul.bf16.gmra.mxu0 %v331
      %v367 = vpop.f32.mrf.mxu0
      %v368 = vadd.f32 %v257, %v367
      %v369 = vpop.f32.mrf.mxu0
      %v370 = vadd.f32 %v257, %v369
      %371 = vmatmul.bf16.gmra.mxu0 %v334
      %v372 = vpop.f32.mrf.mxu0
      %v373 = vadd.f32 %v257, %v372
      %v374 = vpop.f32.mrf.mxu0
      %v375 = vadd.f32 %v257, %v374
      %376 = vmatmul.bf16.gmra.mxu0 %v337
      %v377 = vpop.f32.mrf.mxu0
      %v378 = vadd.f32 %v257, %v377
      %v379 = vpop.f32.mrf.mxu0
      %v380 = vadd.f32 %v257, %v379
      %381 = vmatmul.bf16.gmra.mxu0 %v340
      %v382 = vpop.f32.mrf.mxu0
      %v383 = vadd.f32 %v257, %v382
      %v384 = vpop.f32.mrf.mxu0
      %v385 = vadd.f32 %v257, %v384
      %386 = vmatmul.bf16.gmra.mxu0 %v343
      %v387 = vpop.f32.mrf.mxu0
      %v388 = vadd.f32 %v257, %v387
      %v389 = vpop.f32.mrf.mxu0
      %v390 = vadd.f32 %v257, %v389
      %391 = vmatmul.bf16.gmra.mxu0 %v346
      %v392 = vpop.f32.mrf.mxu0
      %v393 = vadd.f32 %v257, %v392
      %v394 = vpop.f32.mrf.mxu0
      %v395 = vadd.f32 %v257, %v394
      %396 = vdwg.mxu0
      %v397 = vmax.f32 %v358, 0.0
      %v398 = vmax.f32 %v360, 0.0
      %v399 = vmax.f32 %v363, 0.0
      %v400 = vmax.f32 %v365, 0.0
      %v401 = vmax.f32 %v368, 0.0
      %v402 = vmax.f32 %v370, 0.0
      %v403 = vmax.f32 %v373, 0.0
      %v404 = vmax.f32 %v375, 0.0
      %v405 = vmax.f32 %v378, 0.0
      %v406 = vmax.f32 %v380, 0.0
      %v407 = vmax.f32 %v383, 0.0
      %v408 = vmax.f32 %v385, 0.0
      %v409 = vmax.f32 %v388, 0.0
      %v410 = vmax.f32 %v390, 0.0
      %v411 = vmax.f32 %v393, 0.0
      %v412 = vmax.f32 %v395, 0.0
      %v413 = vpack.c.bf16 %v397, %v397
      %v414 = vpack.c.bf16 %v398, %v398
      %v415 = vpack.c.bf16 %v399, %v399
      %v416 = vpack.c.bf16 %v400, %v400
      %v417 = vpack.c.bf16 %v401, %v401
      %v418 = vpack.c.bf16 %v402, %v402
      %v419 = vpack.c.bf16 %v403, %v403
      %v420 = vpack.c.bf16 %v404, %v404
      %v421 = vpack.c.bf16 %v405, %v405
      %v422 = vpack.c.bf16 %v406, %v406
      %v423 = vpack.c.bf16 %v407, %v407
      %v424 = vpack.c.bf16 %v408, %v408
      %v425 = vpack.c.bf16 %v409, %v409
      %v426 = vpack.c.bf16 %v410, %v410
      %v427 = vpack.c.bf16 %v411, %v411
      %v428 = vpack.c.bf16 %v412, %v412
      %vm429 = vcmask 60416
      %430 = vst.msk [vmem:[%s228] sm:$0xf] %vm429, %v413
      %431 = vst.msk [vmem:[%s228 + $0x4] sm:$0xf] %vm429, %v414
      %432 = vst.msk [vmem:[%s228 + $0x8] sm:$0xf] %vm429, %v415
      %433 = vst.msk [vmem:[%s228 + $0xc] sm:$0xf] %vm429, %v416
      %434 = vst.msk [vmem:[%s228 + $0x10] sm:$0xf] %vm429, %v417
      %435 = vst.msk [vmem:[%s228 + $0x14] sm:$0xf] %vm429, %v418
      %436 = vst.msk [vmem:[%s228 + $0x18] sm:$0xf] %vm429, %v419
      %437 = vst.msk [vmem:[%s228 + $0x1c] sm:$0xf] %vm429, %v420
      %438 = vst.msk [vmem:[%s228 + $0x20] sm:$0xf] %vm429, %v421
      %439 = vst.msk [vmem:[%s228 + $0x24] sm:$0xf] %vm429, %v422
      %440 = vst.msk [vmem:[%s228 + $0x28] sm:$0xf] %vm429, %v423
      %441 = vst.msk [vmem:[%s228 + $0x2c] sm:$0xf] %vm429, %v424
      %442 = vst.msk [vmem:[%s228 + $0x30] sm:$0xf] %vm429, %v425
      %443 = vst.msk [vmem:[%s228 + $0x34] sm:$0xf] %vm429, %v426
      %444 = vst.msk [vmem:[%s228 + $0x38] sm:$0xf] %vm429, %v427
      %445 = vst.msk [vmem:[%s228 + $0x3c] sm:$0xf] %vm429, %v428
      %s446 = smul.u32 16, %s19
      %p447 = scmp.lt.s32.totalorder %s18, 3
      %s448 = scalar_select %p447, %s18, 3
      %p449 = scmp.lt.s32.totalorder %s446, 15
      %s450 = scalar_select %p449, %s446, 15
      %s451 = smul.addr %s448, 16
      %s452 = sadd.s32 %s450, %s451
      %s453 = smul.addr %s452, 4
      %s454 = scalar_lea.vmem %s3, %s453
      // Predicated region
      $region33: #{ae_forward.10} parent=31 // pred_check
        %p455 = pneg %p121
      $region34: #{ae_forward.10} parent=31 // pred_check_branch
        %457 = sbr.rel (%p455) target = $region36
      $region35: #{ae_forward.10} parent=31 // pred_region
        %s458 = smul.u32 16, %s19
      $region36: #{ae_forward.10} parent=31 // pred_fallthru
        _
    $region32: #{ae_forward.10} parent=5 // pred_fallthru
      _
    %p459 = scmp.le.s32.totalorder 2, %s9
    // Predicated region
    $region37: #{ae_forward.10} parent=5 // pred_check
      %p460 = pneg %p459
    $region38: #{ae_forward.10} parent=5 // pred_check_branch
      %462 = sbr.rel (%p460) target = $region40
    $region39: #{ae_forward.10} parent=5 // pred_region
      %s463 = ssub.s32 %s9, 2
      // Predicated region
      $region41: #{ae_forward.10} parent=39 // pred_check
        %p464 = pneg %p127
      $region42: #{ae_forward.10} parent=39 // pred_check_branch
        %466 = sbr.rel (%p464) target = $region44
      $region43: #{ae_forward.10} parent=39 // pred_region
        %s467 = smul.u32 16, %s21
        %p468 = scmp.lt.s32.totalorder %s20, 3
        %s469 = scalar_select %p468, %s20, 3
        %p470 = scmp.lt.s32.totalorder %s467, 15
        %s471 = scalar_select %p470, %s467, 15
        %s472 = smul.addr %s469, 16
        %s473 = sadd.s32 %s471, %s472
        %s474 = smul.addr %s473, 4
        %s475 = scalar_lea.vmem %s3, %s474
      $region44: #{ae_forward.10} parent=39 // pred_fallthru
        _
    $region40: #{ae_forward.10} parent=5 // pred_fallthru
      _
  $region6: #{ae_forward.10} parent=0 // loop_footer
    %s13 = sadd.s32 1, %s9
  $region7: #{ae_forward.10} parent=0 // loop_footer_branch
    %8 = sbr.rel target = $region3
  $region8: #{ae_forward.10} parent=0 // loop_exit
    _

// kernel: ae_forward.11
$region0: #{ae_forward.11}
  #allocation0 [shape = 'u32[]', space=smem, size = 0x4, offset = 0x4, fixed_abs, tag = 'smem constant byte address 0x4 - core index']
  #allocation1 [shape = 'u32[72,128]{1,0:T(1,128)}', space=vmem, size = 0x9000, scoped, tag = 'internal scratch']
  %s0 = inlined_call_operand.vmem [shape: bf16[1,512,72], index: 0, kind: input, shape index: {}]
  %s1 = inlined_call_operand.vmem [shape: bf16[1,72,3], index: 1, kind: input, shape index: {}]
  %s2 = inlined_call_operand.vmem [shape: f32[1,1,3], index: 2, kind: input, shape index: {}]
  %s3 = inlined_call_operand.vmem [shape: f32[1,512,3], index: 3, kind: output, shape index: {}]
  %s4 = sld [smem:[#allocation0]]
  $region45: #{ae_forward.11} parent=0
    _
  %s6 = ssub.s32 1, %s4
  %s7 = scalar_select 0, %s6, %s4
  loop: start=0, step=1, limit=4
  $region2: #{ae_forward.11} parent=0 // loop_pre_header
    _
  $region3: #{ae_forward.11} parent=0 // loop_header
    %s9 = sphi 0, %s13
    %p10 = scmp.ge.s32.totalorder %s9, 4
    %s16 = sphi 0, %s28
    %s17 = sphi 0, %s24
    %s18 = sphi 0, %s16
    %s19 = sphi 0, %s17
    %s20 = sphi 0, %s18
    %s21 = sphi 0, %s19
    %s33 = sphi 0, %s35
    %s36 = sphi 0, %s33
    %s37 = sphi 0, %s36
    %s53 = sphi 0, %s37
    %s59 = sphi 0, %s61
    %s62 = sphi 0, %s59
    %s63 = sphi 0, %s62
    %s79 = sphi 0, %s63
    %s83 = sphi 0, %s83
    %s85 = sphi 0, %s83
    %s86 = sphi 0, %s85
    %s100 = sphi 0, %s86
    %s108 = sphi 0, %s110
    %s111 = sphi 0, %s108
    %s112 = sphi 0, %s111
    %s128 = sphi 0, %s112
  $region4: #{ae_forward.11} parent=0 // loop_header_branch
    %12 = sbr.rel (%p10) target = $region8
  $region5: #{ae_forward.11} parent=0 // loop_body
    %s14 = ssub.s32 %s9, 1
    %s15 = ssub.s32 %s9, 2
    %s22 = sadd.s32 1, %s17
    %p23 = scmp.ge.s32.totalorder %s22, 2
    %s24 = scalar_select %p23, 0, %s22
    %s25 = sadd.s32 1, %s16
    %s26 = scalar_select %p23, %s25, %s16
    %p27 = scmp.ge.s32.totalorder %s26, 1
    %s28 = scalar_select %p27, 0, %s26
    %s29 = ssub.s32 %s16, %s28
    %s30 = ssub.s32 %s17, %s24
    %s31 = sor.u32 %s29, %s30
    %p32 = scmp.eq.s32.totalorder %s31, 0
    %s34 = sadd.s32 %s33, 1
    %s35 = scalar_select %p32, %s33, %s34
    %p38 = pneg %p32
    %p39 = scmp.eq.s32.totalorder %s9, 1
    %p40 = por %p38, %p39
    %p41 = scmp.ne.s32.totalorder %s33, %s36
    %p42 = scmp.eq.s32.totalorder %s9, 0
    %p43 = por %p41, %p42
    %p44 = scmp.ne.s32.totalorder %s33, %s36
    %p45 = scmp.eq.s32.totalorder %s14, 1
    %p46 = por %p44, %p45
    %p47 = scmp.ne.s32.totalorder %s36, %s37
    %p48 = scmp.eq.s32.totalorder %s14, 0
    %p49 = por %p47, %p48
    %p50 = scmp.ne.s32.totalorder %s36, %s37
    %p51 = scmp.eq.s32.totalorder %s15, 1
    %p52 = por %p50, %p51
    %p54 = scmp.ne.s32.totalorder %s37, %s53
    %p55 = scmp.eq.s32.totalorder %s15, 0
    %p56 = por %p54, %p55
    %s57 = ssub.s32 %s16, %s28
    %p58 = scmp.eq.s32.totalorder %s57, 0
    %s60 = sadd.s32 %s59, 1
    %s61 = scalar_select %p58, %s59, %s60
    %p64 = pneg %p58
    %p65 = scmp.eq.s32.totalorder %s9, 1
    %p66 = por %p64, %p65
    %p67 = scmp.ne.s32.totalorder %s59, %s62
    %p68 = scmp.eq.s32.totalorder %s9, 0
    %p69 = por %p67, %p68
    %p70 = scmp.ne.s32.totalorder %s59, %s62
    %p71 = scmp.eq.s32.totalorder %s14, 1
    %p72 = por %p70, %p71
    %p73 = scmp.ne.s32.totalorder %s62, %s63
    %p74 = scmp.eq.s32.totalorder %s14, 0
    %p75 = por %p73, %p74
    %p76 = scmp.ne.s32.totalorder %s62, %s63
    %p77 = scmp.eq.s32.totalorder %s15, 1
    %p78 = por %p76, %p77
    %p80 = scmp.ne.s32.totalorder %s63, %s79
    %p81 = scmp.eq.s32.totalorder %s15, 0
    %p82 = por %p80, %p81
    %s84 = sadd.s32 %s83, 1
    %p87 = scmp.eq.s32.totalorder %s9, 1
    %p88 = scmp.ne.s32.totalorder %s83, %s85
    %p89 = scmp.eq.s32.totalorder %s9, 0
    %p90 = por %p88, %p89
    %p91 = scmp.ne.s32.totalorder %s83, %s85
    %p92 = scmp.eq.s32.totalorder %s14, 1
    %p93 = por %p91, %p92
    %p94 = scmp.ne.s32.totalorder %s85, %s86
    %p95 = scmp.eq.s32.totalorder %s14, 0
    %p96 = por %p94, %p95
    %p97 = scmp.ne.s32.totalorder %s85, %s86
    %p98 = scmp.eq.s32.totalorder %s15, 1
    %p99 = por %p97, %p98
    %p101 = scmp.ne.s32.totalorder %s86, %s100
    %p102 = scmp.eq.s32.totalorder %s15, 0
    %p103 = por %p101, %p102
    %s104 = ssub.s32 %s16, %s28
    %s105 = ssub.s32 %s17, %s24
    %s106 = sor.u32 %s104, %s105
    %p107 = scmp.eq.s32.totalorder %s106, 0
    %s109 = sadd.s32 %s108, 1
    %s110 = scalar_select %p107, %s108, %s109
    %p113 = pneg %p107
    %p114 = scmp.eq.s32.totalorder %s9, 1
    %p115 = por %p113, %p114
    %p116 = scmp.ne.s32.totalorder %s108, %s111
    %p117 = scmp.eq.s32.totalorder %s9, 0
    %p118 = por %p116, %p117
    %p119 = scmp.ne.s32.totalorder %s108, %s111
    %p120 = scmp.eq.s32.totalorder %s14, 1
    %p121 = por %p119, %p120
    %p122 = scmp.ne.s32.totalorder %s111, %s112
    %p123 = scmp.eq.s32.totalorder %s14, 0
    %p124 = por %p122, %p123
    %p125 = scmp.ne.s32.totalorder %s111, %s112
    %p126 = scmp.eq.s32.totalorder %s15, 1
    %p127 = por %p125, %p126
    %p129 = scmp.ne.s32.totalorder %s112, %s128
    %p130 = scmp.eq.s32.totalorder %s15, 0
    %p131 = por %p129, %p130
    %p132 = scmp.le.s32.totalorder 1, %s9
    %p133 = scmp.lt.s32.totalorder %s9, 3
    %p134 = pnand %p132, %p133
    %p135 = pneg %p134
    // Predicated region
    $region9: #{ae_forward.11} parent=5 // pred_check
      _
    $region10: #{ae_forward.11} parent=5 // pred_check_branch
      %137 = sbr.rel (%p134) target = $region12
    $region11: #{ae_forward.11} parent=5 // pred_region
      %s138 = ssub.s32 %s9, 1
      // Predicated region
      $region13: #{ae_forward.11} parent=11 // pred_check
        %p139 = pneg %p75
      $region14: #{ae_forward.11} parent=11 // pred_check_branch
        %141 = sbr.rel (%p139) target = $region16
      $region15: #{ae_forward.11} parent=11 // pred_region
        %p142 = scmp.lt.s32.totalorder %s18, 0
        %s143 = scalar_select %p142, %s18, 0
        %s144 = smul.addr %s143, 9
        %s145 = smul.addr %s144, 4
        %s146 = scalar_lea.vmem %s1, %s145
      $region16: #{ae_forward.11} parent=11 // pred_fallthru
        _
      // Predicated region
      $region17: #{ae_forward.11} parent=11 // pred_check
        %p147 = pneg %p96
      $region18: #{ae_forward.11} parent=11 // pred_check_branch
        %149 = sbr.rel (%p147) target = $region20
      $region19: #{ae_forward.11} parent=11 // pred_region
        _
      $region20: #{ae_forward.11} parent=11 // pred_fallthru
        _
    $region12: #{ae_forward.11} parent=5 // pred_fallthru
      _
    %p150 = scmp.lt.s32.totalorder %s9, 2
    // Predicated region
    $region21: #{ae_forward.11} parent=5 // pred_check
      %p151 = pneg %p150
    $region22: #{ae_forward.11} parent=5 // pred_check_branch
      %153 = sbr.rel (%p151) target = $region24
    $region23: #{ae_forward.11} parent=5 // pred_region
      // Predicated region
      $region25: #{ae_forward.11} parent=23 // pred_check
        %p154 = pneg %p43
      $region26: #{ae_forward.11} parent=23 // pred_check_branch
        %156 = sbr.rel (%p154) target = $region28
      $region27: #{ae_forward.11} parent=23 // pred_region
        %s157 = smul.u32 32, %s17
        %p158 = scmp.lt.s32.totalorder %s16, 0
        %s159 = scalar_select %p158, %s16, 0
        %p160 = scmp.lt.s32.totalorder %s157, 63
        %s161 = scalar_select %p160, %s157, 63
        %s162 = smul.addr %s159, 64
        %s163 = sadd.s32 %s161, %s162
        %s164 = smul.addr %s163, 4
        %s165 = scalar_lea.vmem %s0, %s164
        %s166 = smul.u32 32, %s17
      $region28: #{ae_forward.11} parent=23 // pred_fallthru
        _
    $region24: #{ae_forward.11} parent=5 // pred_fallthru
      _
    %p167 = scmp.le.s32.totalorder 1, %s9
    %p168 = scmp.lt.s32.totalorder %s9, 3
    %p169 = pnand %p167, %p168
    %p170 = pneg %p169
    // Predicated region
    $region29: #{ae_forward.11} parent=5 // pred_check
      _
    $region30: #{ae_forward.11} parent=5 // pred_check_branch
      %172 = sbr.rel (%p169) target = $region32
    $region31: #{ae_forward.11} parent=5 // pred_region
      %s173 = ssub.s32 %s9, 1
      %s174 = smul.u32 32, %s19
      %p175 = scmp.lt.s32.totalorder %s18, 0
      %s176 = scalar_select %p175, %s18, 0
      %p177 = scmp.lt.s32.totalorder %s174, 63
      %s178 = scalar_select %p177, %s174, 63
      %s179 = smul.addr %s176, 64
      %s180 = sadd.s32 %s178, %s179
      %s181 = smul.addr %s180, 4
      %s182 = scalar_lea.vmem %s0, %s181
      %p183 = pneg %p49
      %p184 = pneg %p46
      %p185 = scmp.lt.s32.totalorder %s18, 0
      %s186 = scalar_select %p185, %s18, 0
      %s187 = smul.addr %s186, 9
      %s188 = smul.addr %s187, 4
      %s189 = scalar_lea.vmem %s1, %s188
      %p190 = pneg %p75
      %p191 = pneg %p72
      %p192 = pneg %p96
      %p193 = pneg %p93
      %p194 = pneg %p124
      %p195 = pneg %p121
      %s196 = smul.u32 32, %s19
      %p197 = scmp.lt.s32.totalorder %s18, 0
      %s198 = scalar_select %p197, %s18, 0
      %p199 = scmp.lt.s32.totalorder %s196, 63
      %s200 = scalar_select %p199, %s196, 63
      %s201 = smul.addr %s198, 64
      %s202 = sadd.s32 %s200, %s201
      %s203 = smul.addr %s202, 8
      %s204 = scalar_lea.vmem %s3, %s203
      %s205 = smul.u32 32, %s19
      %p206 = scmp.lt.s32.totalorder %s18, 0
      %s207 = scalar_select %p206, %s18, 0
      %p208 = scmp.lt.s32.totalorder %s205, 63
      %s209 = scalar_select %p208, %s205, 63
      %s210 = smul.addr %s207, 64
      %s211 = sadd.s32 %s209, %s210
      %s212 = smul.addr %s211, 4
      %s213 = scalar_lea.vmem %s0, %s212
      %s214 = smul.u32 32, %s19
      %p215 = scmp.lt.s32.totalorder %s18, 0
      %s216 = scalar_select %p215, %s18, 0
      %s217 = smul.addr %s216, 9
      %s218 = smul.addr %s217, 4
      %s219 = scalar_lea.vmem %s1, %s218
      %s220 = smul.u32 32, %s19
      %p221 = scmp.lt.s32.totalorder %s18, 0
      %s222 = scalar_select %p221, %s18, 0
      %p223 = scmp.lt.s32.totalorder %s220, 63
      %s224 = scalar_select %p223, %s220, 63
      %s225 = smul.addr %s222, 64
      %s226 = sadd.s32 %s224, %s225
      %s227 = smul.addr %s226, 8
      %s228 = scalar_lea.vmem %s3, %s227
      %s229 = smul.u32 32, %s19
      %v231 = vld [vmem:[%s213] sm:$0xf]
      %v232 = vld [vmem:[%s213 + $0x4] sm:$0xf]
      %v233 = vld [vmem:[%s213 + $0x8] sm:$0xf]
      %v234 = vld [vmem:[%s213 + $0xc] sm:$0xf]
      %v235 = vld [vmem:[%s213 + $0x10] sm:$0xf]
      %v236 = vld [vmem:[%s213 + $0x14] sm:$0xf]
      %v237 = vld [vmem:[%s213 + $0x18] sm:$0xf]
      %v238 = vld [vmem:[%s213 + $0x1c] sm:$0xf]
      %v239 = vld [vmem:[%s213 + $0x20] sm:$0xf]
      %v240 = vld [vmem:[%s213 + $0x24] sm:$0xf]
      %v241 = vld [vmem:[%s213 + $0x28] sm:$0xf]
      %v242 = vld [vmem:[%s213 + $0x2c] sm:$0xf]
      %v243 = vld [vmem:[%s213 + $0x30] sm:$0xf]
      %v244 = vld [vmem:[%s213 + $0x34] sm:$0xf]
      %v245 = vld [vmem:[%s213 + $0x38] sm:$0xf]
      %v246 = vld [vmem:[%s213 + $0x3c] sm:$0xf]
      %v247 = vld [vmem:[%s213 + $0x40] sm:$0xf]
      %v248 = vld [vmem:[%s213 + $0x44] sm:$0xf]
      %v249 = vld [vmem:[%s213 + $0x48] sm:$0xf]
      %v250 = vld [vmem:[%s213 + $0x4c] sm:$0xf]
      %v251 = vld [vmem:[%s213 + $0x50] sm:$0xf]
      %v252 = vld [vmem:[%s213 + $0x54] sm:$0xf]
      %v253 = vld [vmem:[%s213 + $0x58] sm:$0xf]
      %v254 = vld [vmem:[%s213 + $0x5c] sm:$0xf]
      %v255 = vld [vmem:[%s213 + $0x60] sm:$0xf]
      %v256 = vld [vmem:[%s213 + $0x64] sm:$0xf]
      %v257 = vld [vmem:[%s213 + $0x68] sm:$0xf]
      %v258 = vld [vmem:[%s213 + $0x6c] sm:$0xf]
      %v259 = vld [vmem:[%s213 + $0x70] sm:$0xf]
      %v260 = vld [vmem:[%s213 + $0x74] sm:$0xf]
      %v261 = vld [vmem:[%s213 + $0x78] sm:$0xf]
      %v262 = vld [vmem:[%s213 + $0x7c] sm:$0xf]
      %v263 = vld [vmem:[%s219] sm:$0xf]
      %v264 = vld [vmem:[%s219 + $0x4] sm:$0xf]
      %v265 = vld [vmem:[%s219 + $0x8] sm:$0xf]
      %v266 = vld [vmem:[%s219 + $0xc] sm:$0xf]
      %v267 = vld [vmem:[%s219 + $0x10] sm:$0xf]
      %v268 = vld [vmem:[%s219 + $0x14] sm:$0xf]
      %v269 = vld [vmem:[%s219 + $0x18] sm:$0xf]
      %v270 = vld [vmem:[%s219 + $0x1c] sm:$0xf]
      %v271 = vld [vmem:[%s219 + $0x20] sm:$0xf]
      %v272 = vld [vmem:[%s2] sm:$0x1]
      %v274 = vperm.slane %v272, 0
      %v308 = vunpack.c.l.b16 %v231
      %v309 = vunpack.c.l.b16 %v232
      %v310 = vunpack.c.l.b16 %v233
      %v311 = vunpack.c.l.b16 %v234
      %v312 = vunpack.c.l.b16 %v235
      %v313 = vunpack.c.l.b16 %v236
      %v314 = vunpack.c.l.b16 %v237
      %v315 = vunpack.c.l.b16 %v238
      %v316 = vunpack.c.l.b16 %v239
      %v317 = vunpack.c.l.b16 %v240
      %v318 = vunpack.c.l.b16 %v241
      %v319 = vunpack.c.l.b16 %v242
      %v320 = vunpack.c.l.b16 %v243
      %v321 = vunpack.c.l.b16 %v244
      %v322 = vunpack.c.l.b16 %v245
      %v323 = vunpack.c.l.b16 %v246
      %v324 = vunpack.c.l.b16 %v247
      %v325 = vunpack.c.l.b16 %v248
      %v326 = vunpack.c.l.b16 %v249
      %v327 = vunpack.c.l.b16 %v250
      %v328 = vunpack.c.l.b16 %v251
      %v329 = vunpack.c.l.b16 %v252
      %v330 = vunpack.c.l.b16 %v253
      %v331 = vunpack.c.l.b16 %v254
      %v332 = vunpack.c.l.b16 %v255
      %v333 = vunpack.c.l.b16 %v256
      %v334 = vunpack.c.l.b16 %v257
      %v335 = vunpack.c.l.b16 %v258
      %v336 = vunpack.c.l.b16 %v259
      %v337 = vunpack.c.l.b16 %v260
      %v338 = vunpack.c.l.b16 %v261
      %v339 = vunpack.c.l.b16 %v262
      %v340 = vpack.c.b16 %v309, %v308
      %v341 = vpack.c.b16 %v311, %v310
      %v342 = vpack.c.b16 %v313, %v312
      %v343 = vpack.c.b16 %v315, %v314
      %v344 = vpack.c.b16 %v317, %v316
      %v345 = vpack.c.b16 %v319, %v318
      %v346 = vpack.c.b16 %v321, %v320
      %v347 = vpack.c.b16 %v323, %v322
      %v348 = vpack.c.b16 %v325, %v324
      %v349 = vpack.c.b16 %v327, %v326
      %v350 = vpack.c.b16 %v329, %v328
      %v351 = vpack.c.b16 %v331, %v330
      %v352 = vpack.c.b16 %v333, %v332
      %v353 = vpack.c.b16 %v335, %v334
      %v354 = vpack.c.b16 %v337, %v336
      %v355 = vpack.c.b16 %v339, %v338
      %v365 = vunpack.c.l.b16 %v263
      %v366 = vunpack.c.l.b16 %v264
      %v367 = vunpack.c.l.b16 %v265
      %v368 = vunpack.c.l.b16 %v266
      %v369 = vunpack.c.l.b16 %v267
      %v370 = vunpack.c.l.b16 %v268
      %v371 = vunpack.c.l.b16 %v269
      %v372 = vunpack.c.l.b16 %v270
      %v373 = vunpack.c.l.b16 %v271
      %v374 = vpack.c.b16 %v366, %v365
      %v375 = vpack.c.b16 %v368, %v367
      %v376 = vpack.c.b16 %v370, %v369
      %v377 = vpack.c.b16 %v372, %v371
      %v378 = vpack.c.b16 %v373, %v373
      %vm383 = vcmask 588800
      %v385 = vsel %vm383, %v340, 0
      %v388 = vsel %vm383, %v341, 0
      %v391 = vsel %vm383, %v342, 0
      %v394 = vsel %vm383, %v343, 0
      %v397 = vsel %vm383, %v344, 0
      %v400 = vsel %vm383, %v345, 0
      %v403 = vsel %vm383, %v346, 0
      %v406 = vsel %vm383, %v347, 0
      %v409 = vsel %vm383, %v348, 0
      %v412 = vsel %vm383, %v349, 0
      %v415 = vsel %vm383, %v350, 0
      %v418 = vsel %vm383, %v351, 0
      %v421 = vsel %vm383, %v352, 0
      %v424 = vsel %vm383, %v353, 0
      %v427 = vsel %vm383, %v354, 0
      %v430 = vsel %vm383, %v355, 0
      %vm432 = vcmask 1043456
      %v434 = vsel %vm432, %v378, 0
      %436 = vmatpush.bf16.msra.mxu0 0
      %437 = vmatpush.bf16.msra.mxu0 0
      %438 = vmatpush.bf16.msra.mxu0 0
      %439 = vmatpush.bf16.msra.mxu0 %v434
      %440 = vmatpush.bf16.msra.mxu0 %v377
      %441 = vmatpush.bf16.msra.mxu0 %v376
      %442 = vmatpush.bf16.msra.mxu0 %v375
      %443 = vmatpush.bf16.msra.mxu0 %v374
      %444 = vmatmul.bf16.gmra.mxu0 %v385
      %v445 = vpop.f32.mrf.mxu0
      %v446 = vadd.f32 %v274, %v445
      %v447 = vpop.f32.mrf.mxu0
      %v448 = vadd.f32 %v274, %v447
      %449 = vmatmul.bf16.gmra.mxu0 %v388
      %v450 = vpop.f32.mrf.mxu0
      %v451 = vadd.f32 %v274, %v450
      %v452 = vpop.f32.mrf.mxu0
      %v453 = vadd.f32 %v274, %v452
      %454 = vmatmul.bf16.gmra.mxu0 %v391
      %v455 = vpop.f32.mrf.mxu0
      %v456 = vadd.f32 %v274, %v455
      %v457 = vpop.f32.mrf.mxu0
      %v458 = vadd.f32 %v274, %v457
      %459 = vmatmul.bf16.gmra.mxu0 %v394
      %v460 = vpop.f32.mrf.mxu0
      %v461 = vadd.f32 %v274, %v460
      %v462 = vpop.f32.mrf.mxu0
      %v463 = vadd.f32 %v274, %v462
      %464 = vmatmul.bf16.gmra.mxu0 %v397
      %v465 = vpop.f32.mrf.mxu0
      %v466 = vadd.f32 %v274, %v465
      %v467 = vpop.f32.mrf.mxu0
      %v468 = vadd.f32 %v274, %v467
      %469 = vmatmul.bf16.gmra.mxu0 %v400
      %v470 = vpop.f32.mrf.mxu0
      %v471 = vadd.f32 %v274, %v470
      %v472 = vpop.f32.mrf.mxu0
      %v473 = vadd.f32 %v274, %v472
      %474 = vmatmul.bf16.gmra.mxu0 %v403
      %v475 = vpop.f32.mrf.mxu0
      %v476 = vadd.f32 %v274, %v475
      %v477 = vpop.f32.mrf.mxu0
      %v478 = vadd.f32 %v274, %v477
      %479 = vmatmul.bf16.gmra.mxu0 %v406
      %v480 = vpop.f32.mrf.mxu0
      %v481 = vadd.f32 %v274, %v480
      %v482 = vpop.f32.mrf.mxu0
      %v483 = vadd.f32 %v274, %v482
      %484 = vmatmul.bf16.gmra.mxu0 %v409
      %v485 = vpop.f32.mrf.mxu0
      %v486 = vadd.f32 %v274, %v485
      %v487 = vpop.f32.mrf.mxu0
      %v488 = vadd.f32 %v274, %v487
      %489 = vmatmul.bf16.gmra.mxu0 %v412
      %v490 = vpop.f32.mrf.mxu0
      %v491 = vadd.f32 %v274, %v490
      %v492 = vpop.f32.mrf.mxu0
      %v493 = vadd.f32 %v274, %v492
      %494 = vmatmul.bf16.gmra.mxu0 %v415
      %v495 = vpop.f32.mrf.mxu0
      %v496 = vadd.f32 %v274, %v495
      %v497 = vpop.f32.mrf.mxu0
      %v498 = vadd.f32 %v274, %v497
      %499 = vmatmul.bf16.gmra.mxu0 %v418
      %v500 = vpop.f32.mrf.mxu0
      %v501 = vadd.f32 %v274, %v500
      %v502 = vpop.f32.mrf.mxu0
      %v503 = vadd.f32 %v274, %v502
      %504 = vmatmul.bf16.gmra.mxu0 %v421
      %v505 = vpop.f32.mrf.mxu0
      %v506 = vadd.f32 %v274, %v505
      %v507 = vpop.f32.mrf.mxu0
      %v508 = vadd.f32 %v274, %v507
      %509 = vmatmul.bf16.gmra.mxu0 %v424
      %v510 = vpop.f32.mrf.mxu0
      %v511 = vadd.f32 %v274, %v510
      %v512 = vpop.f32.mrf.mxu0
      %v513 = vadd.f32 %v274, %v512
      %514 = vmatmul.bf16.gmra.mxu0 %v427
      %v515 = vpop.f32.mrf.mxu0
      %v516 = vadd.f32 %v274, %v515
      %v517 = vpop.f32.mrf.mxu0
      %v518 = vadd.f32 %v274, %v517
      %519 = vmatmul.bf16.gmra.mxu0 %v430
      %v520 = vpop.f32.mrf.mxu0
      %v521 = vadd.f32 %v274, %v520
      %v522 = vpop.f32.mrf.mxu0
      %v523 = vadd.f32 %v274, %v522
      %524 = vdwg.mxu0
      %v525 = vand.u32 2147483647, %v446
      %v526 = vand.u32 2147483647, %v448
      %v527 = vand.u32 2147483647, %v451
      %v528 = vand.u32 2147483647, %v453
      %v529 = vand.u32 2147483647, %v456
      %v530 = vand.u32 2147483647, %v458
      %v531 = vand.u32 2147483647, %v461
      %v532 = vand.u32 2147483647, %v463
      %v533 = vand.u32 2147483647, %v466
      %v534 = vand.u32 2147483647, %v468
      %v535 = vand.u32 2147483647, %v471
      %v536 = vand.u32 2147483647, %v473
      %v537 = vand.u32 2147483647, %v476
      %v538 = vand.u32 2147483647, %v478
      %v539 = vand.u32 2147483647, %v481
      %v540 = vand.u32 2147483647, %v483
      %v541 = vand.u32 2147483647, %v486
      %v542 = vand.u32 2147483647, %v488
      %v543 = vand.u32 2147483647, %v491
      %v544 = vand.u32 2147483647, %v493
      %v545 = vand.u32 2147483647, %v496
      %v546 = vand.u32 2147483647, %v498
      %v547 = vand.u32 2147483647, %v501
      %v548 = vand.u32 2147483647, %v503
      %v549 = vand.u32 2147483647, %v506
      %v550 = vand.u32 2147483647, %v508
      %v551 = vand.u32 2147483647, %v511
      %v552 = vand.u32 2147483647, %v513
      %v553 = vand.u32 2147483647, %v516
      %v554 = vand.u32 2147483647, %v518
      %v555 = vand.u32 2147483647, %v521
      %v556 = vand.u32 2147483647, %v523
      %v557 = vsub.f32 0.0, %v525
      %v558 = vsub.f32 0.0, %v526
      %v559 = vsub.f32 0.0, %v527
      %v560 = vsub.f32 0.0, %v528
      %v561 = vsub.f32 0.0, %v529
      %v562 = vsub.f32 0.0, %v530
      %v563 = vsub.f32 0.0, %v531
      %v564 = vsub.f32 0.0, %v532
      %v565 = vsub.f32 0.0, %v533
      %v566 = vsub.f32 0.0, %v534
      %v567 = vsub.f32 0.0, %v535
      %v568 = vsub.f32 0.0, %v536
      %v569 = vsub.f32 0.0, %v537
      %v570 = vsub.f32 0.0, %v538
      %v571 = vsub.f32 0.0, %v539
      %v572 = vsub.f32 0.0, %v540
      %v573 = vsub.f32 0.0, %v541
      %v574 = vsub.f32 0.0, %v542
      %v575 = vsub.f32 0.0, %v543
      %v576 = vsub.f32 0.0, %v544
      %v577 = vsub.f32 0.0, %v545
      %v578 = vsub.f32 0.0, %v546
      %v579 = vsub.f32 0.0, %v547
      %v580 = vsub.f32 0.0, %v548
      %v581 = vsub.f32 0.0, %v549
      %v582 = vsub.f32 0.0, %v550
      %v583 = vsub.f32 0.0, %v551
      %v584 = vsub.f32 0.0, %v552
      %v585 = vsub.f32 0.0, %v553
      %v586 = vsub.f32 0.0, %v554
      %v587 = vsub.f32 0.0, %v555
      %v588 = vsub.f32 0.0, %v556
      %v589 = vmul.f32 %v557, 1.442695
      %v590 = vpow.pop %v589
      %v591 = vmul.f32 %v558, 1.442695
      %v592 = vpow.pop %v591
      %v593 = vmul.f32 %v559, 1.442695
      %v594 = vpow.pop %v593
      %v595 = vmul.f32 %v560, 1.442695
      %v596 = vpow.pop %v595
      %v597 = vmul.f32 %v561, 1.442695
      %v598 = vpow.pop %v597
      %v599 = vmul.f32 %v562, 1.442695
      %v600 = vpow.pop %v599
      %v601 = vmul.f32 %v563, 1.442695
      %v602 = vpow.pop %v601
      %v603 = vmul.f32 %v564, 1.442695
      %v604 = vpow.pop %v603
      %v605 = vmul.f32 %v565, 1.442695
      %v606 = vpow.pop %v605
      %v607 = vmul.f32 %v566, 1.442695
      %v608 = vpow.pop %v607
      %v609 = vmul.f32 %v567, 1.442695
      %v610 = vpow.pop %v609
      %v611 = vmul.f32 %v568, 1.442695
      %v612 = vpow.pop %v611
      %v613 = vmul.f32 %v569, 1.442695
      %v614 = vpow.pop %v613
      %v615 = vmul.f32 %v570, 1.442695
      %v616 = vpow.pop %v615
      %v617 = vmul.f32 %v571, 1.442695
      %v618 = vpow.pop %v617
      %v619 = vmul.f32 %v572, 1.442695
      %v620 = vpow.pop %v619
      %v621 = vmul.f32 %v573, 1.442695
      %v622 = vpow.pop %v621
      %v623 = vmul.f32 %v574, 1.442695
      %v624 = vpow.pop %v623
      %v625 = vmul.f32 %v575, 1.442695
      %v626 = vpow.pop %v625
      %v627 = vmul.f32 %v576, 1.442695
      %v628 = vpow.pop %v627
      %v629 = vmul.f32 %v577, 1.442695
      %v630 = vpow.pop %v629
      %v631 = vmul.f32 %v578, 1.442695
      %v632 = vpow.pop %v631
      %v633 = vmul.f32 %v579, 1.442695
      %v634 = vpow.pop %v633
      %v635 = vmul.f32 %v580, 1.442695
      %v636 = vpow.pop %v635
      %v637 = vmul.f32 %v581, 1.442695
      %v638 = vpow.pop %v637
      %v639 = vmul.f32 %v582, 1.442695
      %v640 = vpow.pop %v639
      %v641 = vmul.f32 %v583, 1.442695
      %v642 = vpow.pop %v641
      %v643 = vmul.f32 %v584, 1.442695
      %v644 = vpow.pop %v643
      %v645 = vmul.f32 %v585, 1.442695
      %v646 = vpow.pop %v645
      %v647 = vmul.f32 %v586, 1.442695
      %v648 = vpow.pop %v647
      %v649 = vmul.f32 %v587, 1.442695
      %v650 = vpow.pop %v649
      %v651 = vmul.f32 %v588, 1.442695
      %v652 = vpow.pop %v651
      %vm653 = vcmp.ge.f32.partialorder %v446, 0.0
      %vm654 = vcmp.ge.f32.partialorder %v448, 0.0
      %vm655 = vcmp.ge.f32.partialorder %v451, 0.0
      %vm656 = vcmp.ge.f32.partialorder %v453, 0.0
      %vm657 = vcmp.ge.f32.partialorder %v456, 0.0
      %vm658 = vcmp.ge.f32.partialorder %v458, 0.0
      %vm659 = vcmp.ge.f32.partialorder %v461, 0.0
      %vm660 = vcmp.ge.f32.partialorder %v463, 0.0
      %vm661 = vcmp.ge.f32.partialorder %v466, 0.0
      %vm662 = vcmp.ge.f32.partialorder %v468, 0.0
      %vm663 = vcmp.ge.f32.partialorder %v471, 0.0
      %vm664 = vcmp.ge.f32.partialorder %v473, 0.0
      %vm665 = vcmp.ge.f32.partialorder %v476, 0.0
      %vm666 = vcmp.ge.f32.partialorder %v478, 0.0
      %vm667 = vcmp.ge.f32.partialorder %v481, 0.0
      %vm668 = vcmp.ge.f32.partialorder %v483, 0.0
      %vm669 = vcmp.ge.f32.partialorder %v486, 0.0
      %vm670 = vcmp.ge.f32.partialorder %v488, 0.0
      %vm671 = vcmp.ge.f32.partialorder %v491, 0.0
      %vm672 = vcmp.ge.f32.partialorder %v493, 0.0
      %vm673 = vcmp.ge.f32.partialorder %v496, 0.0
      %vm674 = vcmp.ge.f32.partialorder %v498, 0.0
      %vm675 = vcmp.ge.f32.partialorder %v501, 0.0
      %vm676 = vcmp.ge.f32.partialorder %v503, 0.0
      %vm677 = vcmp.ge.f32.partialorder %v506, 0.0
      %vm678 = vcmp.ge.f32.partialorder %v508, 0.0
      %vm679 = vcmp.ge.f32.partialorder %v511, 0.0
      %vm680 = vcmp.ge.f32.partialorder %v513, 0.0
      %vm681 = vcmp.ge.f32.partialorder %v516, 0.0
      %vm682 = vcmp.ge.f32.partialorder %v518, 0.0
      %vm683 = vcmp.ge.f32.partialorder %v521, 0.0
      %vm684 = vcmp.ge.f32.partialorder %v523, 0.0
      %v685 = vadd.f32 %v590, 1.0
      %v686 = vadd.f32 %v592, 1.0
      %v687 = vadd.f32 %v594, 1.0
      %v688 = vadd.f32 %v596, 1.0
      %v689 = vadd.f32 %v598, 1.0
      %v690 = vadd.f32 %v600, 1.0
      %v691 = vadd.f32 %v602, 1.0
      %v692 = vadd.f32 %v604, 1.0
      %v693 = vadd.f32 %v606, 1.0
      %v694 = vadd.f32 %v608, 1.0
      %v695 = vadd.f32 %v610, 1.0
      %v696 = vadd.f32 %v612, 1.0
      %v697 = vadd.f32 %v614, 1.0
      %v698 = vadd.f32 %v616, 1.0
      %v699 = vadd.f32 %v618, 1.0
      %v700 = vadd.f32 %v620, 1.0
      %v701 = vadd.f32 %v622, 1.0
      %v702 = vadd.f32 %v624, 1.0
      %v703 = vadd.f32 %v626, 1.0
      %v704 = vadd.f32 %v628, 1.0
      %v705 = vadd.f32 %v630, 1.0
      %v706 = vadd.f32 %v632, 1.0
      %v707 = vadd.f32 %v634, 1.0
      %v708 = vadd.f32 %v636, 1.0
      %v709 = vadd.f32 %v638, 1.0
      %v710 = vadd.f32 %v640, 1.0
      %v711 = vadd.f32 %v642, 1.0
      %v712 = vadd.f32 %v644, 1.0
      %v713 = vadd.f32 %v646, 1.0
      %v714 = vadd.f32 %v648, 1.0
      %v715 = vadd.f32 %v650, 1.0
      %v716 = vadd.f32 %v652, 1.0
      %v717 = vrcp.pop %v685
      %v718 = vmul.f32 %v685, %v717
      %v719 = vsub.f32 1.0, %v718
      %v720 = vmul.f32 %v717, %v719
      %v721 = vadd.f32 %v717, %v720
      %vm722 = vweird.f32 %v685
      %vm723 = vweird.f32 %v717
      %vm724 = vmor %vm722, %vm723
      %v725 = vsel %vm724, %v717, %v721
      %v726 = vand.u32 2147483647, %v685
      %vm727 = vcmp.eq.f32.partialorder %v726, 8.507059e+37
      %v728 = vand.u32 %v685, 2147483648
      %v729 = vor.u32 1.1754944e-38, %v728
      %v730 = vsel %vm727, %v729, %v725
      %v731 = vmul.f32 1.0, %v730
      %v732 = vrcp.pop %v686
      %v733 = vmul.f32 %v686, %v732
      %v734 = vsub.f32 1.0, %v733
      %v735 = vmul.f32 %v732, %v734
      %v736 = vadd.f32 %v732, %v735
      %vm737 = vweird.f32 %v686
      %vm738 = vweird.f32 %v732
      %vm739 = vmor %vm737, %vm738
      %v740 = vsel %vm739, %v732, %v736
      %v741 = vand.u32 2147483647, %v686
      %vm742 = vcmp.eq.f32.partialorder %v741, 8.507059e+37
      %v743 = vand.u32 %v686, 2147483648
      %v744 = vor.u32 1.1754944e-38, %v743
      %v745 = vsel %vm742, %v744, %v740
      %v746 = vmul.f32 1.0, %v745
      %v747 = vrcp.pop %v687
      %v748 = vmul.f32 %v687, %v747
      %v749 = vsub.f32 1.0, %v748
      %v750 = vmul.f32 %v747, %v749
      %v751 = vadd.f32 %v747, %v750
      %vm752 = vweird.f32 %v687
      %vm753 = vweird.f32 %v747
      %vm754 = vmor %vm752, %vm753
      %v755 = vsel %vm754, %v747, %v751
      %v756 = vand.u32 2147483647, %v687
      %vm757 = vcmp.eq.f32.partialorder %v756, 8.507059e+37
      %v758 = vand.u32 %v687, 2147483648
      %v759 = vor.u32 1.1754944e-38, %v758
      %v760 = vsel %vm757, %v759, %v755
      %v761 = vmul.f32 1.0, %v760
      %v762 = vrcp.pop %v688
      %v763 = vmul.f32 %v688, %v762
      %v764 = vsub.f32 1.0, %v763
      %v765 = vmul.f32 %v762, %v764
      %v766 = vadd.f32 %v762, %v765
      %vm767 = vweird.f32 %v688
      %vm768 = vweird.f32 %v762
      %vm769 = vmor %vm767, %vm768
      %v770 = vsel %vm769, %v762, %v766
      %v771 = vand.u32 2147483647, %v688
      %vm772 = vcmp.eq.f32.partialorder %v771, 8.507059e+37
      %v773 = vand.u32 %v688, 2147483648
      %v774 = vor.u32 1.1754944e-38, %v773
      %v775 = vsel %vm772, %v774, %v770
      %v776 = vmul.f32 1.0, %v775
      %v777 = vrcp.pop %v689
      %v778 = vmul.f32 %v689, %v777
      %v779 = vsub.f32 1.0, %v778
      %v780 = vmul.f32 %v777, %v779
      %v781 = vadd.f32 %v777, %v780
      %vm782 = vweird.f32 %v689
      %vm783 = vweird.f32 %v777
      %vm784 = vmor %vm782, %vm783
      %v785 = vsel %vm784, %v777, %v781
      %v786 = vand.u32 2147483647, %v689
      %vm787 = vcmp.eq.f32.partialorder %v786, 8.507059e+37
      %v788 = vand.u32 %v689, 2147483648
      %v789 = vor.u32 1.1754944e-38, %v788
      %v790 = vsel %vm787, %v789, %v785
      %v791 = vmul.f32 1.0, %v790
      %v792 = vrcp.pop %v690
      %v793 = vmul.f32 %v690, %v792
      %v794 = vsub.f32 1.0, %v793
      %v795 = vmul.f32 %v792, %v794
      %v796 = vadd.f32 %v792, %v795
      %vm797 = vweird.f32 %v690
      %vm798 = vweird.f32 %v792
      %vm799 = vmor %vm797, %vm798
      %v800 = vsel %vm799, %v792, %v796
      %v801 = vand.u32 2147483647, %v690
      %vm802 = vcmp.eq.f32.partialorder %v801, 8.507059e+37
      %v803 = vand.u32 %v690, 2147483648
      %v804 = vor.u32 1.1754944e-38, %v803
      %v805 = vsel %vm802, %v804, %v800
      %v806 = vmul.f32 1.0, %v805
      %v807 = vrcp.pop %v691
      %v808 = vmul.f32 %v691, %v807
      %v809 = vsub.f32 1.0, %v808
      %v810 = vmul.f32 %v807, %v809
      %v811 = vadd.f32 %v807, %v810
      %vm812 = vweird.f32 %v691
      %vm813 = vweird.f32 %v807
      %vm814 = vmor %vm812, %vm813
      %v815 = vsel %vm814, %v807, %v811
      %v816 = vand.u32 2147483647, %v691
      %vm817 = vcmp.eq.f32.partialorder %v816, 8.507059e+37
      %v818 = vand.u32 %v691, 2147483648
      %v819 = vor.u32 1.1754944e-38, %v818
      %v820 = vsel %vm817, %v819, %v815
      %v821 = vmul.f32 1.0, %v820
      %v822 = vrcp.pop %v692
      %v823 = vmul.f32 %v692, %v822
      %v824 = vsub.f32 1.0, %v823
      %v825 = vmul.f32 %v822, %v824
      %v826 = vadd.f32 %v822, %v825
      %vm827 = vweird.f32 %v692
      %vm828 = vweird.f32 %v822
      %vm829 = vmor %vm827, %vm828
      %v830 = vsel %vm829, %v822, %v826
      %v831 = vand.u32 2147483647, %v692
      %vm832 = vcmp.eq.f32.partialorder %v831, 8.507059e+37
      %v833 = vand.u32 %v692, 2147483648
      %v834 = vor.u32 1.1754944e-38, %v833
      %v835 = vsel %vm832, %v834, %v830
      %v836 = vmul.f32 1.0, %v835
      %v837 = vrcp.pop %v693
      %v838 = vmul.f32 %v693, %v837
      %v839 = vsub.f32 1.0, %v838
      %v840 = vmul.f32 %v837, %v839
      %v841 = vadd.f32 %v837, %v840
      %vm842 = vweird.f32 %v693
      %vm843 = vweird.f32 %v837
      %vm844 = vmor %vm842, %vm843
      %v845 = vsel %vm844, %v837, %v841
      %v846 = vand.u32 2147483647, %v693
      %vm847 = vcmp.eq.f32.partialorder %v846, 8.507059e+37
      %v848 = vand.u32 %v693, 2147483648
      %v849 = vor.u32 1.1754944e-38, %v848
      %v850 = vsel %vm847, %v849, %v845
      %v851 = vmul.f32 1.0, %v850
      %v852 = vrcp.pop %v694
      %v853 = vmul.f32 %v694, %v852
      %v854 = vsub.f32 1.0, %v853
      %v855 = vmul.f32 %v852, %v854
      %v856 = vadd.f32 %v852, %v855
      %vm857 = vweird.f32 %v694
      %vm858 = vweird.f32 %v852
      %vm859 = vmor %vm857, %vm858
      %v860 = vsel %vm859, %v852, %v856
      %v861 = vand.u32 2147483647, %v694
      %vm862 = vcmp.eq.f32.partialorder %v861, 8.507059e+37
      %v863 = vand.u32 %v694, 2147483648
      %v864 = vor.u32 1.1754944e-38, %v863
      %v865 = vsel %vm862, %v864, %v860
      %v866 = vmul.f32 1.0, %v865
      %v867 = vrcp.pop %v695
      %v868 = vmul.f32 %v695, %v867
      %v869 = vsub.f32 1.0, %v868
      %v870 = vmul.f32 %v867, %v869
      %v871 = vadd.f32 %v867, %v870
      %vm872 = vweird.f32 %v695
      %vm873 = vweird.f32 %v867
      %vm874 = vmor %vm872, %vm873
      %v875 = vsel %vm874, %v867, %v871
      %v876 = vand.u32 2147483647, %v695
      %vm877 = vcmp.eq.f32.partialorder %v876, 8.507059e+37
      %v878 = vand.u32 %v695, 2147483648
      %v879 = vor.u32 1.1754944e-38, %v878
      %v880 = vsel %vm877, %v879, %v875
      %v881 = vmul.f32 1.0, %v880
      %v882 = vrcp.pop %v696
      %v883 = vmul.f32 %v696, %v882
      %v884 = vsub.f32 1.0, %v883
      %v885 = vmul.f32 %v882, %v884
      %v886 = vadd.f32 %v882, %v885
      %vm887 = vweird.f32 %v696
      %vm888 = vweird.f32 %v882
      %vm889 = vmor %vm887, %vm888
      %v890 = vsel %vm889, %v882, %v886
      %v891 = vand.u32 2147483647, %v696
      %vm892 = vcmp.eq.f32.partialorder %v891, 8.507059e+37
      %v893 = vand.u32 %v696, 2147483648
      %v894 = vor.u32 1.1754944e-38, %v893
      %v895 = vsel %vm892, %v894, %v890
      %v896 = vmul.f32 1.0, %v895
      %v897 = vrcp.pop %v697
      %v898 = vmul.f32 %v697, %v897
      %v899 = vsub.f32 1.0, %v898
      %v900 = vmul.f32 %v897, %v899
      %v901 = vadd.f32 %v897, %v900
      %vm902 = vweird.f32 %v697
      %vm903 = vweird.f32 %v897
      %vm904 = vmor %vm902, %vm903
      %v905 = vsel %vm904, %v897, %v901
      %v906 = vand.u32 2147483647, %v697
      %vm907 = vcmp.eq.f32.partialorder %v906, 8.507059e+37
      %v908 = vand.u32 %v697, 2147483648
      %v909 = vor.u32 1.1754944e-38, %v908
      %v910 = vsel %vm907, %v909, %v905
      %v911 = vmul.f32 1.0, %v910
      %v912 = vrcp.pop %v698
      %v913 = vmul.f32 %v698, %v912
      %v914 = vsub.f32 1.0, %v913
      %v915 = vmul.f32 %v912, %v914
      %v916 = vadd.f32 %v912, %v915
      %vm917 = vweird.f32 %v698
      %vm918 = vweird.f32 %v912
      %vm919 = vmor %vm917, %vm918
      %v920 = vsel %vm919, %v912, %v916
      %v921 = vand.u32 2147483647, %v698
      %vm922 = vcmp.eq.f32.partialorder %v921, 8.507059e+37
      %v923 = vand.u32 %v698, 2147483648
      %v924 = vor.u32 1.1754944e-38, %v923
      %v925 = vsel %vm922, %v924, %v920
      %v926 = vmul.f32 1.0, %v925
      %v927 = vrcp.pop %v699
      %v928 = vmul.f32 %v699, %v927
      %v929 = vsub.f32 1.0, %v928
      %v930 = vmul.f32 %v927, %v929
      %v931 = vadd.f32 %v927, %v930
      %vm932 = vweird.f32 %v699
      %vm933 = vweird.f32 %v927
      %vm934 = vmor %vm932, %vm933
      %v935 = vsel %vm934, %v927, %v931
      %v936 = vand.u32 2147483647, %v699
      %vm937 = vcmp.eq.f32.partialorder %v936, 8.507059e+37
      %v938 = vand.u32 %v699, 2147483648
      %v939 = vor.u32 1.1754944e-38, %v938
      %v940 = vsel %vm937, %v939, %v935
      %v941 = vmul.f32 1.0, %v940
      %v942 = vrcp.pop %v700
      %v943 = vmul.f32 %v700, %v942
      %v944 = vsub.f32 1.0, %v943
      %v945 = vmul.f32 %v942, %v944
      %v946 = vadd.f32 %v942, %v945
      %vm947 = vweird.f32 %v700
      %vm948 = vweird.f32 %v942
      %vm949 = vmor %vm947, %vm948
      %v950 = vsel %vm949, %v942, %v946
      %v951 = vand.u32 2147483647, %v700
      %vm952 = vcmp.eq.f32.partialorder %v951, 8.507059e+37
      %v953 = vand.u32 %v700, 2147483648
      %v954 = vor.u32 1.1754944e-38, %v953
      %v955 = vsel %vm952, %v954, %v950
      %v956 = vmul.f32 1.0, %v955
      %v957 = vrcp.pop %v701
      %v958 = vmul.f32 %v701, %v957
      %v959 = vsub.f32 1.0, %v958
      %v960 = vmul.f32 %v957, %v959
      %v961 = vadd.f32 %v957, %v960
      %vm962 = vweird.f32 %v701
      %vm963 = vweird.f32 %v957
      %vm964 = vmor %vm962, %vm963
      %v965 = vsel %vm964, %v957, %v961
      %v966 = vand.u32 2147483647, %v701
      %vm967 = vcmp.eq.f32.partialorder %v966, 8.507059e+37
      %v968 = vand.u32 %v701, 2147483648
      %v969 = vor.u32 1.1754944e-38, %v968
      %v970 = vsel %vm967, %v969, %v965
      %v971 = vmul.f32 1.0, %v970
      %v972 = vrcp.pop %v702
      %v973 = vmul.f32 %v702, %v972
      %v974 = vsub.f32 1.0, %v973
      %v975 = vmul.f32 %v972, %v974
      %v976 = vadd.f32 %v972, %v975
      %vm977 = vweird.f32 %v702
      %vm978 = vweird.f32 %v972
      %vm979 = vmor %vm977, %vm978
      %v980 = vsel %vm979, %v972, %v976
      %v981 = vand.u32 2147483647, %v702
      %vm982 = vcmp.eq.f32.partialorder %v981, 8.507059e+37
      %v983 = vand.u32 %v702, 2147483648
      %v984 = vor.u32 1.1754944e-38, %v983
      %v985 = vsel %vm982, %v984, %v980
      %v986 = vmul.f32 1.0, %v985
      %v987 = vrcp.pop %v703
      %v988 = vmul.f32 %v703, %v987
      %v989 = vsub.f32 1.0, %v988
      %v990 = vmul.f32 %v987, %v989
      %v991 = vadd.f32 %v987, %v990
      %vm992 = vweird.f32 %v703
      %vm993 = vweird.f32 %v987
      %vm994 = vmor %vm992, %vm993
      %v995 = vsel %vm994, %v987, %v991
      %v996 = vand.u32 2147483647, %v703
      %vm997 = vcmp.eq.f32.partialorder %v996, 8.507059e+37
      %v998 = vand.u32 %v703, 2147483648
      %v999 = vor.u32 1.1754944e-38, %v998
      %v1000 = vsel %vm997, %v999, %v995
      %v1001 = vmul.f32 1.0, %v1000
      %v1002 = vrcp.pop %v704
      %v1003 = vmul.f32 %v704, %v1002
      %v1004 = vsub.f32 1.0, %v1003
      %v1005 = vmul.f32 %v1002, %v1004
      %v1006 = vadd.f32 %v1002, %v1005
      %vm1007 = vweird.f32 %v704
      %vm1008 = vweird.f32 %v1002
      %vm1009 = vmor %vm1007, %vm1008
      %v1010 = vsel %vm1009, %v1002, %v1006
      %v1011 = vand.u32 2147483647, %v704
      %vm1012 = vcmp.eq.f32.partialorder %v1011, 8.507059e+37
      %v1013 = vand.u32 %v704, 2147483648
      %v1014 = vor.u32 1.1754944e-38, %v1013
      %v1015 = vsel %vm1012, %v1014, %v1010
      %v1016 = vmul.f32 1.0, %v1015
      %v1017 = vrcp.pop %v705
      %v1018 = vmul.f32 %v705, %v1017
      %v1019 = vsub.f32 1.0, %v1018
      %v1020 = vmul.f32 %v1017, %v1019
      %v1021 = vadd.f32 %v1017, %v1020
      %vm1022 = vweird.f32 %v705
      %vm1023 = vweird.f32 %v1017
      %vm1024 = vmor %vm1022, %vm1023
      %v1025 = vsel %vm1024, %v1017, %v1021
      %v1026 = vand.u32 2147483647, %v705
      %vm1027 = vcmp.eq.f32.partialorder %v1026, 8.507059e+37
      %v1028 = vand.u32 %v705, 2147483648
      %v1029 = vor.u32 1.1754944e-38, %v1028
      %v1030 = vsel %vm1027, %v1029, %v1025
      %v1031 = vmul.f32 1.0, %v1030
      %v1032 = vrcp.pop %v706
      %v1033 = vmul.f32 %v706, %v1032
      %v1034 = vsub.f32 1.0, %v1033
      %v1035 = vmul.f32 %v1032, %v1034
      %v1036 = vadd.f32 %v1032, %v1035
      %vm1037 = vweird.f32 %v706
      %vm1038 = vweird.f32 %v1032
      %vm1039 = vmor %vm1037, %vm1038
      %v1040 = vsel %vm1039, %v1032, %v1036
      %v1041 = vand.u32 2147483647, %v706
      %vm1042 = vcmp.eq.f32.partialorder %v1041, 8.507059e+37
      %v1043 = vand.u32 %v706, 2147483648
      %v1044 = vor.u32 1.1754944e-38, %v1043
      %v1045 = vsel %vm1042, %v1044, %v1040
      %v1046 = vmul.f32 1.0, %v1045
      %v1047 = vrcp.pop %v707
      %v1048 = vmul.f32 %v707, %v1047
      %v1049 = vsub.f32 1.0, %v1048
      %v1050 = vmul.f32 %v1047, %v1049
      %v1051 = vadd.f32 %v1047, %v1050
      %vm1052 = vweird.f32 %v707
      %vm1053 = vweird.f32 %v1047
      %vm1054 = vmor %vm1052, %vm1053
      %v1055 = vsel %vm1054, %v1047, %v1051
      %v1056 = vand.u32 2147483647, %v707
      %vm1057 = vcmp.eq.f32.partialorder %v1056, 8.507059e+37
      %v1058 = vand.u32 %v707, 2147483648
      %v1059 = vor.u32 1.1754944e-38, %v1058
      %v1060 = vsel %vm1057, %v1059, %v1055
      %v1061 = vmul.f32 1.0, %v1060
      %v1062 = vrcp.pop %v708
      %v1063 = vmul.f32 %v708, %v1062
      %v1064 = vsub.f32 1.0, %v1063
      %v1065 = vmul.f32 %v1062, %v1064
      %v1066 = vadd.f32 %v1062, %v1065
      %vm1067 = vweird.f32 %v708
      %vm1068 = vweird.f32 %v1062
      %vm1069 = vmor %vm1067, %vm1068
      %v1070 = vsel %vm1069, %v1062, %v1066
      %v1071 = vand.u32 2147483647, %v708
      %vm1072 = vcmp.eq.f32.partialorder %v1071, 8.507059e+37
      %v1073 = vand.u32 %v708, 2147483648
      %v1074 = vor.u32 1.1754944e-38, %v1073
      %v1075 = vsel %vm1072, %v1074, %v1070
      %v1076 = vmul.f32 1.0, %v1075
      %v1077 = vrcp.pop %v709
      %v1078 = vmul.f32 %v709, %v1077
      %v1079 = vsub.f32 1.0, %v1078
      %v1080 = vmul.f32 %v1077, %v1079
      %v1081 = vadd.f32 %v1077, %v1080
      %vm1082 = vweird.f32 %v709
      %vm1083 = vweird.f32 %v1077
      %vm1084 = vmor %vm1082, %vm1083
      %v1085 = vsel %vm1084, %v1077, %v1081
      %v1086 = vand.u32 2147483647, %v709
      %vm1087 = vcmp.eq.f32.partialorder %v1086, 8.507059e+37
      %v1088 = vand.u32 %v709, 2147483648
      %v1089 = vor.u32 1.1754944e-38, %v1088
      %v1090 = vsel %vm1087, %v1089, %v1085
      %v1091 = vmul.f32 1.0, %v1090
      %v1092 = vrcp.pop %v710
      %v1093 = vmul.f32 %v710, %v1092
      %v1094 = vsub.f32 1.0, %v1093
      %v1095 = vmul.f32 %v1092, %v1094
      %v1096 = vadd.f32 %v1092, %v1095
      %vm1097 = vweird.f32 %v710
      %vm1098 = vweird.f32 %v1092
      %vm1099 = vmor %vm1097, %vm1098
      %v1100 = vsel %vm1099, %v1092, %v1096
      %v1101 = vand.u32 2147483647, %v710
      %vm1102 = vcmp.eq.f32.partialorder %v1101, 8.507059e+37
      %v1103 = vand.u32 %v710, 2147483648
      %v1104 = vor.u32 1.1754944e-38, %v1103
      %v1105 = vsel %vm1102, %v1104, %v1100
      %v1106 = vmul.f32 1.0, %v1105
      %v1107 = vrcp.pop %v711
      %v1108 = vmul.f32 %v711, %v1107
      %v1109 = vsub.f32 1.0, %v1108
      %v1110 = vmul.f32 %v1107, %v1109
      %v1111 = vadd.f32 %v1107, %v1110
      %vm1112 = vweird.f32 %v711
      %vm1113 = vweird.f32 %v1107
      %vm1114 = vmor %vm1112, %vm1113
      %v1115 = vsel %vm1114, %v1107, %v1111
      %v1116 = vand.u32 2147483647, %v711
      %vm1117 = vcmp.eq.f32.partialorder %v1116, 8.507059e+37
      %v1118 = vand.u32 %v711, 2147483648
      %v1119 = vor.u32 1.1754944e-38, %v1118
      %v1120 = vsel %vm1117, %v1119, %v1115
      %v1121 = vmul.f32 1.0, %v1120
      %v1122 = vrcp.pop %v712
      %v1123 = vmul.f32 %v712, %v1122
      %v1124 = vsub.f32 1.0, %v1123
      %v1125 = vmul.f32 %v1122, %v1124
      %v1126 = vadd.f32 %v1122, %v1125
      %vm1127 = vweird.f32 %v712
      %vm1128 = vweird.f32 %v1122
      %vm1129 = vmor %vm1127, %vm1128
      %v1130 = vsel %vm1129, %v1122, %v1126
      %v1131 = vand.u32 2147483647, %v712
      %vm1132 = vcmp.eq.f32.partialorder %v1131, 8.507059e+37
      %v1133 = vand.u32 %v712, 2147483648
      %v1134 = vor.u32 1.1754944e-38, %v1133
      %v1135 = vsel %vm1132, %v1134, %v1130
      %v1136 = vmul.f32 1.0, %v1135
      %v1137 = vrcp.pop %v713
      %v1138 = vmul.f32 %v713, %v1137
      %v1139 = vsub.f32 1.0, %v1138
      %v1140 = vmul.f32 %v1137, %v1139
      %v1141 = vadd.f32 %v1137, %v1140
      %vm1142 = vweird.f32 %v713
      %vm1143 = vweird.f32 %v1137
      %vm1144 = vmor %vm1142, %vm1143
      %v1145 = vsel %vm1144, %v1137, %v1141
      %v1146 = vand.u32 2147483647, %v713
      %vm1147 = vcmp.eq.f32.partialorder %v1146, 8.507059e+37
      %v1148 = vand.u32 %v713, 2147483648
      %v1149 = vor.u32 1.1754944e-38, %v1148
      %v1150 = vsel %vm1147, %v1149, %v1145
      %v1151 = vmul.f32 1.0, %v1150
      %v1152 = vrcp.pop %v714
      %v1153 = vmul.f32 %v714, %v1152
      %v1154 = vsub.f32 1.0, %v1153
      %v1155 = vmul.f32 %v1152, %v1154
      %v1156 = vadd.f32 %v1152, %v1155
      %vm1157 = vweird.f32 %v714
      %vm1158 = vweird.f32 %v1152
      %vm1159 = vmor %vm1157, %vm1158
      %v1160 = vsel %vm1159, %v1152, %v1156
      %v1161 = vand.u32 2147483647, %v714
      %vm1162 = vcmp.eq.f32.partialorder %v1161, 8.507059e+37
      %v1163 = vand.u32 %v714, 2147483648
      %v1164 = vor.u32 1.1754944e-38, %v1163
      %v1165 = vsel %vm1162, %v1164, %v1160
      %v1166 = vmul.f32 1.0, %v1165
      %v1167 = vrcp.pop %v715
      %v1168 = vmul.f32 %v715, %v1167
      %v1169 = vsub.f32 1.0, %v1168
      %v1170 = vmul.f32 %v1167, %v1169
      %v1171 = vadd.f32 %v1167, %v1170
      %vm1172 = vweird.f32 %v715
      %vm1173 = vweird.f32 %v1167
      %vm1174 = vmor %vm1172, %vm1173
      %v1175 = vsel %vm1174, %v1167, %v1171
      %v1176 = vand.u32 2147483647, %v715
      %vm1177 = vcmp.eq.f32.partialorder %v1176, 8.507059e+37
      %v1178 = vand.u32 %v715, 2147483648
      %v1179 = vor.u32 1.1754944e-38, %v1178
      %v1180 = vsel %vm1177, %v1179, %v1175
      %v1181 = vmul.f32 1.0, %v1180
      %v1182 = vrcp.pop %v716
      %v1183 = vmul.f32 %v716, %v1182
      %v1184 = vsub.f32 1.0, %v1183
      %v1185 = vmul.f32 %v1182, %v1184
      %v1186 = vadd.f32 %v1182, %v1185
      %vm1187 = vweird.f32 %v716
      %vm1188 = vweird.f32 %v1182
      %vm1189 = vmor %vm1187, %vm1188
      %v1190 = vsel %vm1189, %v1182, %v1186
      %v1191 = vand.u32 2147483647, %v716
      %vm1192 = vcmp.eq.f32.partialorder %v1191, 8.507059e+37
      %v1193 = vand.u32 %v716, 2147483648
      %v1194 = vor.u32 1.1754944e-38, %v1193
      %v1195 = vsel %vm1192, %v1194, %v1190
      %v1196 = vmul.f32 1.0, %v1195
      %v1197 = vmul.f32 %v590, %v730
      %v1198 = vmul.f32 %v592, %v745
      %v1199 = vmul.f32 %v594, %v760
      %v1200 = vmul.f32 %v596, %v775
      %v1201 = vmul.f32 %v598, %v790
      %v1202 = vmul.f32 %v600, %v805
      %v1203 = vmul.f32 %v602, %v820
      %v1204 = vmul.f32 %v604, %v835
      %v1205 = vmul.f32 %v606, %v850
      %v1206 = vmul.f32 %v608, %v865
      %v1207 = vmul.f32 %v610, %v880
      %v1208 = vmul.f32 %v612, %v895
      %v1209 = vmul.f32 %v614, %v910
      %v1210 = vmul.f32 %v616, %v925
      %v1211 = vmul.f32 %v618, %v940
      %v1212 = vmul.f32 %v620, %v955
      %v1213 = vmul.f32 %v622, %v970
      %v1214 = vmul.f32 %v624, %v985
      %v1215 = vmul.f32 %v626, %v1000
      %v1216 = vmul.f32 %v628, %v1015
      %v1217 = vmul.f32 %v630, %v1030
      %v1218 = vmul.f32 %v632, %v1045
      %v1219 = vmul.f32 %v634, %v1060
      %v1220 = vmul.f32 %v636, %v1075
      %v1221 = vmul.f32 %v638, %v1090
      %v1222 = vmul.f32 %v640, %v1105
      %v1223 = vmul.f32 %v642, %v1120
      %v1224 = vmul.f32 %v644, %v1135
      %v1225 = vmul.f32 %v646, %v1150
      %v1226 = vmul.f32 %v648, %v1165
      %v1227 = vmul.f32 %v650, %v1180
      %v1228 = vmul.f32 %v652, %v1195
      %v1229 = vsel %vm653, %v731, %v1197
      %v1230 = vsel %vm654, %v746, %v1198
      %v1231 = vsel %vm655, %v761, %v1199
      %v1232 = vsel %vm656, %v776, %v1200
      %v1233 = vsel %vm657, %v791, %v1201
      %v1234 = vsel %vm658, %v806, %v1202
      %v1235 = vsel %vm659, %v821, %v1203
      %v1236 = vsel %vm660, %v836, %v1204
      %v1237 = vsel %vm661, %v851, %v1205
      %v1238 = vsel %vm662, %v866, %v1206
      %v1239 = vsel %vm663, %v881, %v1207
      %v1240 = vsel %vm664, %v896, %v1208
      %v1241 = vsel %vm665, %v911, %v1209
      %v1242 = vsel %vm666, %v926, %v1210
      %v1243 = vsel %vm667, %v941, %v1211
      %v1244 = vsel %vm668, %v956, %v1212
      %v1245 = vsel %vm669, %v971, %v1213
      %v1246 = vsel %vm670, %v986, %v1214
      %v1247 = vsel %vm671, %v1001, %v1215
      %v1248 = vsel %vm672, %v1016, %v1216
      %v1249 = vsel %vm673, %v1031, %v1217
      %v1250 = vsel %vm674, %v1046, %v1218
      %v1251 = vsel %vm675, %v1061, %v1219
      %v1252 = vsel %vm676, %v1076, %v1220
      %v1253 = vsel %vm677, %v1091, %v1221
      %v1254 = vsel %vm678, %v1106, %v1222
      %v1255 = vsel %vm679, %v1121, %v1223
      %v1256 = vsel %vm680, %v1136, %v1224
      %v1257 = vsel %vm681, %v1151, %v1225
      %v1258 = vsel %vm682, %v1166, %v1226
      %v1259 = vsel %vm683, %v1181, %v1227
      %v1260 = vsel %vm684, %v1196, %v1228
      %vm1261 = vcmask 23552
      %1262 = vst.msk [vmem:[%s228] sm:$0xff] %vm1261, %v1229
      %1263 = vst.msk [vmem:[%s228 + $0x8] sm:$0xff] %vm1261, %v1230
      %1264 = vst.msk [vmem:[%s228 + $0x10] sm:$0xff] %vm1261, %v1231
      %1265 = vst.msk [vmem:[%s228 + $0x18] sm:$0xff] %vm1261, %v1232
      %1266 = vst.msk [vmem:[%s228 + $0x20] sm:$0xff] %vm1261, %v1233
      %1267 = vst.msk [vmem:[%s228 + $0x28] sm:$0xff] %vm1261, %v1234
      %1268 = vst.msk [vmem:[%s228 + $0x30] sm:$0xff] %vm1261, %v1235
      %1269 = vst.msk [vmem:[%s228 + $0x38] sm:$0xff] %vm1261, %v1236
      %1270 = vst.msk [vmem:[%s228 + $0x40] sm:$0xff] %vm1261, %v1237
      %1271 = vst.msk [vmem:[%s228 + $0x48] sm:$0xff] %vm1261, %v1238
      %1272 = vst.msk [vmem:[%s228 + $0x50] sm:$0xff] %vm1261, %v1239
      %1273 = vst.msk [vmem:[%s228 + $0x58] sm:$0xff] %vm1261, %v1240
      %1274 = vst.msk [vmem:[%s228 + $0x60] sm:$0xff] %vm1261, %v1241
      %1275 = vst.msk [vmem:[%s228 + $0x68] sm:$0xff] %vm1261, %v1242
      %1276 = vst.msk [vmem:[%s228 + $0x70] sm:$0xff] %vm1261, %v1243
      %1277 = vst.msk [vmem:[%s228 + $0x78] sm:$0xff] %vm1261, %v1244
      %1278 = vst.msk [vmem:[%s228 + $0x80] sm:$0xff] %vm1261, %v1245
      %1279 = vst.msk [vmem:[%s228 + $0x88] sm:$0xff] %vm1261, %v1246
      %1280 = vst.msk [vmem:[%s228 + $0x90] sm:$0xff] %vm1261, %v1247
      %1281 = vst.msk [vmem:[%s228 + $0x98] sm:$0xff] %vm1261, %v1248
      %1282 = vst.msk [vmem:[%s228 + $0xa0] sm:$0xff] %vm1261, %v1249
      %1283 = vst.msk [vmem:[%s228 + $0xa8] sm:$0xff] %vm1261, %v1250
      %1284 = vst.msk [vmem:[%s228 + $0xb0] sm:$0xff] %vm1261, %v1251
      %1285 = vst.msk [vmem:[%s228 + $0xb8] sm:$0xff] %vm1261, %v1252
      %1286 = vst.msk [vmem:[%s228 + $0xc0] sm:$0xff] %vm1261, %v1253
      %1287 = vst.msk [vmem:[%s228 + $0xc8] sm:$0xff] %vm1261, %v1254
      %1288 = vst.msk [vmem:[%s228 + $0xd0] sm:$0xff] %vm1261, %v1255
      %1289 = vst.msk [vmem:[%s228 + $0xd8] sm:$0xff] %vm1261, %v1256
      %1290 = vst.msk [vmem:[%s228 + $0xe0] sm:$0xff] %vm1261, %v1257
      %1291 = vst.msk [vmem:[%s228 + $0xe8] sm:$0xff] %vm1261, %v1258
      %1292 = vst.msk [vmem:[%s228 + $0xf0] sm:$0xff] %vm1261, %v1259
      %1293 = vst.msk [vmem:[%s228 + $0xf8] sm:$0xff] %vm1261, %v1260
      %s1294 = smul.u32 32, %s19
      %p1295 = scmp.lt.s32.totalorder %s18, 0
      %s1296 = scalar_select %p1295, %s18, 0
      %p1297 = scmp.lt.s32.totalorder %s1294, 63
      %s1298 = scalar_select %p1297, %s1294, 63
      %s1299 = smul.addr %s1296, 64
      %s1300 = sadd.s32 %s1298, %s1299
      %s1301 = smul.addr %s1300, 8
      %s1302 = scalar_lea.vmem %s3, %s1301
      // Predicated region
      $region33: #{ae_forward.11} parent=31 // pred_check
        %p1303 = pneg %p121
      $region34: #{ae_forward.11} parent=31 // pred_check_branch
        %1305 = sbr.rel (%p1303) target = $region36
      $region35: #{ae_forward.11} parent=31 // pred_region
        %s1306 = smul.u32 32, %s19
      $region36: #{ae_forward.11} parent=31 // pred_fallthru
        _
    $region32: #{ae_forward.11} parent=5 // pred_fallthru
      _
    %p1307 = scmp.le.s32.totalorder 2, %s9
    // Predicated region
    $region37: #{ae_forward.11} parent=5 // pred_check
      %p1308 = pneg %p1307
    $region38: #{ae_forward.11} parent=5 // pred_check_branch
      %1310 = sbr.rel (%p1308) target = $region40
    $region39: #{ae_forward.11} parent=5 // pred_region
      %s1311 = ssub.s32 %s9, 2
      // Predicated region
      $region41: #{ae_forward.11} parent=39 // pred_check
        %p1312 = pneg %p127
      $region42: #{ae_forward.11} parent=39 // pred_check_branch
        %1314 = sbr.rel (%p1312) target = $region44
      $region43: #{ae_forward.11} parent=39 // pred_region
        %s1315 = smul.u32 32, %s21
        %p1316 = scmp.lt.s32.totalorder %s20, 0
        %s1317 = scalar_select %p1316, %s20, 0
        %p1318 = scmp.lt.s32.totalorder %s1315, 63
        %s1319 = scalar_select %p1318, %s1315, 63
        %s1320 = smul.addr %s1317, 64
        %s1321 = sadd.s32 %s1319, %s1320
        %s1322 = smul.addr %s1321, 8
        %s1323 = scalar_lea.vmem %s3, %s1322
      $region44: #{ae_forward.11} parent=39 // pred_fallthru
        _
    $region40: #{ae_forward.11} parent=5 // pred_fallthru
      _
  $region6: #{ae_forward.11} parent=0 // loop_footer
    %s13 = sadd.s32 1, %s9
  $region7: #{ae_forward.11} parent=0 // loop_footer_branch
    %8 = sbr.rel target = $region3
  $region8: #{ae_forward.11} parent=0 // loop_exit
    _

</llo_original>
